<compile_context>
chip_gen: v5e
topology: v5e:2x2
jax: 0.10.0
libtpu: 0.0.40
codegen_flags: <defaults>
</compile_context>

<pallas_src>
import jax
import jax.numpy as jnp
from jax.experimental import pallas as pl
from jax.experimental.pallas import tpu as pltpu

# ----------------------------- model dimensions -----------------------------
PTS_CIN   = 6      # point features (xyz + rgb), in_channels of MLPEncoder
SCENE_HID = 128    # hidden width of the Uni3D stand-in (padded to fill MXU)
SCENE_DIM = 32     # global condition dim
OBJ_HID   = 128    # hidden width of MLPEncoder stand-in
OBJ_DIM   = 32     # local condition dim
COND_DIM  = SCENE_DIM + OBJ_DIM   # encoder_hidden_states feature dim
TIME_DIM  = 32     # sinusoidal timestep embedding dim
UNET_HID  = 128    # hidden width of the UNet stand-in (MXU-friendly)
LATENT_C  = 4      # latent channels of noisy_latents


# ------------------------------ fused kernel --------------------------------
def _animate_flow3d_fused_kernel(
    x_ref, scene_ref, obj_ref, temb_ref,
    sw1_ref, sb1_ref, sw2_ref, sb2_ref,
    ow1_ref, ob1_ref, ow2_ref, ob2_ref,
    tw1_ref, tb1_ref, tw2_ref, tb2_ref,
    wc_ref, uwin_ref, ub0_ref, uwout_ref, ubout_ref,
    o_ref,
):
    """One batch element per grid step.  Column-oriented scalar path, lane-dense
    (C, T) token path."""
    f32 = jnp.float32

    # ---- scene_encoder.encode_pc(global_obs): Uni3D stand-in --------------
    # TODO(synk): real Uni3D transformer encoder not provided; PointNet stand-in.
    pts = scene_ref[0]                                              # (Cin, Ns)
    h = jnp.dot(sw1_ref[...], pts, preferred_element_type=f32) + sb1_ref[...]
    h = jnp.maximum(h, 0.0)
    h = jnp.dot(sw2_ref[...], h, preferred_element_type=f32) + sb2_ref[...]
    h = jnp.maximum(h, 0.0)
    g = jnp.max(h, axis=1, keepdims=True)                           # (SCENE_DIM, 1)

    # global_condition / global_condition.norm(dim=-1, keepdim=True)
    # (no epsilon, matching the PyTorch reference)
    inv_nrm = jax.lax.rsqrt(jnp.sum(g * g, axis=0, keepdims=True))  # (1, 1), EUP
    g = g * inv_nrm

    # ---- obj_encoder(first_frame_object_points): MLPEncoder stand-in ------
    # TODO(synk): MLPEncoder definition not provided; per-point MLP + max-pool.
    pts = obj_ref[0]                                                # (Cin, No)
    h = jnp.dot(ow1_ref[...], pts, preferred_element_type=f32) + ob1_ref[...]
    h = jnp.maximum(h, 0.0)
    h = jnp.dot(ow2_ref[...], h, preferred_element_type=f32) + ob2_ref[...]
    h = jnp.maximum(h, 0.0)
    l = jnp.max(h, axis=1, keepdims=True)                           # (OBJ_DIM, 1)

    # encoder_hidden_states = cat([global, local], axis=1).unsqueeze(1)
    # (kept in column form: (COND_DIM, 1))
    cond = jnp.concatenate([g, l], axis=0)

    # ---- UNet stand-in: timestep embedding MLP (column form) --------------
    t = temb_ref[0]                                                 # (TIME_DIM, 1)
    t = jnp.dot(tw1_ref[...], t, preferred_element_type=f32) + tb1_ref[...]
    t = t * jax.nn.sigmoid(t)                                       # SiLU
    t = jnp.dot(tw2_ref[...], t, preferred_element_type=f32) + tb2_ref[...]

    # fold temb + condition projection + input/cond biases into ONE per-batch
    # bias column, so the hot token path is just two matmuls + SiLU.
    bias = (ub0_ref[...] + t
            + jnp.dot(wc_ref[...], cond, preferred_element_type=f32))  # (Hd, 1)

    # ---- lane-dense token path: x is (C, T) with T on the lane axis -------
    x = x_ref[0].astype(jnp.bfloat16)                               # (C, T)
    h = jnp.dot(uwin_ref[...], x, preferred_element_type=f32)       # (Hd, T)
    h = h + bias                                                    # lane bcast
    h = h * jax.nn.sigmoid(h)                                       # SiLU
    out = jnp.dot(uwout_ref[...], h.astype(jnp.bfloat16),
                  preferred_element_type=f32) + ubout_ref[...]      # (C, T)
    o_ref[0] = out


def _fused_forward_call(x_lat, scene_pts_t, obj_pts_t, temb_col, p):
    B, C, T = x_lat.shape

    weights = (
        p["scene_w1_t"], p["scene_b1"], p["scene_w2_t"], p["scene_b2"],
        p["obj_w1_t"], p["obj_b1"], p["obj_w2_t"], p["obj_b2"],
        p["t_w1_t"], p["t_b1"], p["t_w2_t"], p["t_b2"],
        p["u_w_c_t"], p["u_w_in_t"], p["u_b0"], p["u_w_out_t"], p["u_b_out"],
    )

    def batched(shape):
        nd = len(shape)
        return pl.BlockSpec((1,) + tuple(shape[1:]),
                            lambda b, _nd=nd: (b,) + (0,) * (_nd - 1))

    def replicated(w):
        return pl.BlockSpec(w.shape, lambda b: (0, 0))   # all weights are 2-D

    in_specs = ([batched(x_lat.shape),
                 batched(scene_pts_t.shape),
                 batched(obj_pts_t.shape),
                 batched(temb_col.shape)]
                + [replicated(w) for w in weights])

    return pl.pallas_call(
        _animate_flow3d_fused_kernel,
        grid=(B,),
        in_specs=in_specs,
        out_specs=pl.BlockSpec((1, C, T), lambda b: (b, 0, 0)),
        out_shape=jax.ShapeDtypeStruct((B, C, T), jnp.float32),
        compiler_params=pltpu.CompilerParams(dimension_semantics=("parallel",)),
    )(x_lat, scene_pts_t, obj_pts_t, temb_col, *weights)


# --------------------------------- glue -------------------------------------
def timestep_embedding_col(t, dim):
    """Sinusoidal timestep embedding, returned as columns (B, dim, 1).

    Kept as (tiny) host-side XLA glue; sin/cos on a (B, dim) array is
    negligible next to the fused kernel."""
    half = dim // 2
    freqs = jnp.exp(-jnp.log(10000.0) *
                    jnp.arange(half, dtype=jnp.float32) / half)
    args = t.astype(jnp.float32)[:, None] * freqs[None, :]
    emb = jnp.concatenate([jnp.sin(args), jnp.cos(args)], axis=-1)   # (B, dim)
    return emb[:, :, None]                                           # (B, dim, 1)


def init_params(key):
    def dense_t(k, fan_in, fan_out, dtype=jnp.float32):
        # stored transposed (fan_out, fan_in): kernel computes W^T @ x
        w = (jax.random.normal(k, (fan_out, fan_in), jnp.float32)
             / jnp.sqrt(jnp.float32(fan_in)))
        return w.astype(dtype)

    def col(n):
        return jnp.zeros((n, 1), jnp.float32)

    ks = jax.random.split(key, 10)
    return {
        # Uni3D scene-encoder stand-in (frozen in PyTorch; just weights here)
        "scene_w1_t": dense_t(ks[0], PTS_CIN, SCENE_HID),
        "scene_b1": col(SCENE_HID),
        "scene_w2_t": dense_t(ks[1], SCENE_HID, SCENE_DIM),
        "scene_b2": col(SCENE_DIM),
        # MLPEncoder(in_channels=6) stand-in
        "obj_w1_t": dense_t(ks[2], PTS_CIN, OBJ_HID),
        "obj_b1": col(OBJ_HID),
        "obj_w2_t": dense_t(ks[3], OBJ_HID, OBJ_DIM),
        "obj_b2": col(OBJ_DIM),
        # timestep-embedding MLP of the UNet stand-in
        "t_w1_t": dense_t(ks[4], TIME_DIM, UNET_HID),
        "t_b1": col(UNET_HID),
        "t_w2_t": dense_t(ks[5], UNET_HID, UNET_HID),
        "t_b2": col(UNET_HID),
        # UNet stand-in: condition proj + token in/out proj (bf16 on MXU path)
        "u_w_c_t": dense_t(ks[6], COND_DIM, UNET_HID),
        "u_w_in_t": dense_t(ks[7], LATENT_C, UNET_HID, jnp.bfloat16),
        "u_b0": col(UNET_HID),            # b_in + b_c folded into one bias
        "u_w_out_t": dense_t(ks[8], UNET_HID, LATENT_C, jnp.bfloat16),
        "u_b_out": col(LATENT_C),
    }


def animate_flow3d_forward(params, noisy_latents, timesteps, global_obs,
                           first_frame_object_points):
    B, C, F, H, W = noisy_latents.shape
    T = F * H * W

    # NCFHW flattens directly to channel-major tokens (B, C, T): NO transpose,
    # and the kernel produces output in the same layout, so `model_pred`
    # reshapes straight back to (B, C, F, H, W).
    x_lat = noisy_latents.reshape(B, C, T)

    # Tiny channel-first repack of the point clouds (Cin on sublanes, points on
    # the lane axis) so the PointNet matmuls / max-pool are lane-dense.
    scene_pts_t = jnp.transpose(global_obs, (0, 2, 1))
    obj_pts_t = jnp.transpose(first_frame_object_points, (0, 2, 1))

    temb_col = timestep_embedding_col(timesteps, TIME_DIM)   # (B, TIME_DIM, 1)

    out_tok = _fused_forward_call(x_lat, scene_pts_t, obj_pts_t, temb_col,
                                  params)                    # (B, C, T)
    return out_tok.reshape(B, C, F, H, W)


# ---------------------------------- main -------------------------------------
if __name__ == "__main__":
    key = jax.random.PRNGKey(0)
    k_param, k_lat, k_obs, k_obj = jax.random.split(key, 4)

    B, C, F, H, W = 2, LATENT_C, 4, 8, 8
    N_SCENE_PTS, N_OBJ_PTS = 64, 32

    params = init_params(k_param)
    noisy_latents = jax.random.normal(k_lat, (B, C, F, H, W), jnp.float32)
    timesteps = jnp.array([10, 500], dtype=jnp.int32)
    global_obs = jax.random.normal(k_obs, (B, N_SCENE_PTS, PTS_CIN), jnp.float32)
    first_frame_object_points = jax.random.normal(
        k_obj, (B, N_OBJ_PTS, PTS_CIN), jnp.float32)

    forward = jax.jit(animate_flow3d_forward)
    model_pred = forward(params, noisy_latents, timesteps, global_obs,
                         first_frame_object_points)
    jax.block_until_ready(model_pred)
    assert model_pred.shape == (B, C, F, H, W)
    assert model_pred.dtype == jnp.float32
    print("KERNEL_OK")
</pallas_src>

<mosaic_0001>
module attributes {stable_mosaic.version = 11 : i64} {
  func.func @_animate_flow3d_fused_kernel(%arg0: i32, %arg1: memref<1x4x256xf32, #tpu.memory_space<vmem>>, %arg2: memref<1x6x64xf32, #tpu.memory_space<vmem>>, %arg3: memref<1x6x32xf32, #tpu.memory_space<vmem>>, %arg4: memref<1x32x1xf32, #tpu.memory_space<vmem>>, %arg5: memref<128x6xf32, #tpu.memory_space<vmem>>, %arg6: memref<128x1xf32, #tpu.memory_space<vmem>>, %arg7: memref<32x128xf32, #tpu.memory_space<vmem>>, %arg8: memref<32x1xf32, #tpu.memory_space<vmem>>, %arg9: memref<128x6xf32, #tpu.memory_space<vmem>>, %arg10: memref<128x1xf32, #tpu.memory_space<vmem>>, %arg11: memref<32x128xf32, #tpu.memory_space<vmem>>, %arg12: memref<32x1xf32, #tpu.memory_space<vmem>>, %arg13: memref<128x32xf32, #tpu.memory_space<vmem>>, %arg14: memref<128x1xf32, #tpu.memory_space<vmem>>, %arg15: memref<128x128xf32, #tpu.memory_space<vmem>>, %arg16: memref<128x1xf32, #tpu.memory_space<vmem>>, %arg17: memref<128x64xf32, #tpu.memory_space<vmem>>, %arg18: memref<128x4xbf16, #tpu.memory_space<vmem>>, %arg19: memref<128x1xf32, #tpu.memory_space<vmem>>, %arg20: memref<4x128xbf16, #tpu.memory_space<vmem>>, %arg21: memref<4x1xf32, #tpu.memory_space<vmem>>, %arg22: memref<1x4x256xf32, #tpu.memory_space<vmem>>) attributes {dimension_semantics = [#tpu.dimension_semantics<parallel>], iteration_bounds = array<i64: 2>, scalar_prefetch = 0 : i64, scratch_operands = 0 : i64, tpu.core_type = #tpu.core_type<tc>, window_params = [{transform_indices = @transform_0, window_bounds = array<i64: 1, 4, 256>}, {transform_indices = @transform_1, window_bounds = array<i64: 1, 6, 64>}, {transform_indices = @transform_2, window_bounds = array<i64: 1, 6, 32>}, {transform_indices = @transform_3, window_bounds = array<i64: 1, 32, 1>}, {pipeline_mode = #tpu.pipeline_mode<synchronous>, transform_indices = @transform_4, window_bounds = array<i64: 128, 6>}, {pipeline_mode = #tpu.pipeline_mode<synchronous>, transform_indices = @transform_5, window_bounds = array<i64: 128, 1>}, {pipeline_mode = #tpu.pipeline_mode<synchronous>, transform_indices = @transform_6, window_bounds = array<i64: 32, 128>}, {pipeline_mode = #tpu.pipeline_mode<synchronous>, transform_indices = @transform_7, window_bounds = array<i64: 32, 1>}, {pipeline_mode = #tpu.pipeline_mode<synchronous>, transform_indices = @transform_8, window_bounds = array<i64: 128, 6>}, {pipeline_mode = #tpu.pipeline_mode<synchronous>, transform_indices = @transform_9, window_bounds = array<i64: 128, 1>}, {pipeline_mode = #tpu.pipeline_mode<synchronous>, transform_indices = @transform_10, window_bounds = array<i64: 32, 128>}, {pipeline_mode = #tpu.pipeline_mode<synchronous>, transform_indices = @transform_11, window_bounds = array<i64: 32, 1>}, {pipeline_mode = #tpu.pipeline_mode<synchronous>, transform_indices = @transform_12, window_bounds = array<i64: 128, 32>}, {pipeline_mode = #tpu.pipeline_mode<synchronous>, transform_indices = @transform_13, window_bounds = array<i64: 128, 1>}, {pipeline_mode = #tpu.pipeline_mode<synchronous>, transform_indices = @transform_14, window_bounds = array<i64: 128, 128>}, {pipeline_mode = #tpu.pipeline_mode<synchronous>, transform_indices = @transform_15, window_bounds = array<i64: 128, 1>}, {pipeline_mode = #tpu.pipeline_mode<synchronous>, transform_indices = @transform_16, window_bounds = array<i64: 128, 64>}, {pipeline_mode = #tpu.pipeline_mode<synchronous>, transform_indices = @transform_17, window_bounds = array<i64: 128, 4>}, {pipeline_mode = #tpu.pipeline_mode<synchronous>, transform_indices = @transform_18, window_bounds = array<i64: 128, 1>}, {pipeline_mode = #tpu.pipeline_mode<synchronous>, transform_indices = @transform_19, window_bounds = array<i64: 4, 128>}, {pipeline_mode = #tpu.pipeline_mode<synchronous>, transform_indices = @transform_20, window_bounds = array<i64: 4, 1>}, {transform_indices = @transform_21, window_bounds = array<i64: 1, 4, 256>}]} {
    %c0 = arith.constant 0 : index
    %c0_0 = arith.constant 0 : index
    %c0_1 = arith.constant 0 : index
    %0 = vector.load %arg2[%c0, %c0_0, %c0_1] : memref<1x6x64xf32, #tpu.memory_space<vmem>>, vector<1x6x64xf32>
    %1 = vector.shape_cast %0 : vector<1x6x64xf32> to vector<6x64xf32>
    %c0_2 = arith.constant 0 : index
    %c0_3 = arith.constant 0 : index
    %2 = vector.load %arg5[%c0_2, %c0_3] : memref<128x6xf32, #tpu.memory_space<vmem>>, vector<128x6xf32>
    %cst = arith.constant dense<0.000000e+00> : vector<128x64xf32>
    %3 = tpu.matmul %2, %1, %cst {dimension_numbers = #tpu.dot_dimension_numbers<[1], [0], [0], [1], [0, 0, 1, 1], [], []>} : vector<128x6xf32>, vector<6x64xf32>, vector<128x64xf32> -> vector<128x64xf32>
    %c0_4 = arith.constant 0 : index
    %c0_5 = arith.constant 0 : index
    %4 = vector.load %arg6[%c0_4, %c0_5] : memref<128x1xf32, #tpu.memory_space<vmem>>, vector<128x1xf32>
    %5 = vector.broadcast %4 : vector<128x1xf32> to vector<128x64xf32>
    %6 = arith.addf %3, %5 : vector<128x64xf32>
    %cst_6 = arith.constant 0.000000e+00 : f32
    %7 = vector.broadcast %cst_6 : f32 to vector<128x64xf32>
    %8 = arith.maximumf %6, %7 : vector<128x64xf32>
    %c0_7 = arith.constant 0 : index
    %c0_8 = arith.constant 0 : index
    %9 = vector.load %arg7[%c0_7, %c0_8] : memref<32x128xf32, #tpu.memory_space<vmem>>, vector<32x128xf32>
    %cst_9 = arith.constant dense<0.000000e+00> : vector<32x64xf32>
    %10 = tpu.matmul %9, %8, %cst_9 {dimension_numbers = #tpu.dot_dimension_numbers<[1], [0], [0], [1], [0, 0, 1, 1], [], []>} : vector<32x128xf32>, vector<128x64xf32>, vector<32x64xf32> -> vector<32x64xf32>
    %c0_10 = arith.constant 0 : index
    %c0_11 = arith.constant 0 : index
    %11 = vector.load %arg8[%c0_10, %c0_11] : memref<32x1xf32, #tpu.memory_space<vmem>>, vector<32x1xf32>
    %12 = vector.broadcast %11 : vector<32x1xf32> to vector<32x64xf32>
    %13 = arith.addf %10, %12 : vector<32x64xf32>
    %cst_12 = arith.constant 0.000000e+00 : f32
    %14 = vector.broadcast %cst_12 : f32 to vector<32x64xf32>
    %15 = arith.maximumf %13, %14 : vector<32x64xf32>
    %cst_13 = arith.constant dense<0xFF800000> : vector<32xf32>
    %16 = vector.multi_reduction <maximumf>, %15, %cst_13 [1] : vector<32x64xf32> to vector<32xf32>
    %17 = vector.shape_cast %16 : vector<32xf32> to vector<32x1xf32>
    %18 = arith.mulf %17, %17 : vector<32x1xf32>
    %cst_14 = arith.constant dense<0.000000e+00> : vector<1xf32>
    %19 = vector.multi_reduction <add>, %18, %cst_14 [0] : vector<32x1xf32> to vector<1xf32>
    %20 = vector.shape_cast %19 : vector<1xf32> to vector<1x1xf32>
    %21 = math.rsqrt %20 : vector<1x1xf32>
    %22 = vector.broadcast %21 : vector<1x1xf32> to vector<32x1xf32>
    %23 = arith.mulf %17, %22 : vector<32x1xf32>
    %c0_15 = arith.constant 0 : index
    %c0_16 = arith.constant 0 : index
    %c0_17 = arith.constant 0 : index
    %24 = vector.load %arg3[%c0_15, %c0_16, %c0_17] : memref<1x6x32xf32, #tpu.memory_space<vmem>>, vector<1x6x32xf32>
    %25 = vector.shape_cast %24 : vector<1x6x32xf32> to vector<6x32xf32>
    %c0_18 = arith.constant 0 : index
    %c0_19 = arith.constant 0 : index
    %26 = vector.load %arg9[%c0_18, %c0_19] : memref<128x6xf32, #tpu.memory_space<vmem>>, vector<128x6xf32>
    %cst_20 = arith.constant dense<0.000000e+00> : vector<128x32xf32>
    %27 = tpu.matmul %26, %25, %cst_20 {dimension_numbers = #tpu.dot_dimension_numbers<[1], [0], [0], [1], [0, 0, 1, 1], [], []>} : vector<128x6xf32>, vector<6x32xf32>, vector<128x32xf32> -> vector<128x32xf32>
    %c0_21 = arith.constant 0 : index
    %c0_22 = arith.constant 0 : index
    %28 = vector.load %arg10[%c0_21, %c0_22] : memref<128x1xf32, #tpu.memory_space<vmem>>, vector<128x1xf32>
    %29 = vector.broadcast %28 : vector<128x1xf32> to vector<128x32xf32>
    %30 = arith.addf %27, %29 : vector<128x32xf32>
    %cst_23 = arith.constant 0.000000e+00 : f32
    %31 = vector.broadcast %cst_23 : f32 to vector<128x32xf32>
    %32 = arith.maximumf %30, %31 : vector<128x32xf32>
    %c0_24 = arith.constant 0 : index
    %c0_25 = arith.constant 0 : index
    %33 = vector.load %arg11[%c0_24, %c0_25] : memref<32x128xf32, #tpu.memory_space<vmem>>, vector<32x128xf32>
    %cst_26 = arith.constant dense<0.000000e+00> : vector<32x32xf32>
    %34 = tpu.matmul %33, %32, %cst_26 {dimension_numbers = #tpu.dot_dimension_numbers<[1], [0], [0], [1], [0, 0, 1, 1], [], []>} : vector<32x128xf32>, vector<128x32xf32>, vector<32x32xf32> -> vector<32x32xf32>
    %c0_27 = arith.constant 0 : index
    %c0_28 = arith.constant 0 : index
    %35 = vector.load %arg12[%c0_27, %c0_28] : memref<32x1xf32, #tpu.memory_space<vmem>>, vector<32x1xf32>
    %36 = vector.broadcast %35 : vector<32x1xf32> to vector<32x32xf32>
    %37 = arith.addf %34, %36 : vector<32x32xf32>
    %cst_29 = arith.constant 0.000000e+00 : f32
    %38 = vector.broadcast %cst_29 : f32 to vector<32x32xf32>
    %39 = arith.maximumf %37, %38 : vector<32x32xf32>
    %cst_30 = arith.constant dense<0xFF800000> : vector<32xf32>
    %40 = vector.multi_reduction <maximumf>, %39, %cst_30 [1] : vector<32x32xf32> to vector<32xf32>
    %41 = vector.shape_cast %40 : vector<32xf32> to vector<32x1xf32>
    %42 = tpu.concatenate %23, %41 in 0 : vector<32x1xf32>, vector<32x1xf32> -> vector<64x1xf32>
    %c0_31 = arith.constant 0 : index
    %c0_32 = arith.constant 0 : index
    %c0_33 = arith.constant 0 : index
    %43 = vector.load %arg4[%c0_31, %c0_32, %c0_33] : memref<1x32x1xf32, #tpu.memory_space<vmem>>, vector<1x32x1xf32>
    %44 = vector.shape_cast %43 : vector<1x32x1xf32> to vector<32x1xf32>
    %c0_34 = arith.constant 0 : index
    %c0_35 = arith.constant 0 : index
    %45 = vector.load %arg13[%c0_34, %c0_35] : memref<128x32xf32, #tpu.memory_space<vmem>>, vector<128x32xf32>
    %cst_36 = arith.constant dense<0.000000e+00> : vector<128x1xf32>
    %46 = tpu.matmul %45, %44, %cst_36 {dimension_numbers = #tpu.dot_dimension_numbers<[1], [0], [0], [1], [0, 0, 1, 1], [], []>} : vector<128x32xf32>, vector<32x1xf32>, vector<128x1xf32> -> vector<128x1xf32>
    %c0_37 = arith.constant 0 : index
    %c0_38 = arith.constant 0 : index
    %47 = vector.load %arg14[%c0_37, %c0_38] : memref<128x1xf32, #tpu.memory_space<vmem>>, vector<128x1xf32>
    %48 = arith.addf %46, %47 : vector<128x1xf32>
    %49 = arith.negf %48 : vector<128x1xf32>
    %50 = math.exp %49 : vector<128x1xf32>
    %cst_39 = arith.constant 1.000000e+00 : f32
    %51 = vector.broadcast %cst_39 : f32 to vector<128x1xf32>
    %52 = arith.addf %51, %50 : vector<128x1xf32>
    %53 = arith.divf %51, %52 : vector<128x1xf32>
    %54 = arith.mulf %48, %53 : vector<128x1xf32>
    %c0_40 = arith.constant 0 : index
    %c0_41 = arith.constant 0 : index
    %55 = vector.load %arg15[%c0_40, %c0_41] : memref<128x128xf32, #tpu.memory_space<vmem>>, vector<128x128xf32>
    %cst_42 = arith.constant dense<0.000000e+00> : vector<128x1xf32>
    %56 = tpu.matmul %55, %54, %cst_42 {dimension_numbers = #tpu.dot_dimension_numbers<[1], [0], [0], [1], [0, 0, 1, 1], [], []>} : vector<128x128xf32>, vector<128x1xf32>, vector<128x1xf32> -> vector<128x1xf32>
    %c0_43 = arith.constant 0 : index
    %c0_44 = arith.constant 0 : index
    %57 = vector.load %arg16[%c0_43, %c0_44] : memref<128x1xf32, #tpu.memory_space<vmem>>, vector<128x1xf32>
    %58 = arith.addf %56, %57 : vector<128x1xf32>
    %c0_45 = arith.constant 0 : index
    %c0_46 = arith.constant 0 : index
    %59 = vector.load %arg19[%c0_45, %c0_46] : memref<128x1xf32, #tpu.memory_space<vmem>>, vector<128x1xf32>
    %60 = arith.addf %59, %58 : vector<128x1xf32>
    %c0_47 = arith.constant 0 : index
    %c0_48 = arith.constant 0 : index
    %61 = vector.load %arg17[%c0_47, %c0_48] : memref<128x64xf32, #tpu.memory_space<vmem>>, vector<128x64xf32>
    %cst_49 = arith.constant dense<0.000000e+00> : vector<128x1xf32>
    %62 = tpu.matmul %61, %42, %cst_49 {dimension_numbers = #tpu.dot_dimension_numbers<[1], [0], [0], [1], [0, 0, 1, 1], [], []>} : vector<128x64xf32>, vector<64x1xf32>, vector<128x1xf32> -> vector<128x1xf32>
    %63 = arith.addf %60, %62 : vector<128x1xf32>
    %c0_50 = arith.constant 0 : index
    %c0_51 = arith.constant 0 : index
    %c0_52 = arith.constant 0 : index
    %64 = vector.load %arg1[%c0_50, %c0_51, %c0_52] : memref<1x4x256xf32, #tpu.memory_space<vmem>>, vector<1x4x256xf32>
    %65 = vector.shape_cast %64 : vector<1x4x256xf32> to vector<4x256xf32>
    %66 = arith.truncf %65 : vector<4x256xf32> to vector<4x256xbf16>
    %c0_53 = arith.constant 0 : index
    %c0_54 = arith.constant 0 : index
    %67 = vector.load %arg18[%c0_53, %c0_54] : memref<128x4xbf16, #tpu.memory_space<vmem>>, vector<128x4xbf16>
    %cst_55 = arith.constant dense<0.000000e+00> : vector<128x256xf32>
    %68 = tpu.matmul %67, %66, %cst_55 {dimension_numbers = #tpu.dot_dimension_numbers<[1], [0], [0], [1], [0, 0, 1, 1], [], []>} : vector<128x4xbf16>, vector<4x256xbf16>, vector<128x256xf32> -> vector<128x256xf32>
    %69 = vector.broadcast %63 : vector<128x1xf32> to vector<128x256xf32>
    %70 = arith.addf %68, %69 : vector<128x256xf32>
    %71 = arith.negf %70 : vector<128x256xf32>
    %72 = math.exp %71 : vector<128x256xf32>
    %cst_56 = arith.constant 1.000000e+00 : f32
    %73 = vector.broadcast %cst_56 : f32 to vector<128x256xf32>
    %74 = arith.addf %73, %72 : vector<128x256xf32>
    %75 = arith.divf %73, %74 : vector<128x256xf32>
    %76 = arith.mulf %70, %75 : vector<128x256xf32>
    %c0_57 = arith.constant 0 : index
    %c0_58 = arith.constant 0 : index
    %77 = vector.load %arg20[%c0_57, %c0_58] : memref<4x128xbf16, #tpu.memory_space<vmem>>, vector<4x128xbf16>
    %78 = arith.truncf %76 : vector<128x256xf32> to vector<128x256xbf16>
    %cst_59 = arith.constant dense<0.000000e+00> : vector<4x256xf32>
    %79 = tpu.matmul %77, %78, %cst_59 {dimension_numbers = #tpu.dot_dimension_numbers<[1], [0], [0], [1], [0, 0, 1, 1], [], []>} : vector<4x128xbf16>, vector<128x256xbf16>, vector<4x256xf32> -> vector<4x256xf32>
    %c0_60 = arith.constant 0 : index
    %c0_61 = arith.constant 0 : index
    %80 = vector.load %arg21[%c0_60, %c0_61] : memref<4x1xf32, #tpu.memory_space<vmem>>, vector<4x1xf32>
    %81 = vector.broadcast %80 : vector<4x1xf32> to vector<4x256xf32>
    %82 = arith.addf %79, %81 : vector<4x256xf32>
    %c0_62 = arith.constant 0 : index
    %c0_63 = arith.constant 0 : index
    %c0_64 = arith.constant 0 : index
    %83 = vector.load %arg22[%c0_62, %c0_63, %c0_64] : memref<1x4x256xf32, #tpu.memory_space<vmem>>, vector<1x4x256xf32>
    %84 = vector.shape_cast %83 : vector<1x4x256xf32> to vector<4x256xf32>
    %85 = vector.shape_cast %82 : vector<4x256xf32> to vector<1x4x256xf32>
    tpu.vector_store %arg22[%c0_62, %c0_63, %c0_64], %85 {strides = array<i32>} : memref<1x4x256xf32, #tpu.memory_space<vmem>>, vector<1x4x256xf32>,
    return
  }
  func.func @transform_0(%arg0: i32) -> (i32, i32, i32) {
    %c0_i32 = arith.constant 0 : i32
    %c0_i32_0 = arith.constant 0 : i32
    %c0_i32_1 = arith.constant 0 : i32
    return %arg0, %c0_i32, %c0_i32_0 : i32, i32, i32
  }
  func.func @transform_1(%arg0: i32) -> (i32, i32, i32) {
    %c0_i32 = arith.constant 0 : i32
    %c0_i32_0 = arith.constant 0 : i32
    %c0_i32_1 = arith.constant 0 : i32
    return %arg0, %c0_i32, %c0_i32_0 : i32, i32, i32
  }
  func.func @transform_2(%arg0: i32) -> (i32, i32, i32) {
    %c0_i32 = arith.constant 0 : i32
    %c0_i32_0 = arith.constant 0 : i32
    %c0_i32_1 = arith.constant 0 : i32
    return %arg0, %c0_i32, %c0_i32_0 : i32, i32, i32
  }
  func.func @transform_3(%arg0: i32) -> (i32, i32, i32) {
    %c0_i32 = arith.constant 0 : i32
    %c0_i32_0 = arith.constant 0 : i32
    %c0_i32_1 = arith.constant 0 : i32
    return %arg0, %c0_i32, %c0_i32_0 : i32, i32, i32
  }
  func.func @transform_4(%arg0: i32) -> (i32, i32) {
    %c0_i32 = arith.constant 0 : i32
    %c0_i32_0 = arith.constant 0 : i32
    %c0_i32_1 = arith.constant 0 : i32
    return %c0_i32, %c0_i32_0 : i32, i32
  }
  func.func @transform_5(%arg0: i32) -> (i32, i32) {
    %c0_i32 = arith.constant 0 : i32
    %c0_i32_0 = arith.constant 0 : i32
    %c0_i32_1 = arith.constant 0 : i32
    return %c0_i32, %c0_i32_0 : i32, i32
  }
  func.func @transform_6(%arg0: i32) -> (i32, i32) {
    %c0_i32 = arith.constant 0 : i32
    %c0_i32_0 = arith.constant 0 : i32
    %c0_i32_1 = arith.constant 0 : i32
    return %c0_i32, %c0_i32_0 : i32, i32
  }
  func.func @transform_7(%arg0: i32) -> (i32, i32) {
    %c0_i32 = arith.constant 0 : i32
    %c0_i32_0 = arith.constant 0 : i32
    %c0_i32_1 = arith.constant 0 : i32
    return %c0_i32, %c0_i32_0 : i32, i32
  }
  func.func @transform_8(%arg0: i32) -> (i32, i32) {
    %c0_i32 = arith.constant 0 : i32
    %c0_i32_0 = arith.constant 0 : i32
    %c0_i32_1 = arith.constant 0 : i32
    return %c0_i32, %c0_i32_0 : i32, i32
  }
  func.func @transform_9(%arg0: i32) -> (i32, i32) {
    %c0_i32 = arith.constant 0 : i32
    %c0_i32_0 = arith.constant 0 : i32
    %c0_i32_1 = arith.constant 0 : i32
    return %c0_i32, %c0_i32_0 : i32, i32
  }
  func.func @transform_10(%arg0: i32) -> (i32, i32) {
    %c0_i32 = arith.constant 0 : i32
    %c0_i32_0 = arith.constant 0 : i32
    %c0_i32_1 = arith.constant 0 : i32
    return %c0_i32, %c0_i32_0 : i32, i32
  }
  func.func @transform_11(%arg0: i32) -> (i32, i32) {
    %c0_i32 = arith.constant 0 : i32
    %c0_i32_0 = arith.constant 0 : i32
    %c0_i32_1 = arith.constant 0 : i32
    return %c0_i32, %c0_i32_0 : i32, i32
  }
  func.func @transform_12(%arg0: i32) -> (i32, i32) {
    %c0_i32 = arith.constant 0 : i32
    %c0_i32_0 = arith.constant 0 : i32
    %c0_i32_1 = arith.constant 0 : i32
    return %c0_i32, %c0_i32_0 : i32, i32
  }
  func.func @transform_13(%arg0: i32) -> (i32, i32) {
    %c0_i32 = arith.constant 0 : i32
    %c0_i32_0 = arith.constant 0 : i32
    %c0_i32_1 = arith.constant 0 : i32
    return %c0_i32, %c0_i32_0 : i32, i32
  }
  func.func @transform_14(%arg0: i32) -> (i32, i32) {
    %c0_i32 = arith.constant 0 : i32
    %c0_i32_0 = arith.constant 0 : i32
    %c0_i32_1 = arith.constant 0 : i32
    return %c0_i32, %c0_i32_0 : i32, i32
  }
  func.func @transform_15(%arg0: i32) -> (i32, i32) {
    %c0_i32 = arith.constant 0 : i32
    %c0_i32_0 = arith.constant 0 : i32
    %c0_i32_1 = arith.constant 0 : i32
    return %c0_i32, %c0_i32_0 : i32, i32
  }
  func.func @transform_16(%arg0: i32) -> (i32, i32) {
    %c0_i32 = arith.constant 0 : i32
    %c0_i32_0 = arith.constant 0 : i32
    %c0_i32_1 = arith.constant 0 : i32
    return %c0_i32, %c0_i32_0 : i32, i32
  }
  func.func @transform_17(%arg0: i32) -> (i32, i32) {
    %c0_i32 = arith.constant 0 : i32
    %c0_i32_0 = arith.constant 0 : i32
    %c0_i32_1 = arith.constant 0 : i32
    return %c0_i32, %c0_i32_0 : i32, i32
  }
  func.func @transform_18(%arg0: i32) -> (i32, i32) {
    %c0_i32 = arith.constant 0 : i32
    %c0_i32_0 = arith.constant 0 : i32
    %c0_i32_1 = arith.constant 0 : i32
    return %c0_i32, %c0_i32_0 : i32, i32
  }
  func.func @transform_19(%arg0: i32) -> (i32, i32) {
    %c0_i32 = arith.constant 0 : i32
    %c0_i32_0 = arith.constant 0 : i32
    %c0_i32_1 = arith.constant 0 : i32
    return %c0_i32, %c0_i32_0 : i32, i32
  }
  func.func @transform_20(%arg0: i32) -> (i32, i32) {
    %c0_i32 = arith.constant 0 : i32
    %c0_i32_0 = arith.constant 0 : i32
    %c0_i32_1 = arith.constant 0 : i32
    return %c0_i32, %c0_i32_0 : i32, i32
  }
  func.func @transform_21(%arg0: i32) -> (i32, i32, i32) {
    %c0_i32 = arith.constant 0 : i32
    %c0_i32_0 = arith.constant 0 : i32
    %c0_i32_1 = arith.constant 0 : i32
    return %arg0, %c0_i32, %c0_i32_0 : i32, i32, i32
  }
}

</mosaic_0001>

<llo_original>
// kernel: animate_flow3d_forward.1
$region0: #{animate_flow3d_forward.1}
  #allocation0 [shape = 'u32[]', space=smem, size = 0x4, offset = 0x4, fixed_abs, tag = 'smem constant byte address 0x4 - core index']
  #allocation1 [shape = 'u32[72,128]{1,0:T(1,128)}', space=vmem, size = 0x9000, scoped, tag = 'internal scratch']
  %s0 = inlined_call_operand.vmem [shape: f32[2,4,256], index: 0, kind: input, shape index: {}]
  %s1 = inlined_call_operand.vmem [shape: f32[2,6,64], index: 1, kind: input, shape index: {}]
  %s2 = inlined_call_operand.vmem [shape: f32[2,6,32], index: 2, kind: input, shape index: {}]
  %s3 = inlined_call_operand.vmem [shape: f32[2,32,1], index: 3, kind: input, shape index: {}]
  %s4 = inlined_call_operand.vmem [shape: f32[128,6], index: 4, kind: input, shape index: {}]
  %s5 = inlined_call_operand.vmem [shape: f32[128,1], index: 5, kind: input, shape index: {}]
  %s6 = inlined_call_operand.vmem [shape: f32[32,128], index: 6, kind: input, shape index: {}]
  %s7 = inlined_call_operand.vmem [shape: f32[32,1], index: 7, kind: input, shape index: {}]
  %s8 = inlined_call_operand.vmem [shape: f32[128,6], index: 8, kind: input, shape index: {}]
  %s9 = inlined_call_operand.vmem [shape: f32[128,1], index: 9, kind: input, shape index: {}]
  %s10 = inlined_call_operand.vmem [shape: f32[32,128], index: 10, kind: input, shape index: {}]
  %s11 = inlined_call_operand.vmem [shape: f32[32,1], index: 11, kind: input, shape index: {}]
  %s12 = inlined_call_operand.vmem [shape: f32[128,32], index: 12, kind: input, shape index: {}]
  %s13 = inlined_call_operand.vmem [shape: f32[128,1], index: 13, kind: input, shape index: {}]
  %s14 = inlined_call_operand.vmem [shape: f32[128,128], index: 14, kind: input, shape index: {}]
  %s15 = inlined_call_operand.vmem [shape: f32[128,1], index: 15, kind: input, shape index: {}]
  %s16 = inlined_call_operand.vmem [shape: f32[128,64], index: 16, kind: input, shape index: {}]
  %s17 = inlined_call_operand.vmem [shape: bf16[128,4], index: 17, kind: input, shape index: {}]
  %s18 = inlined_call_operand.vmem [shape: f32[128,1], index: 18, kind: input, shape index: {}]
  %s19 = inlined_call_operand.vmem [shape: bf16[4,128], index: 19, kind: input, shape index: {}]
  %s20 = inlined_call_operand.vmem [shape: f32[4,1], index: 20, kind: input, shape index: {}]
  %s21 = inlined_call_operand.vmem [shape: f32[2,4,256], index: 21, kind: output, shape index: {}]
  %s22 = sld [smem:[#allocation0]]
  $region117: #{animate_flow3d_forward.1} parent=0
    _
  %s24 = ssub.s32 1, %s22
  %s25 = scalar_select 0, %s24, %s22
  loop: start=0, step=1, limit=4
  $region2: #{animate_flow3d_forward.1} parent=0 // loop_pre_header
    _
  $region3: #{animate_flow3d_forward.1} parent=0 // loop_header
    %s27 = sphi 0, %s31
    %p28 = scmp.ge.s32.totalorder %s27, 4
    %s37 = sphi 0, %s39
    %s40 = sphi 0, %s37
    %s41 = sphi 0, %s40
    %s57 = sphi 0, %s41
    %s63 = sphi 0, %s65
    %s66 = sphi 0, %s63
    %s67 = sphi 0, %s66
    %s83 = sphi 0, %s67
    %s89 = sphi 0, %s91
    %s92 = sphi 0, %s89
    %s93 = sphi 0, %s92
    %s109 = sphi 0, %s93
    %s115 = sphi 0, %s117
    %s118 = sphi 0, %s115
    %s119 = sphi 0, %s118
    %s135 = sphi 0, %s119
    %s139 = sphi 0, %s139
    %s141 = sphi 0, %s139
    %s142 = sphi 0, %s141
    %s156 = sphi 0, %s142
    %s160 = sphi 0, %s160
    %s162 = sphi 0, %s160
    %s163 = sphi 0, %s162
    %s177 = sphi 0, %s163
    %s181 = sphi 0, %s181
    %s183 = sphi 0, %s181
    %s184 = sphi 0, %s183
    %s198 = sphi 0, %s184
    %s202 = sphi 0, %s202
    %s204 = sphi 0, %s202
    %s205 = sphi 0, %s204
    %s219 = sphi 0, %s205
    %s223 = sphi 0, %s223
    %s225 = sphi 0, %s223
    %s226 = sphi 0, %s225
    %s240 = sphi 0, %s226
    %s244 = sphi 0, %s244
    %s246 = sphi 0, %s244
    %s247 = sphi 0, %s246
    %s261 = sphi 0, %s247
    %s265 = sphi 0, %s265
    %s267 = sphi 0, %s265
    %s268 = sphi 0, %s267
    %s282 = sphi 0, %s268
    %s286 = sphi 0, %s286
    %s288 = sphi 0, %s286
    %s289 = sphi 0, %s288
    %s303 = sphi 0, %s289
    %s307 = sphi 0, %s307
    %s309 = sphi 0, %s307
    %s310 = sphi 0, %s309
    %s324 = sphi 0, %s310
    %s328 = sphi 0, %s328
    %s330 = sphi 0, %s328
    %s331 = sphi 0, %s330
    %s345 = sphi 0, %s331
    %s349 = sphi 0, %s349
    %s351 = sphi 0, %s349
    %s352 = sphi 0, %s351
    %s366 = sphi 0, %s352
    %s370 = sphi 0, %s370
    %s372 = sphi 0, %s370
    %s373 = sphi 0, %s372
    %s387 = sphi 0, %s373
    %s391 = sphi 0, %s391
    %s393 = sphi 0, %s391
    %s394 = sphi 0, %s393
    %s408 = sphi 0, %s394
    %s412 = sphi 0, %s412
    %s414 = sphi 0, %s412
    %s415 = sphi 0, %s414
    %s429 = sphi 0, %s415
    %s433 = sphi 0, %s433
    %s435 = sphi 0, %s433
    %s436 = sphi 0, %s435
    %s450 = sphi 0, %s436
    %s454 = sphi 0, %s454
    %s456 = sphi 0, %s454
    %s457 = sphi 0, %s456
    %s471 = sphi 0, %s457
    %s475 = sphi 0, %s475
    %s477 = sphi 0, %s475
    %s478 = sphi 0, %s477
    %s492 = sphi 0, %s478
    %s498 = sphi 0, %s500
    %s501 = sphi 0, %s498
    %s502 = sphi 0, %s501
    %s518 = sphi 0, %s502
  $region4: #{animate_flow3d_forward.1} parent=0 // loop_header_branch
    %30 = sbr.rel (%p28) target = $region8
  $region5: #{animate_flow3d_forward.1} parent=0 // loop_body
    %s32 = ssub.s32 %s27, 1
    %s33 = ssub.s32 %s27, 2
    %s34 = sadd.s32 %s27, 1
    %s35 = ssub.s32 %s27, %s34
    %p36 = scmp.eq.s32.totalorder %s35, 0
    %s38 = sadd.s32 %s37, 1
    %s39 = scalar_select %p36, %s37, %s38
    %p42 = pneg %p36
    %p43 = scmp.eq.s32.totalorder %s27, 1
    %p44 = por %p42, %p43
    %p45 = scmp.ne.s32.totalorder %s37, %s40
    %p46 = scmp.eq.s32.totalorder %s27, 0
    %p47 = por %p45, %p46
    %p48 = scmp.ne.s32.totalorder %s37, %s40
    %p49 = scmp.eq.s32.totalorder %s32, 1
    %p50 = por %p48, %p49
    %p51 = scmp.ne.s32.totalorder %s40, %s41
    %p52 = scmp.eq.s32.totalorder %s32, 0
    %p53 = por %p51, %p52
    %p54 = scmp.ne.s32.totalorder %s40, %s41
    %p55 = scmp.eq.s32.totalorder %s33, 1
    %p56 = por %p54, %p55
    %p58 = scmp.ne.s32.totalorder %s41, %s57
    %p59 = scmp.eq.s32.totalorder %s33, 0
    %p60 = por %p58, %p59
    %s61 = ssub.s32 %s27, %s34
    %p62 = scmp.eq.s32.totalorder %s61, 0
    %s64 = sadd.s32 %s63, 1
    %s65 = scalar_select %p62, %s63, %s64
    %p68 = pneg %p62
    %p69 = scmp.eq.s32.totalorder %s27, 1
    %p70 = por %p68, %p69
    %p71 = scmp.ne.s32.totalorder %s63, %s66
    %p72 = scmp.eq.s32.totalorder %s27, 0
    %p73 = por %p71, %p72
    %p74 = scmp.ne.s32.totalorder %s63, %s66
    %p75 = scmp.eq.s32.totalorder %s32, 1
    %p76 = por %p74, %p75
    %p77 = scmp.ne.s32.totalorder %s66, %s67
    %p78 = scmp.eq.s32.totalorder %s32, 0
    %p79 = por %p77, %p78
    %p80 = scmp.ne.s32.totalorder %s66, %s67
    %p81 = scmp.eq.s32.totalorder %s33, 1
    %p82 = por %p80, %p81
    %p84 = scmp.ne.s32.totalorder %s67, %s83
    %p85 = scmp.eq.s32.totalorder %s33, 0
    %p86 = por %p84, %p85
    %s87 = ssub.s32 %s27, %s34
    %p88 = scmp.eq.s32.totalorder %s87, 0
    %s90 = sadd.s32 %s89, 1
    %s91 = scalar_select %p88, %s89, %s90
    %p94 = pneg %p88
    %p95 = scmp.eq.s32.totalorder %s27, 1
    %p96 = por %p94, %p95
    %p97 = scmp.ne.s32.totalorder %s89, %s92
    %p98 = scmp.eq.s32.totalorder %s27, 0
    %p99 = por %p97, %p98
    %p100 = scmp.ne.s32.totalorder %s89, %s92
    %p101 = scmp.eq.s32.totalorder %s32, 1
    %p102 = por %p100, %p101
    %p103 = scmp.ne.s32.totalorder %s92, %s93
    %p104 = scmp.eq.s32.totalorder %s32, 0
    %p105 = por %p103, %p104
    %p106 = scmp.ne.s32.totalorder %s92, %s93
    %p107 = scmp.eq.s32.totalorder %s33, 1
    %p108 = por %p106, %p107
    %p110 = scmp.ne.s32.totalorder %s93, %s109
    %p111 = scmp.eq.s32.totalorder %s33, 0
    %p112 = por %p110, %p111
    %s113 = ssub.s32 %s27, %s34
    %p114 = scmp.eq.s32.totalorder %s113, 0
    %s116 = sadd.s32 %s115, 1
    %s117 = scalar_select %p114, %s115, %s116
    %p120 = pneg %p114
    %p121 = scmp.eq.s32.totalorder %s27, 1
    %p122 = por %p120, %p121
    %p123 = scmp.ne.s32.totalorder %s115, %s118
    %p124 = scmp.eq.s32.totalorder %s27, 0
    %p125 = por %p123, %p124
    %p126 = scmp.ne.s32.totalorder %s115, %s118
    %p127 = scmp.eq.s32.totalorder %s32, 1
    %p128 = por %p126, %p127
    %p129 = scmp.ne.s32.totalorder %s118, %s119
    %p130 = scmp.eq.s32.totalorder %s32, 0
    %p131 = por %p129, %p130
    %p132 = scmp.ne.s32.totalorder %s118, %s119
    %p133 = scmp.eq.s32.totalorder %s33, 1
    %p134 = por %p132, %p133
    %p136 = scmp.ne.s32.totalorder %s119, %s135
    %p137 = scmp.eq.s32.totalorder %s33, 0
    %p138 = por %p136, %p137
    %s140 = sadd.s32 %s139, 1
    %p143 = scmp.eq.s32.totalorder %s27, 1
    %p144 = scmp.ne.s32.totalorder %s139, %s141
    %p145 = scmp.eq.s32.totalorder %s27, 0
    %p146 = por %p144, %p145
    %p147 = scmp.ne.s32.totalorder %s139, %s141
    %p148 = scmp.eq.s32.totalorder %s32, 1
    %p149 = por %p147, %p148
    %p150 = scmp.ne.s32.totalorder %s141, %s142
    %p151 = scmp.eq.s32.totalorder %s32, 0
    %p152 = por %p150, %p151
    %p153 = scmp.ne.s32.totalorder %s141, %s142
    %p154 = scmp.eq.s32.totalorder %s33, 1
    %p155 = por %p153, %p154
    %p157 = scmp.ne.s32.totalorder %s142, %s156
    %p158 = scmp.eq.s32.totalorder %s33, 0
    %p159 = por %p157, %p158
    %s161 = sadd.s32 %s160, 1
    %p164 = scmp.eq.s32.totalorder %s27, 1
    %p165 = scmp.ne.s32.totalorder %s160, %s162
    %p166 = scmp.eq.s32.totalorder %s27, 0
    %p167 = por %p165, %p166
    %p168 = scmp.ne.s32.totalorder %s160, %s162
    %p169 = scmp.eq.s32.totalorder %s32, 1
    %p170 = por %p168, %p169
    %p171 = scmp.ne.s32.totalorder %s162, %s163
    %p172 = scmp.eq.s32.totalorder %s32, 0
    %p173 = por %p171, %p172
    %p174 = scmp.ne.s32.totalorder %s162, %s163
    %p175 = scmp.eq.s32.totalorder %s33, 1
    %p176 = por %p174, %p175
    %p178 = scmp.ne.s32.totalorder %s163, %s177
    %p179 = scmp.eq.s32.totalorder %s33, 0
    %p180 = por %p178, %p179
    %s182 = sadd.s32 %s181, 1
    %p185 = scmp.eq.s32.totalorder %s27, 1
    %p186 = scmp.ne.s32.totalorder %s181, %s183
    %p187 = scmp.eq.s32.totalorder %s27, 0
    %p188 = por %p186, %p187
    %p189 = scmp.ne.s32.totalorder %s181, %s183
    %p190 = scmp.eq.s32.totalorder %s32, 1
    %p191 = por %p189, %p190
    %p192 = scmp.ne.s32.totalorder %s183, %s184
    %p193 = scmp.eq.s32.totalorder %s32, 0
    %p194 = por %p192, %p193
    %p195 = scmp.ne.s32.totalorder %s183, %s184
    %p196 = scmp.eq.s32.totalorder %s33, 1
    %p197 = por %p195, %p196
    %p199 = scmp.ne.s32.totalorder %s184, %s198
    %p200 = scmp.eq.s32.totalorder %s33, 0
    %p201 = por %p199, %p200
    %s203 = sadd.s32 %s202, 1
    %p206 = scmp.eq.s32.totalorder %s27, 1
    %p207 = scmp.ne.s32.totalorder %s202, %s204
    %p208 = scmp.eq.s32.totalorder %s27, 0
    %p209 = por %p207, %p208
    %p210 = scmp.ne.s32.totalorder %s202, %s204
    %p211 = scmp.eq.s32.totalorder %s32, 1
    %p212 = por %p210, %p211
    %p213 = scmp.ne.s32.totalorder %s204, %s205
    %p214 = scmp.eq.s32.totalorder %s32, 0
    %p215 = por %p213, %p214
    %p216 = scmp.ne.s32.totalorder %s204, %s205
    %p217 = scmp.eq.s32.totalorder %s33, 1
    %p218 = por %p216, %p217
    %p220 = scmp.ne.s32.totalorder %s205, %s219
    %p221 = scmp.eq.s32.totalorder %s33, 0
    %p222 = por %p220, %p221
    %s224 = sadd.s32 %s223, 1
    %p227 = scmp.eq.s32.totalorder %s27, 1
    %p228 = scmp.ne.s32.totalorder %s223, %s225
    %p229 = scmp.eq.s32.totalorder %s27, 0
    %p230 = por %p228, %p229
    %p231 = scmp.ne.s32.totalorder %s223, %s225
    %p232 = scmp.eq.s32.totalorder %s32, 1
    %p233 = por %p231, %p232
    %p234 = scmp.ne.s32.totalorder %s225, %s226
    %p235 = scmp.eq.s32.totalorder %s32, 0
    %p236 = por %p234, %p235
    %p237 = scmp.ne.s32.totalorder %s225, %s226
    %p238 = scmp.eq.s32.totalorder %s33, 1
    %p239 = por %p237, %p238
    %p241 = scmp.ne.s32.totalorder %s226, %s240
    %p242 = scmp.eq.s32.totalorder %s33, 0
    %p243 = por %p241, %p242
    %s245 = sadd.s32 %s244, 1
    %p248 = scmp.eq.s32.totalorder %s27, 1
    %p249 = scmp.ne.s32.totalorder %s244, %s246
    %p250 = scmp.eq.s32.totalorder %s27, 0
    %p251 = por %p249, %p250
    %p252 = scmp.ne.s32.totalorder %s244, %s246
    %p253 = scmp.eq.s32.totalorder %s32, 1
    %p254 = por %p252, %p253
    %p255 = scmp.ne.s32.totalorder %s246, %s247
    %p256 = scmp.eq.s32.totalorder %s32, 0
    %p257 = por %p255, %p256
    %p258 = scmp.ne.s32.totalorder %s246, %s247
    %p259 = scmp.eq.s32.totalorder %s33, 1
    %p260 = por %p258, %p259
    %p262 = scmp.ne.s32.totalorder %s247, %s261
    %p263 = scmp.eq.s32.totalorder %s33, 0
    %p264 = por %p262, %p263
    %s266 = sadd.s32 %s265, 1
    %p269 = scmp.eq.s32.totalorder %s27, 1
    %p270 = scmp.ne.s32.totalorder %s265, %s267
    %p271 = scmp.eq.s32.totalorder %s27, 0
    %p272 = por %p270, %p271
    %p273 = scmp.ne.s32.totalorder %s265, %s267
    %p274 = scmp.eq.s32.totalorder %s32, 1
    %p275 = por %p273, %p274
    %p276 = scmp.ne.s32.totalorder %s267, %s268
    %p277 = scmp.eq.s32.totalorder %s32, 0
    %p278 = por %p276, %p277
    %p279 = scmp.ne.s32.totalorder %s267, %s268
    %p280 = scmp.eq.s32.totalorder %s33, 1
    %p281 = por %p279, %p280
    %p283 = scmp.ne.s32.totalorder %s268, %s282
    %p284 = scmp.eq.s32.totalorder %s33, 0
    %p285 = por %p283, %p284
    %s287 = sadd.s32 %s286, 1
    %p290 = scmp.eq.s32.totalorder %s27, 1
    %p291 = scmp.ne.s32.totalorder %s286, %s288
    %p292 = scmp.eq.s32.totalorder %s27, 0
    %p293 = por %p291, %p292
    %p294 = scmp.ne.s32.totalorder %s286, %s288
    %p295 = scmp.eq.s32.totalorder %s32, 1
    %p296 = por %p294, %p295
    %p297 = scmp.ne.s32.totalorder %s288, %s289
    %p298 = scmp.eq.s32.totalorder %s32, 0
    %p299 = por %p297, %p298
    %p300 = scmp.ne.s32.totalorder %s288, %s289
    %p301 = scmp.eq.s32.totalorder %s33, 1
    %p302 = por %p300, %p301
    %p304 = scmp.ne.s32.totalorder %s289, %s303
    %p305 = scmp.eq.s32.totalorder %s33, 0
    %p306 = por %p304, %p305
    %s308 = sadd.s32 %s307, 1
    %p311 = scmp.eq.s32.totalorder %s27, 1
    %p312 = scmp.ne.s32.totalorder %s307, %s309
    %p313 = scmp.eq.s32.totalorder %s27, 0
    %p314 = por %p312, %p313
    %p315 = scmp.ne.s32.totalorder %s307, %s309
    %p316 = scmp.eq.s32.totalorder %s32, 1
    %p317 = por %p315, %p316
    %p318 = scmp.ne.s32.totalorder %s309, %s310
    %p319 = scmp.eq.s32.totalorder %s32, 0
    %p320 = por %p318, %p319
    %p321 = scmp.ne.s32.totalorder %s309, %s310
    %p322 = scmp.eq.s32.totalorder %s33, 1
    %p323 = por %p321, %p322
    %p325 = scmp.ne.s32.totalorder %s310, %s324
    %p326 = scmp.eq.s32.totalorder %s33, 0
    %p327 = por %p325, %p326
    %s329 = sadd.s32 %s328, 1
    %p332 = scmp.eq.s32.totalorder %s27, 1
    %p333 = scmp.ne.s32.totalorder %s328, %s330
    %p334 = scmp.eq.s32.totalorder %s27, 0
    %p335 = por %p333, %p334
    %p336 = scmp.ne.s32.totalorder %s328, %s330
    %p337 = scmp.eq.s32.totalorder %s32, 1
    %p338 = por %p336, %p337
    %p339 = scmp.ne.s32.totalorder %s330, %s331
    %p340 = scmp.eq.s32.totalorder %s32, 0
    %p341 = por %p339, %p340
    %p342 = scmp.ne.s32.totalorder %s330, %s331
    %p343 = scmp.eq.s32.totalorder %s33, 1
    %p344 = por %p342, %p343
    %p346 = scmp.ne.s32.totalorder %s331, %s345
    %p347 = scmp.eq.s32.totalorder %s33, 0
    %p348 = por %p346, %p347
    %s350 = sadd.s32 %s349, 1
    %p353 = scmp.eq.s32.totalorder %s27, 1
    %p354 = scmp.ne.s32.totalorder %s349, %s351
    %p355 = scmp.eq.s32.totalorder %s27, 0
    %p356 = por %p354, %p355
    %p357 = scmp.ne.s32.totalorder %s349, %s351
    %p358 = scmp.eq.s32.totalorder %s32, 1
    %p359 = por %p357, %p358
    %p360 = scmp.ne.s32.totalorder %s351, %s352
    %p361 = scmp.eq.s32.totalorder %s32, 0
    %p362 = por %p360, %p361
    %p363 = scmp.ne.s32.totalorder %s351, %s352
    %p364 = scmp.eq.s32.totalorder %s33, 1
    %p365 = por %p363, %p364
    %p367 = scmp.ne.s32.totalorder %s352, %s366
    %p368 = scmp.eq.s32.totalorder %s33, 0
    %p369 = por %p367, %p368
    %s371 = sadd.s32 %s370, 1
    %p374 = scmp.eq.s32.totalorder %s27, 1
    %p375 = scmp.ne.s32.totalorder %s370, %s372
    %p376 = scmp.eq.s32.totalorder %s27, 0
    %p377 = por %p375, %p376
    %p378 = scmp.ne.s32.totalorder %s370, %s372
    %p379 = scmp.eq.s32.totalorder %s32, 1
    %p380 = por %p378, %p379
    %p381 = scmp.ne.s32.totalorder %s372, %s373
    %p382 = scmp.eq.s32.totalorder %s32, 0
    %p383 = por %p381, %p382
    %p384 = scmp.ne.s32.totalorder %s372, %s373
    %p385 = scmp.eq.s32.totalorder %s33, 1
    %p386 = por %p384, %p385
    %p388 = scmp.ne.s32.totalorder %s373, %s387
    %p389 = scmp.eq.s32.totalorder %s33, 0
    %p390 = por %p388, %p389
    %s392 = sadd.s32 %s391, 1
    %p395 = scmp.eq.s32.totalorder %s27, 1
    %p396 = scmp.ne.s32.totalorder %s391, %s393
    %p397 = scmp.eq.s32.totalorder %s27, 0
    %p398 = por %p396, %p397
    %p399 = scmp.ne.s32.totalorder %s391, %s393
    %p400 = scmp.eq.s32.totalorder %s32, 1
    %p401 = por %p399, %p400
    %p402 = scmp.ne.s32.totalorder %s393, %s394
    %p403 = scmp.eq.s32.totalorder %s32, 0
    %p404 = por %p402, %p403
    %p405 = scmp.ne.s32.totalorder %s393, %s394
    %p406 = scmp.eq.s32.totalorder %s33, 1
    %p407 = por %p405, %p406
    %p409 = scmp.ne.s32.totalorder %s394, %s408
    %p410 = scmp.eq.s32.totalorder %s33, 0
    %p411 = por %p409, %p410
    %s413 = sadd.s32 %s412, 1
    %p416 = scmp.eq.s32.totalorder %s27, 1
    %p417 = scmp.ne.s32.totalorder %s412, %s414
    %p418 = scmp.eq.s32.totalorder %s27, 0
    %p419 = por %p417, %p418
    %p420 = scmp.ne.s32.totalorder %s412, %s414
    %p421 = scmp.eq.s32.totalorder %s32, 1
    %p422 = por %p420, %p421
    %p423 = scmp.ne.s32.totalorder %s414, %s415
    %p424 = scmp.eq.s32.totalorder %s32, 0
    %p425 = por %p423, %p424
    %p426 = scmp.ne.s32.totalorder %s414, %s415
    %p427 = scmp.eq.s32.totalorder %s33, 1
    %p428 = por %p426, %p427
    %p430 = scmp.ne.s32.totalorder %s415, %s429
    %p431 = scmp.eq.s32.totalorder %s33, 0
    %p432 = por %p430, %p431
    %s434 = sadd.s32 %s433, 1
    %p437 = scmp.eq.s32.totalorder %s27, 1
    %p438 = scmp.ne.s32.totalorder %s433, %s435
    %p439 = scmp.eq.s32.totalorder %s27, 0
    %p440 = por %p438, %p439
    %p441 = scmp.ne.s32.totalorder %s433, %s435
    %p442 = scmp.eq.s32.totalorder %s32, 1
    %p443 = por %p441, %p442
    %p444 = scmp.ne.s32.totalorder %s435, %s436
    %p445 = scmp.eq.s32.totalorder %s32, 0
    %p446 = por %p444, %p445
    %p447 = scmp.ne.s32.totalorder %s435, %s436
    %p448 = scmp.eq.s32.totalorder %s33, 1
    %p449 = por %p447, %p448
    %p451 = scmp.ne.s32.totalorder %s436, %s450
    %p452 = scmp.eq.s32.totalorder %s33, 0
    %p453 = por %p451, %p452
    %s455 = sadd.s32 %s454, 1
    %p458 = scmp.eq.s32.totalorder %s27, 1
    %p459 = scmp.ne.s32.totalorder %s454, %s456
    %p460 = scmp.eq.s32.totalorder %s27, 0
    %p461 = por %p459, %p460
    %p462 = scmp.ne.s32.totalorder %s454, %s456
    %p463 = scmp.eq.s32.totalorder %s32, 1
    %p464 = por %p462, %p463
    %p465 = scmp.ne.s32.totalorder %s456, %s457
    %p466 = scmp.eq.s32.totalorder %s32, 0
    %p467 = por %p465, %p466
    %p468 = scmp.ne.s32.totalorder %s456, %s457
    %p469 = scmp.eq.s32.totalorder %s33, 1
    %p470 = por %p468, %p469
    %p472 = scmp.ne.s32.totalorder %s457, %s471
    %p473 = scmp.eq.s32.totalorder %s33, 0
    %p474 = por %p472, %p473
    %s476 = sadd.s32 %s475, 1
    %p479 = scmp.eq.s32.totalorder %s27, 1
    %p480 = scmp.ne.s32.totalorder %s475, %s477
    %p481 = scmp.eq.s32.totalorder %s27, 0
    %p482 = por %p480, %p481
    %p483 = scmp.ne.s32.totalorder %s475, %s477
    %p484 = scmp.eq.s32.totalorder %s32, 1
    %p485 = por %p483, %p484
    %p486 = scmp.ne.s32.totalorder %s477, %s478
    %p487 = scmp.eq.s32.totalorder %s32, 0
    %p488 = por %p486, %p487
    %p489 = scmp.ne.s32.totalorder %s477, %s478
    %p490 = scmp.eq.s32.totalorder %s33, 1
    %p491 = por %p489, %p490
    %p493 = scmp.ne.s32.totalorder %s478, %s492
    %p494 = scmp.eq.s32.totalorder %s33, 0
    %p495 = por %p493, %p494
    %s496 = ssub.s32 %s27, %s34
    %p497 = scmp.eq.s32.totalorder %s496, 0
    %s499 = sadd.s32 %s498, 1
    %s500 = scalar_select %p497, %s498, %s499
    %p503 = pneg %p497
    %p504 = scmp.eq.s32.totalorder %s27, 1
    %p505 = por %p503, %p504
    %p506 = scmp.ne.s32.totalorder %s498, %s501
    %p507 = scmp.eq.s32.totalorder %s27, 0
    %p508 = por %p506, %p507
    %p509 = scmp.ne.s32.totalorder %s498, %s501
    %p510 = scmp.eq.s32.totalorder %s32, 1
    %p511 = por %p509, %p510
    %p512 = scmp.ne.s32.totalorder %s501, %s502
    %p513 = scmp.eq.s32.totalorder %s32, 0
    %p514 = por %p512, %p513
    %p515 = scmp.ne.s32.totalorder %s501, %s502
    %p516 = scmp.eq.s32.totalorder %s33, 1
    %p517 = por %p515, %p516
    %p519 = scmp.ne.s32.totalorder %s502, %s518
    %p520 = scmp.eq.s32.totalorder %s33, 0
    %p521 = por %p519, %p520
    %p522 = scmp.le.s32.totalorder 1, %s27
    %p523 = scmp.lt.s32.totalorder %s27, 3
    %p524 = pnand %p522, %p523
    %p525 = pneg %p524
    // Predicated region
    $region9: #{animate_flow3d_forward.1} parent=5 // pred_check
      _
    $region10: #{animate_flow3d_forward.1} parent=5 // pred_check_branch
      %527 = sbr.rel (%p524) target = $region12
    $region11: #{animate_flow3d_forward.1} parent=5 // pred_region
      %s528 = ssub.s32 %s27, 1
      // Predicated region
      $region13: #{animate_flow3d_forward.1} parent=11 // pred_check
        %p529 = pneg %p152
      $region14: #{animate_flow3d_forward.1} parent=11 // pred_check_branch
        %531 = sbr.rel (%p529) target = $region16
      $region15: #{animate_flow3d_forward.1} parent=11 // pred_region
        _
      $region16: #{animate_flow3d_forward.1} parent=11 // pred_fallthru
        _
      // Predicated region
      $region17: #{animate_flow3d_forward.1} parent=11 // pred_check
        %p532 = pneg %p173
      $region18: #{animate_flow3d_forward.1} parent=11 // pred_check_branch
        %534 = sbr.rel (%p532) target = $region20
      $region19: #{animate_flow3d_forward.1} parent=11 // pred_region
        _
      $region20: #{animate_flow3d_forward.1} parent=11 // pred_fallthru
        _
      // Predicated region
      $region21: #{animate_flow3d_forward.1} parent=11 // pred_check
        %p535 = pneg %p194
      $region22: #{animate_flow3d_forward.1} parent=11 // pred_check_branch
        %537 = sbr.rel (%p535) target = $region24
      $region23: #{animate_flow3d_forward.1} parent=11 // pred_region
        _
      $region24: #{animate_flow3d_forward.1} parent=11 // pred_fallthru
        _
      // Predicated region
      $region25: #{animate_flow3d_forward.1} parent=11 // pred_check
        %p538 = pneg %p215
      $region26: #{animate_flow3d_forward.1} parent=11 // pred_check_branch
        %540 = sbr.rel (%p538) target = $region28
      $region27: #{animate_flow3d_forward.1} parent=11 // pred_region
        _
      $region28: #{animate_flow3d_forward.1} parent=11 // pred_fallthru
        _
      // Predicated region
      $region29: #{animate_flow3d_forward.1} parent=11 // pred_check
        %p541 = pneg %p236
      $region30: #{animate_flow3d_forward.1} parent=11 // pred_check_branch
        %543 = sbr.rel (%p541) target = $region32
      $region31: #{animate_flow3d_forward.1} parent=11 // pred_region
        _
      $region32: #{animate_flow3d_forward.1} parent=11 // pred_fallthru
        _
      // Predicated region
      $region33: #{animate_flow3d_forward.1} parent=11 // pred_check
        %p544 = pneg %p257
      $region34: #{animate_flow3d_forward.1} parent=11 // pred_check_branch
        %546 = sbr.rel (%p544) target = $region36
      $region35: #{animate_flow3d_forward.1} parent=11 // pred_region
        _
      $region36: #{animate_flow3d_forward.1} parent=11 // pred_fallthru
        _
      // Predicated region
      $region37: #{animate_flow3d_forward.1} parent=11 // pred_check
        %p547 = pneg %p278
      $region38: #{animate_flow3d_forward.1} parent=11 // pred_check_branch
        %549 = sbr.rel (%p547) target = $region40
      $region39: #{animate_flow3d_forward.1} parent=11 // pred_region
        _
      $region40: #{animate_flow3d_forward.1} parent=11 // pred_fallthru
        _
      // Predicated region
      $region41: #{animate_flow3d_forward.1} parent=11 // pred_check
        %p550 = pneg %p299
      $region42: #{animate_flow3d_forward.1} parent=11 // pred_check_branch
        %552 = sbr.rel (%p550) target = $region44
      $region43: #{animate_flow3d_forward.1} parent=11 // pred_region
        _
      $region44: #{animate_flow3d_forward.1} parent=11 // pred_fallthru
        _
      // Predicated region
      $region45: #{animate_flow3d_forward.1} parent=11 // pred_check
        %p553 = pneg %p320
      $region46: #{animate_flow3d_forward.1} parent=11 // pred_check_branch
        %555 = sbr.rel (%p553) target = $region48
      $region47: #{animate_flow3d_forward.1} parent=11 // pred_region
        _
      $region48: #{animate_flow3d_forward.1} parent=11 // pred_fallthru
        _
      // Predicated region
      $region49: #{animate_flow3d_forward.1} parent=11 // pred_check
        %p556 = pneg %p341
      $region50: #{animate_flow3d_forward.1} parent=11 // pred_check_branch
        %558 = sbr.rel (%p556) target = $region52
      $region51: #{animate_flow3d_forward.1} parent=11 // pred_region
        _
      $region52: #{animate_flow3d_forward.1} parent=11 // pred_fallthru
        _
      // Predicated region
      $region53: #{animate_flow3d_forward.1} parent=11 // pred_check
        %p559 = pneg %p362
      $region54: #{animate_flow3d_forward.1} parent=11 // pred_check_branch
        %561 = sbr.rel (%p559) target = $region56
      $region55: #{animate_flow3d_forward.1} parent=11 // pred_region
        _
      $region56: #{animate_flow3d_forward.1} parent=11 // pred_fallthru
        _
      // Predicated region
      $region57: #{animate_flow3d_forward.1} parent=11 // pred_check
        %p562 = pneg %p383
      $region58: #{animate_flow3d_forward.1} parent=11 // pred_check_branch
        %564 = sbr.rel (%p562) target = $region60
      $region59: #{animate_flow3d_forward.1} parent=11 // pred_region
        _
      $region60: #{animate_flow3d_forward.1} parent=11 // pred_fallthru
        _
      // Predicated region
      $region61: #{animate_flow3d_forward.1} parent=11 // pred_check
        %p565 = pneg %p404
      $region62: #{animate_flow3d_forward.1} parent=11 // pred_check_branch
        %567 = sbr.rel (%p565) target = $region64
      $region63: #{animate_flow3d_forward.1} parent=11 // pred_region
        _
      $region64: #{animate_flow3d_forward.1} parent=11 // pred_fallthru
        _
      // Predicated region
      $region65: #{animate_flow3d_forward.1} parent=11 // pred_check
        %p568 = pneg %p425
      $region66: #{animate_flow3d_forward.1} parent=11 // pred_check_branch
        %570 = sbr.rel (%p568) target = $region68
      $region67: #{animate_flow3d_forward.1} parent=11 // pred_region
        _
      $region68: #{animate_flow3d_forward.1} parent=11 // pred_fallthru
        _
      // Predicated region
      $region69: #{animate_flow3d_forward.1} parent=11 // pred_check
        %p571 = pneg %p446
      $region70: #{animate_flow3d_forward.1} parent=11 // pred_check_branch
        %573 = sbr.rel (%p571) target = $region72
      $region71: #{animate_flow3d_forward.1} parent=11 // pred_region
        _
      $region72: #{animate_flow3d_forward.1} parent=11 // pred_fallthru
        _
      // Predicated region
      $region73: #{animate_flow3d_forward.1} parent=11 // pred_check
        %p574 = pneg %p467
      $region74: #{animate_flow3d_forward.1} parent=11 // pred_check_branch
        %576 = sbr.rel (%p574) target = $region76
      $region75: #{animate_flow3d_forward.1} parent=11 // pred_region
        _
      $region76: #{animate_flow3d_forward.1} parent=11 // pred_fallthru
        _
      // Predicated region
      $region77: #{animate_flow3d_forward.1} parent=11 // pred_check
        %p577 = pneg %p488
      $region78: #{animate_flow3d_forward.1} parent=11 // pred_check_branch
        %579 = sbr.rel (%p577) target = $region80
      $region79: #{animate_flow3d_forward.1} parent=11 // pred_region
        _
      $region80: #{animate_flow3d_forward.1} parent=11 // pred_fallthru
        _
    $region12: #{animate_flow3d_forward.1} parent=5 // pred_fallthru
      _
    %p580 = scmp.lt.s32.totalorder %s27, 2
    // Predicated region
    $region81: #{animate_flow3d_forward.1} parent=5 // pred_check
      %p581 = pneg %p580
    $region82: #{animate_flow3d_forward.1} parent=5 // pred_check_branch
      %583 = sbr.rel (%p581) target = $region84
    $region83: #{animate_flow3d_forward.1} parent=5 // pred_region
      // Predicated region
      $region85: #{animate_flow3d_forward.1} parent=83 // pred_check
        %p584 = pneg %p47
      $region86: #{animate_flow3d_forward.1} parent=83 // pred_check_branch
        %586 = sbr.rel (%p584) target = $region88
      $region87: #{animate_flow3d_forward.1} parent=83 // pred_region
        %p587 = scmp.lt.s32.totalorder %s27, 1
        %s588 = scalar_select %p587, %s27, 1
        %s589 = smul.addr %s588, 2
        %s590 = smul.addr %s589, 4
        %s591 = scalar_lea.vmem %s0, %s590
      $region88: #{animate_flow3d_forward.1} parent=83 // pred_fallthru
        _
      // Predicated region
      $region89: #{animate_flow3d_forward.1} parent=83 // pred_check
        %p592 = pneg %p73
      $region90: #{animate_flow3d_forward.1} parent=83 // pred_check_branch
        %594 = sbr.rel (%p592) target = $region92
      $region91: #{animate_flow3d_forward.1} parent=83 // pred_region
        %p595 = scmp.lt.s32.totalorder %s27, 1
        %s596 = scalar_select %p595, %s27, 1
        %s597 = smul.addr %s596, 8
        %s598 = scalar_lea.vmem %s1, %s597
      $region92: #{animate_flow3d_forward.1} parent=83 // pred_fallthru
        _
      // Predicated region
      $region93: #{animate_flow3d_forward.1} parent=83 // pred_check
        %p599 = pneg %p99
      $region94: #{animate_flow3d_forward.1} parent=83 // pred_check_branch
        %601 = sbr.rel (%p599) target = $region96
      $region95: #{animate_flow3d_forward.1} parent=83 // pred_region
        %p602 = scmp.lt.s32.totalorder %s27, 1
        %s603 = scalar_select %p602, %s27, 1
        %s604 = smul.addr %s603, 8
        %s605 = scalar_lea.vmem %s2, %s604
      $region96: #{animate_flow3d_forward.1} parent=83 // pred_fallthru
        _
      // Predicated region
      $region97: #{animate_flow3d_forward.1} parent=83 // pred_check
        %p606 = pneg %p125
      $region98: #{animate_flow3d_forward.1} parent=83 // pred_check_branch
        %608 = sbr.rel (%p606) target = $region100
      $region99: #{animate_flow3d_forward.1} parent=83 // pred_region
        %p609 = scmp.lt.s32.totalorder %s27, 1
        %s610 = scalar_select %p609, %s27, 1
        %s611 = smul.addr %s610, 4
        %s612 = smul.addr %s611, 8
        %s613 = scalar_lea.vmem %s3, %s612
      $region100: #{animate_flow3d_forward.1} parent=83 // pred_fallthru
        _
    $region84: #{animate_flow3d_forward.1} parent=5 // pred_fallthru
      _
    %p614 = scmp.le.s32.totalorder 1, %s27
    %p615 = scmp.lt.s32.totalorder %s27, 3
    %p616 = pnand %p614, %p615
    %p617 = pneg %p616
    // Predicated region
    $region101: #{animate_flow3d_forward.1} parent=5 // pred_check
      _
    $region102: #{animate_flow3d_forward.1} parent=5 // pred_check_branch
      %619 = sbr.rel (%p616) target = $region104
    $region103: #{animate_flow3d_forward.1} parent=5 // pred_region
      %s620 = ssub.s32 %s27, 1
      %p621 = scmp.lt.s32.totalorder %s32, 1
      %s622 = scalar_select %p621, %s32, 1
      %s623 = smul.addr %s622, 2
      %s624 = smul.addr %s623, 4
      %s625 = scalar_lea.vmem %s0, %s624
      %p626 = pneg %p53
      %p627 = pneg %p50
      %p628 = scmp.lt.s32.totalorder %s32, 1
      %s629 = scalar_select %p628, %s32, 1
      %s630 = smul.addr %s629, 8
      %s631 = scalar_lea.vmem %s1, %s630
      %p632 = pneg %p79
      %p633 = pneg %p76
      %p634 = scmp.lt.s32.totalorder %s32, 1
      %s635 = scalar_select %p634, %s32, 1
      %s636 = smul.addr %s635, 8
      %s637 = scalar_lea.vmem %s2, %s636
      %p638 = pneg %p105
      %p639 = pneg %p102
      %p640 = scmp.lt.s32.totalorder %s32, 1
      %s641 = scalar_select %p640, %s32, 1
      %s642 = smul.addr %s641, 4
      %s643 = smul.addr %s642, 8
      %s644 = scalar_lea.vmem %s3, %s643
      %p645 = pneg %p131
      %p646 = pneg %p128
      %p647 = pneg %p152
      %p648 = pneg %p149
      %p649 = pneg %p173
      %p650 = pneg %p170
      %p651 = pneg %p194
      %p652 = pneg %p191
      %p653 = pneg %p215
      %p654 = pneg %p212
      %p655 = pneg %p236
      %p656 = pneg %p233
      %p657 = pneg %p257
      %p658 = pneg %p254
      %p659 = pneg %p278
      %p660 = pneg %p275
      %p661 = pneg %p299
      %p662 = pneg %p296
      %p663 = pneg %p320
      %p664 = pneg %p317
      %p665 = pneg %p341
      %p666 = pneg %p338
      %p667 = pneg %p362
      %p668 = pneg %p359
      %p669 = pneg %p383
      %p670 = pneg %p380
      %p671 = pneg %p404
      %p672 = pneg %p401
      %p673 = pneg %p425
      %p674 = pneg %p422
      %p675 = pneg %p446
      %p676 = pneg %p443
      %p677 = pneg %p467
      %p678 = pneg %p464
      %p679 = pneg %p488
      %p680 = pneg %p485
      %p681 = pneg %p514
      %p682 = pneg %p511
      %p683 = scmp.lt.s32.totalorder %s32, 1
      %s684 = scalar_select %p683, %s32, 1
      %s685 = smul.addr %s684, 2
      %s686 = smul.addr %s685, 4
      %s687 = scalar_lea.vmem %s21, %s686
      %p688 = scmp.lt.s32.totalorder %s32, 1
      %s689 = scalar_select %p688, %s32, 1
      %s690 = smul.addr %s689, 2
      %s691 = smul.addr %s690, 4
      %s692 = scalar_lea.vmem %s0, %s691
      %p693 = scmp.lt.s32.totalorder %s32, 1
      %s694 = scalar_select %p693, %s32, 1
      %s695 = smul.addr %s694, 8
      %s696 = scalar_lea.vmem %s1, %s695
      %p697 = scmp.lt.s32.totalorder %s32, 1
      %s698 = scalar_select %p697, %s32, 1
      %s699 = smul.addr %s698, 8
      %s700 = scalar_lea.vmem %s2, %s699
      %p701 = scmp.lt.s32.totalorder %s32, 1
      %s702 = scalar_select %p701, %s32, 1
      %s703 = smul.addr %s702, 4
      %s704 = smul.addr %s703, 8
      %s705 = scalar_lea.vmem %s3, %s704
      %p706 = scmp.lt.s32.totalorder %s32, 1
      %s707 = scalar_select %p706, %s32, 1
      %s708 = smul.addr %s707, 2
      %s709 = smul.addr %s708, 4
      %s710 = scalar_lea.vmem %s21, %s709
      %v712 = vld [vmem:[%s696] sm:$0x3f]
      %v713 = vld [vmem:[%s4] sm:$0xff]
      %v714 = vld [vmem:[%s4 + $0x8] sm:$0xff]
      %v715 = vld [vmem:[%s4 + $0x10] sm:$0xff]
      %v716 = vld [vmem:[%s4 + $0x18] sm:$0xff]
      %v717 = vld [vmem:[%s4 + $0x20] sm:$0xff]
      %v718 = vld [vmem:[%s4 + $0x28] sm:$0xff]
      %v719 = vld [vmem:[%s4 + $0x30] sm:$0xff]
      %v720 = vld [vmem:[%s4 + $0x38] sm:$0xff]
      %v721 = vld [vmem:[%s4 + $0x40] sm:$0xff]
      %v722 = vld [vmem:[%s4 + $0x48] sm:$0xff]
      %v723 = vld [vmem:[%s4 + $0x50] sm:$0xff]
      %v724 = vld [vmem:[%s4 + $0x58] sm:$0xff]
      %v725 = vld [vmem:[%s4 + $0x60] sm:$0xff]
      %v726 = vld [vmem:[%s4 + $0x68] sm:$0xff]
      %v727 = vld [vmem:[%s4 + $0x70] sm:$0xff]
      %v728 = vld [vmem:[%s4 + $0x78] sm:$0xff]
      %v729 = vld [vmem:[%s5] sm:$0xff]
      %v730 = vld [vmem:[%s5 + $0x8] sm:$0xff]
      %v731 = vld [vmem:[%s5 + $0x10] sm:$0xff]
      %v732 = vld [vmem:[%s5 + $0x18] sm:$0xff]
      %v733 = vld [vmem:[%s5 + $0x20] sm:$0xff]
      %v734 = vld [vmem:[%s5 + $0x28] sm:$0xff]
      %v735 = vld [vmem:[%s5 + $0x30] sm:$0xff]
      %v736 = vld [vmem:[%s5 + $0x38] sm:$0xff]
      %v737 = vld [vmem:[%s5 + $0x40] sm:$0xff]
      %v738 = vld [vmem:[%s5 + $0x48] sm:$0xff]
      %v739 = vld [vmem:[%s5 + $0x50] sm:$0xff]
      %v740 = vld [vmem:[%s5 + $0x58] sm:$0xff]
      %v741 = vld [vmem:[%s5 + $0x60] sm:$0xff]
      %v742 = vld [vmem:[%s5 + $0x68] sm:$0xff]
      %v743 = vld [vmem:[%s5 + $0x70] sm:$0xff]
      %v744 = vld [vmem:[%s5 + $0x78] sm:$0xff]
      %746 = vset.pattern.permute.xlu0 0
      %747 = vperm.xlu0 %746, %v729
      %v748 = vpop.permute.xlu0 %747
      %751 = vset.pattern.permute.xlu0 0
      %752 = vperm.xlu0 %751, %v730
      %v753 = vpop.permute.xlu0 %752
      %756 = vset.pattern.permute.xlu0 0
      %757 = vperm.xlu0 %756, %v731
      %v758 = vpop.permute.xlu0 %757
      %761 = vset.pattern.permute.xlu0 0
      %762 = vperm.xlu0 %761, %v732
      %v763 = vpop.permute.xlu0 %762
      %766 = vset.pattern.permute.xlu0 0
      %767 = vperm.xlu0 %766, %v733
      %v768 = vpop.permute.xlu0 %767
      %771 = vset.pattern.permute.xlu0 0
      %772 = vperm.xlu0 %771, %v734
      %v773 = vpop.permute.xlu0 %772
      %776 = vset.pattern.permute.xlu0 0
      %777 = vperm.xlu0 %776, %v735
      %v778 = vpop.permute.xlu0 %777
      %781 = vset.pattern.permute.xlu0 0
      %782 = vperm.xlu0 %781, %v736
      %v783 = vpop.permute.xlu0 %782
      %786 = vset.pattern.permute.xlu0 0
      %787 = vperm.xlu0 %786, %v737
      %v788 = vpop.permute.xlu0 %787
      %791 = vset.pattern.permute.xlu0 0
      %792 = vperm.xlu0 %791, %v738
      %v793 = vpop.permute.xlu0 %792
      %796 = vset.pattern.permute.xlu0 0
      %797 = vperm.xlu0 %796, %v739
      %v798 = vpop.permute.xlu0 %797
      %801 = vset.pattern.permute.xlu0 0
      %802 = vperm.xlu0 %801, %v740
      %v803 = vpop.permute.xlu0 %802
      %806 = vset.pattern.permute.xlu0 0
      %807 = vperm.xlu0 %806, %v741
      %v808 = vpop.permute.xlu0 %807
      %811 = vset.pattern.permute.xlu0 0
      %812 = vperm.xlu0 %811, %v742
      %v813 = vpop.permute.xlu0 %812
      %816 = vset.pattern.permute.xlu0 0
      %817 = vperm.xlu0 %816, %v743
      %v818 = vpop.permute.xlu0 %817
      %821 = vset.pattern.permute.xlu0 0
      %822 = vperm.xlu0 %821, %v744
      %v823 = vpop.permute.xlu0 %822
      %vm825 = vcmask 48128
      %v827 = vsel %vm825, %v713, 0
      %v830 = vsel %vm825, %v714, 0
      %v833 = vsel %vm825, %v715, 0
      %v836 = vsel %vm825, %v716, 0
      %v839 = vsel %vm825, %v717, 0
      %v842 = vsel %vm825, %v718, 0
      %v845 = vsel %vm825, %v719, 0
      %v848 = vsel %vm825, %v720, 0
      %v851 = vsel %vm825, %v721, 0
      %v854 = vsel %vm825, %v722, 0
      %v857 = vsel %vm825, %v723, 0
      %v860 = vsel %vm825, %v724, 0
      %v863 = vsel %vm825, %v725, 0
      %v866 = vsel %vm825, %v726, 0
      %v869 = vsel %vm825, %v727, 0
      %v872 = vsel %vm825, %v728, 0
      %vm874 = vcmask 1045504
      %v876 = vsel %vm874, %v712, 0
      %878 = vmatpush.msra.mxu0 0.0
      %879 = vmatpush.msra.mxu0 0.0
      %880 = vmatpush.msra.mxu0 0.0
      %881 = vmatpush.msra.mxu0 0.0
      %882 = vmatpush.msra.mxu0 0.0
      %883 = vmatpush.msra.mxu0 0.0
      %884 = vmatpush.msra.mxu0 0.0
      %885 = vmatpush.msra.mxu0 0.0
      %886 = vmatpush.msra.mxu0 0.0
      %887 = vmatpush.msra.mxu0 0.0
      %888 = vmatpush.msra.mxu0 0.0
      %889 = vmatpush.msra.mxu0 0.0
      %890 = vmatpush.msra.mxu0 0.0
      %891 = vmatpush.msra.mxu0 0.0
      %892 = vmatpush.msra.mxu0 0.0
      %893 = vmatpush.msra.mxu0 %v876
      %894 = vmatmul.f32.gmra.mxu0 %v827
      %v895 = vpop.f32.mrf.mxu0
      %v896 = vadd.f32 %v748, %v895
      %897 = vmatmul.f32.gmra.mxu0 %v830
      %v898 = vpop.f32.mrf.mxu0
      %v899 = vadd.f32 %v753, %v898
      %900 = vmatmul.f32.gmra.mxu0 %v833
      %v901 = vpop.f32.mrf.mxu0
      %v902 = vadd.f32 %v758, %v901
      %903 = vmatmul.f32.gmra.mxu0 %v836
      %v904 = vpop.f32.mrf.mxu0
      %v905 = vadd.f32 %v763, %v904
      %906 = vmatmul.f32.gmra.mxu0 %v839
      %v907 = vpop.f32.mrf.mxu0
      %v908 = vadd.f32 %v768, %v907
      %909 = vmatmul.f32.gmra.mxu0 %v842
      %v910 = vpop.f32.mrf.mxu0
      %v911 = vadd.f32 %v773, %v910
      %912 = vmatmul.f32.gmra.mxu0 %v845
      %v913 = vpop.f32.mrf.mxu0
      %v914 = vadd.f32 %v778, %v913
      %915 = vmatmul.f32.gmra.mxu0 %v848
      %v916 = vpop.f32.mrf.mxu0
      %v917 = vadd.f32 %v783, %v916
      %918 = vmatmul.f32.gmra.mxu0 %v851
      %v919 = vpop.f32.mrf.mxu0
      %v920 = vadd.f32 %v788, %v919
      %921 = vmatmul.f32.gmra.mxu0 %v854
      %v922 = vpop.f32.mrf.mxu0
      %v923 = vadd.f32 %v793, %v922
      %924 = vmatmul.f32.gmra.mxu0 %v857
      %v925 = vpop.f32.mrf.mxu0
      %v926 = vadd.f32 %v798, %v925
      %927 = vmatmul.f32.gmra.mxu0 %v860
      %v928 = vpop.f32.mrf.mxu0
      %v929 = vadd.f32 %v803, %v928
      %930 = vmatmul.f32.gmra.mxu0 %v863
      %v931 = vpop.f32.mrf.mxu0
      %v932 = vadd.f32 %v808, %v931
      %933 = vmatmul.f32.gmra.mxu0 %v866
      %v934 = vpop.f32.mrf.mxu0
      %v935 = vadd.f32 %v813, %v934
      %936 = vmatmul.f32.gmra.mxu0 %v869
      %v937 = vpop.f32.mrf.mxu0
      %v938 = vadd.f32 %v818, %v937
      %939 = vmatmul.f32.gmra.mxu0 %v872
      %v940 = vpop.f32.mrf.mxu0
      %v941 = vadd.f32 %v823, %v940
      %942 = vdwg.mxu0
      %v943 = vmax.f32 %v896, 0.0
      %v944 = vmax.f32 %v899, 0.0
      %v945 = vmax.f32 %v902, 0.0
      %v946 = vmax.f32 %v905, 0.0
      %v947 = vmax.f32 %v908, 0.0
      %v948 = vmax.f32 %v911, 0.0
      %v949 = vmax.f32 %v914, 0.0
      %v950 = vmax.f32 %v917, 0.0
      %v951 = vmax.f32 %v920, 0.0
      %v952 = vmax.f32 %v923, 0.0
      %v953 = vmax.f32 %v926, 0.0
      %v954 = vmax.f32 %v929, 0.0
      %v955 = vmax.f32 %v932, 0.0
      %v956 = vmax.f32 %v935, 0.0
      %v957 = vmax.f32 %v938, 0.0
      %v958 = vmax.f32 %v941, 0.0
      %v959 = vld [vmem:[%s6] sm:$0xff]
      %v960 = vld [vmem:[%s6 + $0x8] sm:$0xff]
      %v961 = vld [vmem:[%s6 + $0x10] sm:$0xff]
      %v962 = vld [vmem:[%s6 + $0x18] sm:$0xff]
      %v963 = vld [vmem:[%s7] sm:$0xff]
      %v964 = vld [vmem:[%s7 + $0x8] sm:$0xff]
      %v965 = vld [vmem:[%s7 + $0x10] sm:$0xff]
      %v966 = vld [vmem:[%s7 + $0x18] sm:$0xff]
      %968 = vset.pattern.permute.xlu0 0
      %969 = vperm.xlu0 %968, %v963
      %v970 = vpop.permute.xlu0 %969
      %973 = vset.pattern.permute.xlu0 0
      %974 = vperm.xlu0 %973, %v964
      %v975 = vpop.permute.xlu0 %974
      %978 = vset.pattern.permute.xlu0 0
      %979 = vperm.xlu0 %978, %v965
      %v980 = vpop.permute.xlu0 %979
      %983 = vset.pattern.permute.xlu0 0
      %984 = vperm.xlu0 %983, %v966
      %v985 = vpop.permute.xlu0 %984
      %987 = vmatpush.msra.mxu0 %v958
      %988 = vmatpush.msra.mxu0 %v957
      %989 = vmatpush.msra.mxu0 %v956
      %990 = vmatpush.msra.mxu0 %v955
      %991 = vmatpush.msra.mxu0 %v954
      %992 = vmatpush.msra.mxu0 %v953
      %993 = vmatpush.msra.mxu0 %v952
      %994 = vmatpush.msra.mxu0 %v951
      %995 = vmatpush.msra.mxu0 %v950
      %996 = vmatpush.msra.mxu0 %v949
      %997 = vmatpush.msra.mxu0 %v948
      %998 = vmatpush.msra.mxu0 %v947
      %999 = vmatpush.msra.mxu0 %v946
      %1000 = vmatpush.msra.mxu0 %v945
      %1001 = vmatpush.msra.mxu0 %v944
      %1002 = vmatpush.msra.mxu0 %v943
      %1003 = vmatmul.f32.gmra.mxu0 %v959
      %v1004 = vpop.f32.mrf.mxu0
      %v1005 = vadd.f32 %v970, %v1004
      %1006 = vmatmul.f32.gmra.mxu0 %v960
      %v1007 = vpop.f32.mrf.mxu0
      %v1008 = vadd.f32 %v975, %v1007
      %1009 = vmatmul.f32.gmra.mxu0 %v961
      %v1010 = vpop.f32.mrf.mxu0
      %v1011 = vadd.f32 %v980, %v1010
      %1012 = vmatmul.f32.gmra.mxu0 %v962
      %v1013 = vpop.f32.mrf.mxu0
      %v1014 = vadd.f32 %v985, %v1013
      %1015 = vdwg.mxu0
      %v1016 = vmax.f32 %v1005, 0.0
      %v1017 = vmax.f32 %v1008, 0.0
      %v1018 = vmax.f32 %v1011, 0.0
      %v1019 = vmax.f32 %v1014, 0.0
      %vm1020 = vcmask 523264
      %v1021 = vsel %vm1020, %v1016, -inf
      %1022 = vmax.xlane.f32.xlu0 %v1021
      %v1023 = vpop.xlane.xlu0 %1022
      %v1024 = vsel %vm1020, %v1017, -inf
      %1025 = vmax.xlane.f32.xlu0 %v1024
      %v1026 = vpop.xlane.xlu0 %1025
      %v1027 = vsel %vm1020, %v1018, -inf
      %1028 = vmax.xlane.f32.xlu0 %v1027
      %v1029 = vpop.xlane.xlu0 %1028
      %v1030 = vsel %vm1020, %v1019, -inf
      %1031 = vmax.xlane.f32.xlu0 %v1030
      %v1032 = vpop.xlane.xlu0 %1031
      %v1033 = vmul.f32 %v1023, %v1023
      %v1034 = vmul.f32 %v1026, %v1026
      %v1035 = vmul.f32 %v1029, %v1029
      %v1036 = vmul.f32 %v1032, %v1032
      %v1037 = vadd.f32 %v1033, %v1034
      %v1038 = vadd.f32 %v1037, %v1035
      %v1039 = vadd.f32 %v1038, %v1036
      %v1040 = vrot.slane %v1039, 4
      %v1041 = vadd.f32 %v1039, %v1040
      %v1042 = vrot.slane %v1041, 2
      %v1043 = vadd.f32 %v1041, %v1042
      %v1044 = vrot.slane %v1043, 1
      %v1045 = vadd.f32 %v1043, %v1044
      %v1046 = vrsqrt.pop %v1045
      %v1047 = vmul.f32 %v1046, %v1045
      %v1048 = vmul.f32 %v1047, %v1046
      %v1049 = vmul.f32 0.5, %v1048
      %v1050 = vsub.f32 1.5, %v1049
      %v1051 = vmul.f32 %v1046, %v1050
      %vm1052 = vweird.f32 %v1045
      %vm1053 = vweird.f32 %v1046
      %vm1054 = vmor %vm1052, %vm1053
      %v1055 = vsel %vm1054, %v1046, %v1051
      %v1056 = vmul.f32 %v1023, %v1055
      %v1057 = vmul.f32 %v1026, %v1055
      %v1058 = vmul.f32 %v1029, %v1055
      %v1059 = vmul.f32 %v1032, %v1055
      %v1060 = vld [vmem:[%s700] sm:$0x3f]
      %v1061 = vld [vmem:[%s8] sm:$0xff]
      %v1062 = vld [vmem:[%s8 + $0x8] sm:$0xff]
      %v1063 = vld [vmem:[%s8 + $0x10] sm:$0xff]
      %v1064 = vld [vmem:[%s8 + $0x18] sm:$0xff]
      %v1065 = vld [vmem:[%s8 + $0x20] sm:$0xff]
      %v1066 = vld [vmem:[%s8 + $0x28] sm:$0xff]
      %v1067 = vld [vmem:[%s8 + $0x30] sm:$0xff]
      %v1068 = vld [vmem:[%s8 + $0x38] sm:$0xff]
      %v1069 = vld [vmem:[%s8 + $0x40] sm:$0xff]
      %v1070 = vld [vmem:[%s8 + $0x48] sm:$0xff]
      %v1071 = vld [vmem:[%s8 + $0x50] sm:$0xff]
      %v1072 = vld [vmem:[%s8 + $0x58] sm:$0xff]
      %v1073 = vld [vmem:[%s8 + $0x60] sm:$0xff]
      %v1074 = vld [vmem:[%s8 + $0x68] sm:$0xff]
      %v1075 = vld [vmem:[%s8 + $0x70] sm:$0xff]
      %v1076 = vld [vmem:[%s8 + $0x78] sm:$0xff]
      %v1077 = vld [vmem:[%s9] sm:$0xff]
      %v1078 = vld [vmem:[%s9 + $0x8] sm:$0xff]
      %v1079 = vld [vmem:[%s9 + $0x10] sm:$0xff]
      %v1080 = vld [vmem:[%s9 + $0x18] sm:$0xff]
      %v1081 = vld [vmem:[%s9 + $0x20] sm:$0xff]
      %v1082 = vld [vmem:[%s9 + $0x28] sm:$0xff]
      %v1083 = vld [vmem:[%s9 + $0x30] sm:$0xff]
      %v1084 = vld [vmem:[%s9 + $0x38] sm:$0xff]
      %v1085 = vld [vmem:[%s9 + $0x40] sm:$0xff]
      %v1086 = vld [vmem:[%s9 + $0x48] sm:$0xff]
      %v1087 = vld [vmem:[%s9 + $0x50] sm:$0xff]
      %v1088 = vld [vmem:[%s9 + $0x58] sm:$0xff]
      %v1089 = vld [vmem:[%s9 + $0x60] sm:$0xff]
      %v1090 = vld [vmem:[%s9 + $0x68] sm:$0xff]
      %v1091 = vld [vmem:[%s9 + $0x70] sm:$0xff]
      %v1092 = vld [vmem:[%s9 + $0x78] sm:$0xff]
      %1094 = vset.pattern.permute.xlu0 0
      %1095 = vperm.xlu0 %1094, %v1077
      %v1096 = vpop.permute.xlu0 %1095
      %1099 = vset.pattern.permute.xlu0 0
      %1100 = vperm.xlu0 %1099, %v1078
      %v1101 = vpop.permute.xlu0 %1100
      %1104 = vset.pattern.permute.xlu0 0
      %1105 = vperm.xlu0 %1104, %v1079
      %v1106 = vpop.permute.xlu0 %1105
      %1109 = vset.pattern.permute.xlu0 0
      %1110 = vperm.xlu0 %1109, %v1080
      %v1111 = vpop.permute.xlu0 %1110
      %1114 = vset.pattern.permute.xlu0 0
      %1115 = vperm.xlu0 %1114, %v1081
      %v1116 = vpop.permute.xlu0 %1115
      %1119 = vset.pattern.permute.xlu0 0
      %1120 = vperm.xlu0 %1119, %v1082
      %v1121 = vpop.permute.xlu0 %1120
      %1124 = vset.pattern.permute.xlu0 0
      %1125 = vperm.xlu0 %1124, %v1083
      %v1126 = vpop.permute.xlu0 %1125
      %1129 = vset.pattern.permute.xlu0 0
      %1130 = vperm.xlu0 %1129, %v1084
      %v1131 = vpop.permute.xlu0 %1130
      %1134 = vset.pattern.permute.xlu0 0
      %1135 = vperm.xlu0 %1134, %v1085
      %v1136 = vpop.permute.xlu0 %1135
      %1139 = vset.pattern.permute.xlu0 0
      %1140 = vperm.xlu0 %1139, %v1086
      %v1141 = vpop.permute.xlu0 %1140
      %1144 = vset.pattern.permute.xlu0 0
      %1145 = vperm.xlu0 %1144, %v1087
      %v1146 = vpop.permute.xlu0 %1145
      %1149 = vset.pattern.permute.xlu0 0
      %1150 = vperm.xlu0 %1149, %v1088
      %v1151 = vpop.permute.xlu0 %1150
      %1154 = vset.pattern.permute.xlu0 0
      %1155 = vperm.xlu0 %1154, %v1089
      %v1156 = vpop.permute.xlu0 %1155
      %1159 = vset.pattern.permute.xlu0 0
      %1160 = vperm.xlu0 %1159, %v1090
      %v1161 = vpop.permute.xlu0 %1160
      %1164 = vset.pattern.permute.xlu0 0
      %1165 = vperm.xlu0 %1164, %v1091
      %v1166 = vpop.permute.xlu0 %1165
      %1169 = vset.pattern.permute.xlu0 0
      %1170 = vperm.xlu0 %1169, %v1092
      %v1171 = vpop.permute.xlu0 %1170
      %v1174 = vsel %vm825, %v1061, 0
      %v1177 = vsel %vm825, %v1062, 0
      %v1180 = vsel %vm825, %v1063, 0
      %v1183 = vsel %vm825, %v1064, 0
      %v1186 = vsel %vm825, %v1065, 0
      %v1189 = vsel %vm825, %v1066, 0
      %v1192 = vsel %vm825, %v1067, 0
      %v1195 = vsel %vm825, %v1068, 0
      %v1198 = vsel %vm825, %v1069, 0
      %v1201 = vsel %vm825, %v1070, 0
      %v1204 = vsel %vm825, %v1071, 0
      %v1207 = vsel %vm825, %v1072, 0
      %v1210 = vsel %vm825, %v1073, 0
      %v1213 = vsel %vm825, %v1074, 0
      %v1216 = vsel %vm825, %v1075, 0
      %v1219 = vsel %vm825, %v1076, 0
      %v1222 = vsel %vm874, %v1060, 0
      %1224 = vmatpush.msra.mxu0 0.0
      %1225 = vmatpush.msra.mxu0 0.0
      %1226 = vmatpush.msra.mxu0 0.0
      %1227 = vmatpush.msra.mxu0 0.0
      %1228 = vmatpush.msra.mxu0 0.0
      %1229 = vmatpush.msra.mxu0 0.0
      %1230 = vmatpush.msra.mxu0 0.0
      %1231 = vmatpush.msra.mxu0 0.0
      %1232 = vmatpush.msra.mxu0 0.0
      %1233 = vmatpush.msra.mxu0 0.0
      %1234 = vmatpush.msra.mxu0 0.0
      %1235 = vmatpush.msra.mxu0 0.0
      %1236 = vmatpush.msra.mxu0 0.0
      %1237 = vmatpush.msra.mxu0 0.0
      %1238 = vmatpush.msra.mxu0 0.0
      %1239 = vmatpush.msra.mxu0 %v1222
      %1240 = vmatmul.f32.gmra.mxu0 %v1174
      %v1241 = vpop.f32.mrf.mxu0
      %v1242 = vadd.f32 %v1096, %v1241
      %1243 = vmatmul.f32.gmra.mxu0 %v1177
      %v1244 = vpop.f32.mrf.mxu0
      %v1245 = vadd.f32 %v1101, %v1244
      %1246 = vmatmul.f32.gmra.mxu0 %v1180
      %v1247 = vpop.f32.mrf.mxu0
      %v1248 = vadd.f32 %v1106, %v1247
      %1249 = vmatmul.f32.gmra.mxu0 %v1183
      %v1250 = vpop.f32.mrf.mxu0
      %v1251 = vadd.f32 %v1111, %v1250
      %1252 = vmatmul.f32.gmra.mxu0 %v1186
      %v1253 = vpop.f32.mrf.mxu0
      %v1254 = vadd.f32 %v1116, %v1253
      %1255 = vmatmul.f32.gmra.mxu0 %v1189
      %v1256 = vpop.f32.mrf.mxu0
      %v1257 = vadd.f32 %v1121, %v1256
      %1258 = vmatmul.f32.gmra.mxu0 %v1192
      %v1259 = vpop.f32.mrf.mxu0
      %v1260 = vadd.f32 %v1126, %v1259
      %1261 = vmatmul.f32.gmra.mxu0 %v1195
      %v1262 = vpop.f32.mrf.mxu0
      %v1263 = vadd.f32 %v1131, %v1262
      %1264 = vmatmul.f32.gmra.mxu0 %v1198
      %v1265 = vpop.f32.mrf.mxu0
      %v1266 = vadd.f32 %v1136, %v1265
      %1267 = vmatmul.f32.gmra.mxu0 %v1201
      %v1268 = vpop.f32.mrf.mxu0
      %v1269 = vadd.f32 %v1141, %v1268
      %1270 = vmatmul.f32.gmra.mxu0 %v1204
      %v1271 = vpop.f32.mrf.mxu0
      %v1272 = vadd.f32 %v1146, %v1271
      %1273 = vmatmul.f32.gmra.mxu0 %v1207
      %v1274 = vpop.f32.mrf.mxu0
      %v1275 = vadd.f32 %v1151, %v1274
      %1276 = vmatmul.f32.gmra.mxu0 %v1210
      %v1277 = vpop.f32.mrf.mxu0
      %v1278 = vadd.f32 %v1156, %v1277
      %1279 = vmatmul.f32.gmra.mxu0 %v1213
      %v1280 = vpop.f32.mrf.mxu0
      %v1281 = vadd.f32 %v1161, %v1280
      %1282 = vmatmul.f32.gmra.mxu0 %v1216
      %v1283 = vpop.f32.mrf.mxu0
      %v1284 = vadd.f32 %v1166, %v1283
      %1285 = vmatmul.f32.gmra.mxu0 %v1219
      %v1286 = vpop.f32.mrf.mxu0
      %v1287 = vadd.f32 %v1171, %v1286
      %1288 = vdwg.mxu0
      %v1289 = vmax.f32 %v1242, 0.0
      %v1290 = vmax.f32 %v1245, 0.0
      %v1291 = vmax.f32 %v1248, 0.0
      %v1292 = vmax.f32 %v1251, 0.0
      %v1293 = vmax.f32 %v1254, 0.0
      %v1294 = vmax.f32 %v1257, 0.0
      %v1295 = vmax.f32 %v1260, 0.0
      %v1296 = vmax.f32 %v1263, 0.0
      %v1297 = vmax.f32 %v1266, 0.0
      %v1298 = vmax.f32 %v1269, 0.0
      %v1299 = vmax.f32 %v1272, 0.0
      %v1300 = vmax.f32 %v1275, 0.0
      %v1301 = vmax.f32 %v1278, 0.0
      %v1302 = vmax.f32 %v1281, 0.0
      %v1303 = vmax.f32 %v1284, 0.0
      %v1304 = vmax.f32 %v1287, 0.0
      %v1305 = vld [vmem:[%s10] sm:$0xff]
      %v1306 = vld [vmem:[%s10 + $0x8] sm:$0xff]
      %v1307 = vld [vmem:[%s10 + $0x10] sm:$0xff]
      %v1308 = vld [vmem:[%s10 + $0x18] sm:$0xff]
      %v1309 = vld [vmem:[%s11] sm:$0xff]
      %v1310 = vld [vmem:[%s11 + $0x8] sm:$0xff]
      %v1311 = vld [vmem:[%s11 + $0x10] sm:$0xff]
      %v1312 = vld [vmem:[%s11 + $0x18] sm:$0xff]
      %1314 = vset.pattern.permute.xlu0 0
      %1315 = vperm.xlu0 %1314, %v1309
      %v1316 = vpop.permute.xlu0 %1315
      %1319 = vset.pattern.permute.xlu0 0
      %1320 = vperm.xlu0 %1319, %v1310
      %v1321 = vpop.permute.xlu0 %1320
      %1324 = vset.pattern.permute.xlu0 0
      %1325 = vperm.xlu0 %1324, %v1311
      %v1326 = vpop.permute.xlu0 %1325
      %1329 = vset.pattern.permute.xlu0 0
      %1330 = vperm.xlu0 %1329, %v1312
      %v1331 = vpop.permute.xlu0 %1330
      %1333 = vmatpush.msra.mxu0 %v1304
      %1334 = vmatpush.msra.mxu0 %v1303
      %1335 = vmatpush.msra.mxu0 %v1302
      %1336 = vmatpush.msra.mxu0 %v1301
      %1337 = vmatpush.msra.mxu0 %v1300
      %1338 = vmatpush.msra.mxu0 %v1299
      %1339 = vmatpush.msra.mxu0 %v1298
      %1340 = vmatpush.msra.mxu0 %v1297
      %1341 = vmatpush.msra.mxu0 %v1296
      %1342 = vmatpush.msra.mxu0 %v1295
      %1343 = vmatpush.msra.mxu0 %v1294
      %1344 = vmatpush.msra.mxu0 %v1293
      %1345 = vmatpush.msra.mxu0 %v1292
      %1346 = vmatpush.msra.mxu0 %v1291
      %1347 = vmatpush.msra.mxu0 %v1290
      %1348 = vmatpush.msra.mxu0 %v1289
      %1349 = vmatmul.f32.gmra.mxu0 %v1305
      %v1350 = vpop.f32.mrf.mxu0
      %v1351 = vadd.f32 %v1316, %v1350
      %1352 = vmatmul.f32.gmra.mxu0 %v1306
      %v1353 = vpop.f32.mrf.mxu0
      %v1354 = vadd.f32 %v1321, %v1353
      %1355 = vmatmul.f32.gmra.mxu0 %v1307
      %v1356 = vpop.f32.mrf.mxu0
      %v1357 = vadd.f32 %v1326, %v1356
      %1358 = vmatmul.f32.gmra.mxu0 %v1308
      %v1359 = vpop.f32.mrf.mxu0
      %v1360 = vadd.f32 %v1331, %v1359
      %1361 = vdwg.mxu0
      %v1362 = vmax.f32 %v1351, 0.0
      %v1363 = vmax.f32 %v1354, 0.0
      %v1364 = vmax.f32 %v1357, 0.0
      %v1365 = vmax.f32 %v1360, 0.0
      %vm1366 = vcmask 261120
      %v1367 = vsel %vm1366, %v1362, -inf
      %1368 = vmax.xlane.f32.xlu0 %v1367
      %v1369 = vpop.xlane.xlu0 %1368
      %v1370 = vsel %vm1366, %v1363, -inf
      %1371 = vmax.xlane.f32.xlu0 %v1370
      %v1372 = vpop.xlane.xlu0 %1371
      %v1373 = vsel %vm1366, %v1364, -inf
      %1374 = vmax.xlane.f32.xlu0 %v1373
      %v1375 = vpop.xlane.xlu0 %1374
      %v1376 = vsel %vm1366, %v1365, -inf
      %1377 = vmax.xlane.f32.xlu0 %v1376
      %v1378 = vpop.xlane.xlu0 %1377
      %v1379 = vld [vmem:[%s705] sm:$0xff]
      %v1380 = vld [vmem:[%s705 + $0x8] sm:$0xff]
      %v1381 = vld [vmem:[%s705 + $0x10] sm:$0xff]
      %v1382 = vld [vmem:[%s705 + $0x18] sm:$0xff]
      %v1383 = vld [vmem:[%s12] sm:$0xff]
      %v1384 = vld [vmem:[%s12 + $0x8] sm:$0xff]
      %v1385 = vld [vmem:[%s12 + $0x10] sm:$0xff]
      %v1386 = vld [vmem:[%s12 + $0x18] sm:$0xff]
      %v1387 = vld [vmem:[%s12 + $0x20] sm:$0xff]
      %v1388 = vld [vmem:[%s12 + $0x28] sm:$0xff]
      %v1389 = vld [vmem:[%s12 + $0x30] sm:$0xff]
      %v1390 = vld [vmem:[%s12 + $0x38] sm:$0xff]
      %v1391 = vld [vmem:[%s12 + $0x40] sm:$0xff]
      %v1392 = vld [vmem:[%s12 + $0x48] sm:$0xff]
      %v1393 = vld [vmem:[%s12 + $0x50] sm:$0xff]
      %v1394 = vld [vmem:[%s12 + $0x58] sm:$0xff]
      %v1395 = vld [vmem:[%s12 + $0x60] sm:$0xff]
      %v1396 = vld [vmem:[%s12 + $0x68] sm:$0xff]
      %v1397 = vld [vmem:[%s12 + $0x70] sm:$0xff]
      %v1398 = vld [vmem:[%s12 + $0x78] sm:$0xff]
      %v1399 = vld [vmem:[%s13] sm:$0xff]
      %v1400 = vld [vmem:[%s13 + $0x8] sm:$0xff]
      %v1401 = vld [vmem:[%s13 + $0x10] sm:$0xff]
      %v1402 = vld [vmem:[%s13 + $0x18] sm:$0xff]
      %v1403 = vld [vmem:[%s13 + $0x20] sm:$0xff]
      %v1404 = vld [vmem:[%s13 + $0x28] sm:$0xff]
      %v1405 = vld [vmem:[%s13 + $0x30] sm:$0xff]
      %v1406 = vld [vmem:[%s13 + $0x38] sm:$0xff]
      %v1407 = vld [vmem:[%s13 + $0x40] sm:$0xff]
      %v1408 = vld [vmem:[%s13 + $0x48] sm:$0xff]
      %v1409 = vld [vmem:[%s13 + $0x50] sm:$0xff]
      %v1410 = vld [vmem:[%s13 + $0x58] sm:$0xff]
      %v1411 = vld [vmem:[%s13 + $0x60] sm:$0xff]
      %v1412 = vld [vmem:[%s13 + $0x68] sm:$0xff]
      %v1413 = vld [vmem:[%s13 + $0x70] sm:$0xff]
      %v1414 = vld [vmem:[%s13 + $0x78] sm:$0xff]
      %v1416 = vsel %vm1366, %v1383, 0
      %v1419 = vsel %vm1366, %v1384, 0
      %v1422 = vsel %vm1366, %v1385, 0
      %v1425 = vsel %vm1366, %v1386, 0
      %v1428 = vsel %vm1366, %v1387, 0
      %v1431 = vsel %vm1366, %v1388, 0
      %v1434 = vsel %vm1366, %v1389, 0
      %v1437 = vsel %vm1366, %v1390, 0
      %v1440 = vsel %vm1366, %v1391, 0
      %v1443 = vsel %vm1366, %v1392, 0
      %v1446 = vsel %vm1366, %v1393, 0
      %v1449 = vsel %vm1366, %v1394, 0
      %v1452 = vsel %vm1366, %v1395, 0
      %v1455 = vsel %vm1366, %v1396, 0
      %v1458 = vsel %vm1366, %v1397, 0
      %v1461 = vsel %vm1366, %v1398, 0
      %1463 = vmatpush.msra.mxu0 0.0
      %1464 = vmatpush.msra.mxu0 0.0
      %1465 = vmatpush.msra.mxu0 0.0
      %1466 = vmatpush.msra.mxu0 0.0
      %1467 = vmatpush.msra.mxu0 0.0
      %1468 = vmatpush.msra.mxu0 0.0
      %1469 = vmatpush.msra.mxu0 0.0
      %1470 = vmatpush.msra.mxu0 0.0
      %1471 = vmatpush.msra.mxu0 0.0
      %1472 = vmatpush.msra.mxu0 0.0
      %1473 = vmatpush.msra.mxu0 0.0
      %1474 = vmatpush.msra.mxu0 0.0
      %1475 = vmatpush.msra.mxu0 %v1382
      %1476 = vmatpush.msra.mxu0 %v1381
      %1477 = vmatpush.msra.mxu0 %v1380
      %1478 = vmatpush.msra.mxu0 %v1379
      %1479 = vmatmul.f32.gmra.mxu0 %v1416
      %v1480 = vpop.f32.mrf.mxu0
      %v1481 = vadd.f32 %v1399, %v1480
      %1482 = vmatmul.f32.gmra.mxu0 %v1419
      %v1483 = vpop.f32.mrf.mxu0
      %v1484 = vadd.f32 %v1400, %v1483
      %1485 = vmatmul.f32.gmra.mxu0 %v1422
      %v1486 = vpop.f32.mrf.mxu0
      %v1487 = vadd.f32 %v1401, %v1486
      %1488 = vmatmul.f32.gmra.mxu0 %v1425
      %v1489 = vpop.f32.mrf.mxu0
      %v1490 = vadd.f32 %v1402, %v1489
      %1491 = vmatmul.f32.gmra.mxu0 %v1428
      %v1492 = vpop.f32.mrf.mxu0
      %v1493 = vadd.f32 %v1403, %v1492
      %1494 = vmatmul.f32.gmra.mxu0 %v1431
      %v1495 = vpop.f32.mrf.mxu0
      %v1496 = vadd.f32 %v1404, %v1495
      %1497 = vmatmul.f32.gmra.mxu0 %v1434
      %v1498 = vpop.f32.mrf.mxu0
      %v1499 = vadd.f32 %v1405, %v1498
      %1500 = vmatmul.f32.gmra.mxu0 %v1437
      %v1501 = vpop.f32.mrf.mxu0
      %v1502 = vadd.f32 %v1406, %v1501
      %1503 = vmatmul.f32.gmra.mxu0 %v1440
      %v1504 = vpop.f32.mrf.mxu0
      %v1505 = vadd.f32 %v1407, %v1504
      %1506 = vmatmul.f32.gmra.mxu0 %v1443
      %v1507 = vpop.f32.mrf.mxu0
      %v1508 = vadd.f32 %v1408, %v1507
      %1509 = vmatmul.f32.gmra.mxu0 %v1446
      %v1510 = vpop.f32.mrf.mxu0
      %v1511 = vadd.f32 %v1409, %v1510
      %1512 = vmatmul.f32.gmra.mxu0 %v1449
      %v1513 = vpop.f32.mrf.mxu0
      %v1514 = vadd.f32 %v1410, %v1513
      %1515 = vmatmul.f32.gmra.mxu0 %v1452
      %v1516 = vpop.f32.mrf.mxu0
      %v1517 = vadd.f32 %v1411, %v1516
      %1518 = vmatmul.f32.gmra.mxu0 %v1455
      %v1519 = vpop.f32.mrf.mxu0
      %v1520 = vadd.f32 %v1412, %v1519
      %1521 = vmatmul.f32.gmra.mxu0 %v1458
      %v1522 = vpop.f32.mrf.mxu0
      %v1523 = vadd.f32 %v1413, %v1522
      %1524 = vmatmul.f32.gmra.mxu0 %v1461
      %v1525 = vpop.f32.mrf.mxu0
      %v1526 = vadd.f32 %v1414, %v1525
      %1527 = vdwg.mxu0
      %v1528 = vxor.u32 %v1481, 2147483648
      %v1529 = vxor.u32 %v1484, 2147483648
      %v1530 = vxor.u32 %v1487, 2147483648
      %v1531 = vxor.u32 %v1490, 2147483648
      %v1532 = vxor.u32 %v1493, 2147483648
      %v1533 = vxor.u32 %v1496, 2147483648
      %v1534 = vxor.u32 %v1499, 2147483648
      %v1535 = vxor.u32 %v1502, 2147483648
      %v1536 = vxor.u32 %v1505, 2147483648
      %v1537 = vxor.u32 %v1508, 2147483648
      %v1538 = vxor.u32 %v1511, 2147483648
      %v1539 = vxor.u32 %v1514, 2147483648
      %v1540 = vxor.u32 %v1517, 2147483648
      %v1541 = vxor.u32 %v1520, 2147483648
      %v1542 = vxor.u32 %v1523, 2147483648
      %v1543 = vxor.u32 %v1526, 2147483648
      %v1544 = vmul.f32 %v1528, 1.442695
      %v1545 = vpow.pop %v1544
      %v1546 = vmul.f32 %v1529, 1.442695
      %v1547 = vpow.pop %v1546
      %v1548 = vmul.f32 %v1530, 1.442695
      %v1549 = vpow.pop %v1548
      %v1550 = vmul.f32 %v1531, 1.442695
      %v1551 = vpow.pop %v1550
      %v1552 = vmul.f32 %v1532, 1.442695
      %v1553 = vpow.pop %v1552
      %v1554 = vmul.f32 %v1533, 1.442695
      %v1555 = vpow.pop %v1554
      %v1556 = vmul.f32 %v1534, 1.442695
      %v1557 = vpow.pop %v1556
      %v1558 = vmul.f32 %v1535, 1.442695
      %v1559 = vpow.pop %v1558
      %v1560 = vmul.f32 %v1536, 1.442695
      %v1561 = vpow.pop %v1560
      %v1562 = vmul.f32 %v1537, 1.442695
      %v1563 = vpow.pop %v1562
      %v1564 = vmul.f32 %v1538, 1.442695
      %v1565 = vpow.pop %v1564
      %v1566 = vmul.f32 %v1539, 1.442695
      %v1567 = vpow.pop %v1566
      %v1568 = vmul.f32 %v1540, 1.442695
      %v1569 = vpow.pop %v1568
      %v1570 = vmul.f32 %v1541, 1.442695
      %v1571 = vpow.pop %v1570
      %v1572 = vmul.f32 %v1542, 1.442695
      %v1573 = vpow.pop %v1572
      %v1574 = vmul.f32 %v1543, 1.442695
      %v1575 = vpow.pop %v1574
      %v1576 = vadd.f32 %v1545, 1.0
      %v1577 = vadd.f32 %v1547, 1.0
      %v1578 = vadd.f32 %v1549, 1.0
      %v1579 = vadd.f32 %v1551, 1.0
      %v1580 = vadd.f32 %v1553, 1.0
      %v1581 = vadd.f32 %v1555, 1.0
      %v1582 = vadd.f32 %v1557, 1.0
      %v1583 = vadd.f32 %v1559, 1.0
      %v1584 = vadd.f32 %v1561, 1.0
      %v1585 = vadd.f32 %v1563, 1.0
      %v1586 = vadd.f32 %v1565, 1.0
      %v1587 = vadd.f32 %v1567, 1.0
      %v1588 = vadd.f32 %v1569, 1.0
      %v1589 = vadd.f32 %v1571, 1.0
      %v1590 = vadd.f32 %v1573, 1.0
      %v1591 = vadd.f32 %v1575, 1.0
      %v1592 = vrcp.pop %v1576
      %v1593 = vmul.f32 %v1576, %v1592
      %v1594 = vsub.f32 1.0, %v1593
      %v1595 = vmul.f32 %v1592, %v1594
      %v1596 = vadd.f32 %v1592, %v1595
      %vm1597 = vweird.f32 %v1576
      %vm1598 = vweird.f32 %v1592
      %vm1599 = vmor %vm1597, %vm1598
      %v1600 = vsel %vm1599, %v1592, %v1596
      %v1601 = vand.u32 2147483647, %v1576
      %vm1602 = vcmp.eq.f32.partialorder %v1601, 8.507059e+37
      %v1603 = vand.u32 %v1576, 2147483648
      %v1604 = vor.u32 1.1754944e-38, %v1603
      %v1605 = vsel %vm1602, %v1604, %v1600
      %v1606 = vmul.f32 1.0, %v1605
      %v1607 = vrcp.pop %v1577
      %v1608 = vmul.f32 %v1577, %v1607
      %v1609 = vsub.f32 1.0, %v1608
      %v1610 = vmul.f32 %v1607, %v1609
      %v1611 = vadd.f32 %v1607, %v1610
      %vm1612 = vweird.f32 %v1577
      %vm1613 = vweird.f32 %v1607
      %vm1614 = vmor %vm1612, %vm1613
      %v1615 = vsel %vm1614, %v1607, %v1611
      %v1616 = vand.u32 2147483647, %v1577
      %vm1617 = vcmp.eq.f32.partialorder %v1616, 8.507059e+37
      %v1618 = vand.u32 %v1577, 2147483648
      %v1619 = vor.u32 1.1754944e-38, %v1618
      %v1620 = vsel %vm1617, %v1619, %v1615
      %v1621 = vmul.f32 1.0, %v1620
      %v1622 = vrcp.pop %v1578
      %v1623 = vmul.f32 %v1578, %v1622
      %v1624 = vsub.f32 1.0, %v1623
      %v1625 = vmul.f32 %v1622, %v1624
      %v1626 = vadd.f32 %v1622, %v1625
      %vm1627 = vweird.f32 %v1578
      %vm1628 = vweird.f32 %v1622
      %vm1629 = vmor %vm1627, %vm1628
      %v1630 = vsel %vm1629, %v1622, %v1626
      %v1631 = vand.u32 2147483647, %v1578
      %vm1632 = vcmp.eq.f32.partialorder %v1631, 8.507059e+37
      %v1633 = vand.u32 %v1578, 2147483648
      %v1634 = vor.u32 1.1754944e-38, %v1633
      %v1635 = vsel %vm1632, %v1634, %v1630
      %v1636 = vmul.f32 1.0, %v1635
      %v1637 = vrcp.pop %v1579
      %v1638 = vmul.f32 %v1579, %v1637
      %v1639 = vsub.f32 1.0, %v1638
      %v1640 = vmul.f32 %v1637, %v1639
      %v1641 = vadd.f32 %v1637, %v1640
      %vm1642 = vweird.f32 %v1579
      %vm1643 = vweird.f32 %v1637
      %vm1644 = vmor %vm1642, %vm1643
      %v1645 = vsel %vm1644, %v1637, %v1641
      %v1646 = vand.u32 2147483647, %v1579
      %vm1647 = vcmp.eq.f32.partialorder %v1646, 8.507059e+37
      %v1648 = vand.u32 %v1579, 2147483648
      %v1649 = vor.u32 1.1754944e-38, %v1648
      %v1650 = vsel %vm1647, %v1649, %v1645
      %v1651 = vmul.f32 1.0, %v1650
      %v1652 = vrcp.pop %v1580
      %v1653 = vmul.f32 %v1580, %v1652
      %v1654 = vsub.f32 1.0, %v1653
      %v1655 = vmul.f32 %v1652, %v1654
      %v1656 = vadd.f32 %v1652, %v1655
      %vm1657 = vweird.f32 %v1580
      %vm1658 = vweird.f32 %v1652
      %vm1659 = vmor %vm1657, %vm1658
      %v1660 = vsel %vm1659, %v1652, %v1656
      %v1661 = vand.u32 2147483647, %v1580
      %vm1662 = vcmp.eq.f32.partialorder %v1661, 8.507059e+37
      %v1663 = vand.u32 %v1580, 2147483648
      %v1664 = vor.u32 1.1754944e-38, %v1663
      %v1665 = vsel %vm1662, %v1664, %v1660
      %v1666 = vmul.f32 1.0, %v1665
      %v1667 = vrcp.pop %v1581
      %v1668 = vmul.f32 %v1581, %v1667
      %v1669 = vsub.f32 1.0, %v1668
      %v1670 = vmul.f32 %v1667, %v1669
      %v1671 = vadd.f32 %v1667, %v1670
      %vm1672 = vweird.f32 %v1581
      %vm1673 = vweird.f32 %v1667
      %vm1674 = vmor %vm1672, %vm1673
      %v1675 = vsel %vm1674, %v1667, %v1671
      %v1676 = vand.u32 2147483647, %v1581
      %vm1677 = vcmp.eq.f32.partialorder %v1676, 8.507059e+37
      %v1678 = vand.u32 %v1581, 2147483648
      %v1679 = vor.u32 1.1754944e-38, %v1678
      %v1680 = vsel %vm1677, %v1679, %v1675
      %v1681 = vmul.f32 1.0, %v1680
      %v1682 = vrcp.pop %v1582
      %v1683 = vmul.f32 %v1582, %v1682
      %v1684 = vsub.f32 1.0, %v1683
      %v1685 = vmul.f32 %v1682, %v1684
      %v1686 = vadd.f32 %v1682, %v1685
      %vm1687 = vweird.f32 %v1582
      %vm1688 = vweird.f32 %v1682
      %vm1689 = vmor %vm1687, %vm1688
      %v1690 = vsel %vm1689, %v1682, %v1686
      %v1691 = vand.u32 2147483647, %v1582
      %vm1692 = vcmp.eq.f32.partialorder %v1691, 8.507059e+37
      %v1693 = vand.u32 %v1582, 2147483648
      %v1694 = vor.u32 1.1754944e-38, %v1693
      %v1695 = vsel %vm1692, %v1694, %v1690
      %v1696 = vmul.f32 1.0, %v1695
      %v1697 = vrcp.pop %v1583
      %v1698 = vmul.f32 %v1583, %v1697
      %v1699 = vsub.f32 1.0, %v1698
      %v1700 = vmul.f32 %v1697, %v1699
      %v1701 = vadd.f32 %v1697, %v1700
      %vm1702 = vweird.f32 %v1583
      %vm1703 = vweird.f32 %v1697
      %vm1704 = vmor %vm1702, %vm1703
      %v1705 = vsel %vm1704, %v1697, %v1701
      %v1706 = vand.u32 2147483647, %v1583
      %vm1707 = vcmp.eq.f32.partialorder %v1706, 8.507059e+37
      %v1708 = vand.u32 %v1583, 2147483648
      %v1709 = vor.u32 1.1754944e-38, %v1708
      %v1710 = vsel %vm1707, %v1709, %v1705
      %v1711 = vmul.f32 1.0, %v1710
      %v1712 = vrcp.pop %v1584
      %v1713 = vmul.f32 %v1584, %v1712
      %v1714 = vsub.f32 1.0, %v1713
      %v1715 = vmul.f32 %v1712, %v1714
      %v1716 = vadd.f32 %v1712, %v1715
      %vm1717 = vweird.f32 %v1584
      %vm1718 = vweird.f32 %v1712
      %vm1719 = vmor %vm1717, %vm1718
      %v1720 = vsel %vm1719, %v1712, %v1716
      %v1721 = vand.u32 2147483647, %v1584
      %vm1722 = vcmp.eq.f32.partialorder %v1721, 8.507059e+37
      %v1723 = vand.u32 %v1584, 2147483648
      %v1724 = vor.u32 1.1754944e-38, %v1723
      %v1725 = vsel %vm1722, %v1724, %v1720
      %v1726 = vmul.f32 1.0, %v1725
      %v1727 = vrcp.pop %v1585
      %v1728 = vmul.f32 %v1585, %v1727
      %v1729 = vsub.f32 1.0, %v1728
      %v1730 = vmul.f32 %v1727, %v1729
      %v1731 = vadd.f32 %v1727, %v1730
      %vm1732 = vweird.f32 %v1585
      %vm1733 = vweird.f32 %v1727
      %vm1734 = vmor %vm1732, %vm1733
      %v1735 = vsel %vm1734, %v1727, %v1731
      %v1736 = vand.u32 2147483647, %v1585
      %vm1737 = vcmp.eq.f32.partialorder %v1736, 8.507059e+37
      %v1738 = vand.u32 %v1585, 2147483648
      %v1739 = vor.u32 1.1754944e-38, %v1738
      %v1740 = vsel %vm1737, %v1739, %v1735
      %v1741 = vmul.f32 1.0, %v1740
      %v1742 = vrcp.pop %v1586
      %v1743 = vmul.f32 %v1586, %v1742
      %v1744 = vsub.f32 1.0, %v1743
      %v1745 = vmul.f32 %v1742, %v1744
      %v1746 = vadd.f32 %v1742, %v1745
      %vm1747 = vweird.f32 %v1586
      %vm1748 = vweird.f32 %v1742
      %vm1749 = vmor %vm1747, %vm1748
      %v1750 = vsel %vm1749, %v1742, %v1746
      %v1751 = vand.u32 2147483647, %v1586
      %vm1752 = vcmp.eq.f32.partialorder %v1751, 8.507059e+37
      %v1753 = vand.u32 %v1586, 2147483648
      %v1754 = vor.u32 1.1754944e-38, %v1753
      %v1755 = vsel %vm1752, %v1754, %v1750
      %v1756 = vmul.f32 1.0, %v1755
      %v1757 = vrcp.pop %v1587
      %v1758 = vmul.f32 %v1587, %v1757
      %v1759 = vsub.f32 1.0, %v1758
      %v1760 = vmul.f32 %v1757, %v1759
      %v1761 = vadd.f32 %v1757, %v1760
      %vm1762 = vweird.f32 %v1587
      %vm1763 = vweird.f32 %v1757
      %vm1764 = vmor %vm1762, %vm1763
      %v1765 = vsel %vm1764, %v1757, %v1761
      %v1766 = vand.u32 2147483647, %v1587
      %vm1767 = vcmp.eq.f32.partialorder %v1766, 8.507059e+37
      %v1768 = vand.u32 %v1587, 2147483648
      %v1769 = vor.u32 1.1754944e-38, %v1768
      %v1770 = vsel %vm1767, %v1769, %v1765
      %v1771 = vmul.f32 1.0, %v1770
      %v1772 = vrcp.pop %v1588
      %v1773 = vmul.f32 %v1588, %v1772
      %v1774 = vsub.f32 1.0, %v1773
      %v1775 = vmul.f32 %v1772, %v1774
      %v1776 = vadd.f32 %v1772, %v1775
      %vm1777 = vweird.f32 %v1588
      %vm1778 = vweird.f32 %v1772
      %vm1779 = vmor %vm1777, %vm1778
      %v1780 = vsel %vm1779, %v1772, %v1776
      %v1781 = vand.u32 2147483647, %v1588
      %vm1782 = vcmp.eq.f32.partialorder %v1781, 8.507059e+37
      %v1783 = vand.u32 %v1588, 2147483648
      %v1784 = vor.u32 1.1754944e-38, %v1783
      %v1785 = vsel %vm1782, %v1784, %v1780
      %v1786 = vmul.f32 1.0, %v1785
      %v1787 = vrcp.pop %v1589
      %v1788 = vmul.f32 %v1589, %v1787
      %v1789 = vsub.f32 1.0, %v1788
      %v1790 = vmul.f32 %v1787, %v1789
      %v1791 = vadd.f32 %v1787, %v1790
      %vm1792 = vweird.f32 %v1589
      %vm1793 = vweird.f32 %v1787
      %vm1794 = vmor %vm1792, %vm1793
      %v1795 = vsel %vm1794, %v1787, %v1791
      %v1796 = vand.u32 2147483647, %v1589
      %vm1797 = vcmp.eq.f32.partialorder %v1796, 8.507059e+37
      %v1798 = vand.u32 %v1589, 2147483648
      %v1799 = vor.u32 1.1754944e-38, %v1798
      %v1800 = vsel %vm1797, %v1799, %v1795
      %v1801 = vmul.f32 1.0, %v1800
      %v1802 = vrcp.pop %v1590
      %v1803 = vmul.f32 %v1590, %v1802
      %v1804 = vsub.f32 1.0, %v1803
      %v1805 = vmul.f32 %v1802, %v1804
      %v1806 = vadd.f32 %v1802, %v1805
      %vm1807 = vweird.f32 %v1590
      %vm1808 = vweird.f32 %v1802
      %vm1809 = vmor %vm1807, %vm1808
      %v1810 = vsel %vm1809, %v1802, %v1806
      %v1811 = vand.u32 2147483647, %v1590
      %vm1812 = vcmp.eq.f32.partialorder %v1811, 8.507059e+37
      %v1813 = vand.u32 %v1590, 2147483648
      %v1814 = vor.u32 1.1754944e-38, %v1813
      %v1815 = vsel %vm1812, %v1814, %v1810
      %v1816 = vmul.f32 1.0, %v1815
      %v1817 = vrcp.pop %v1591
      %v1818 = vmul.f32 %v1591, %v1817
      %v1819 = vsub.f32 1.0, %v1818
      %v1820 = vmul.f32 %v1817, %v1819
      %v1821 = vadd.f32 %v1817, %v1820
      %vm1822 = vweird.f32 %v1591
      %vm1823 = vweird.f32 %v1817
      %vm1824 = vmor %vm1822, %vm1823
      %v1825 = vsel %vm1824, %v1817, %v1821
      %v1826 = vand.u32 2147483647, %v1591
      %vm1827 = vcmp.eq.f32.partialorder %v1826, 8.507059e+37
      %v1828 = vand.u32 %v1591, 2147483648
      %v1829 = vor.u32 1.1754944e-38, %v1828
      %v1830 = vsel %vm1827, %v1829, %v1825
      %v1831 = vmul.f32 1.0, %v1830
      %v1832 = vmul.f32 %v1481, %v1606
      %v1833 = vmul.f32 %v1484, %v1621
      %v1834 = vmul.f32 %v1487, %v1636
      %v1835 = vmul.f32 %v1490, %v1651
      %v1836 = vmul.f32 %v1493, %v1666
      %v1837 = vmul.f32 %v1496, %v1681
      %v1838 = vmul.f32 %v1499, %v1696
      %v1839 = vmul.f32 %v1502, %v1711
      %v1840 = vmul.f32 %v1505, %v1726
      %v1841 = vmul.f32 %v1508, %v1741
      %v1842 = vmul.f32 %v1511, %v1756
      %v1843 = vmul.f32 %v1514, %v1771
      %v1844 = vmul.f32 %v1517, %v1786
      %v1845 = vmul.f32 %v1520, %v1801
      %v1846 = vmul.f32 %v1523, %v1816
      %v1847 = vmul.f32 %v1526, %v1831
      %v1848 = vld [vmem:[%s14] sm:$0xff]
      %v1849 = vld [vmem:[%s14 + $0x8] sm:$0xff]
      %v1850 = vld [vmem:[%s14 + $0x10] sm:$0xff]
      %v1851 = vld [vmem:[%s14 + $0x18] sm:$0xff]
      %v1852 = vld [vmem:[%s14 + $0x20] sm:$0xff]
      %v1853 = vld [vmem:[%s14 + $0x28] sm:$0xff]
      %v1854 = vld [vmem:[%s14 + $0x30] sm:$0xff]
      %v1855 = vld [vmem:[%s14 + $0x38] sm:$0xff]
      %v1856 = vld [vmem:[%s14 + $0x40] sm:$0xff]
      %v1857 = vld [vmem:[%s14 + $0x48] sm:$0xff]
      %v1858 = vld [vmem:[%s14 + $0x50] sm:$0xff]
      %v1859 = vld [vmem:[%s14 + $0x58] sm:$0xff]
      %v1860 = vld [vmem:[%s14 + $0x60] sm:$0xff]
      %v1861 = vld [vmem:[%s14 + $0x68] sm:$0xff]
      %v1862 = vld [vmem:[%s14 + $0x70] sm:$0xff]
      %v1863 = vld [vmem:[%s14 + $0x78] sm:$0xff]
      %v1864 = vld [vmem:[%s15] sm:$0xff]
      %v1865 = vld [vmem:[%s15 + $0x8] sm:$0xff]
      %v1866 = vld [vmem:[%s15 + $0x10] sm:$0xff]
      %v1867 = vld [vmem:[%s15 + $0x18] sm:$0xff]
      %v1868 = vld [vmem:[%s15 + $0x20] sm:$0xff]
      %v1869 = vld [vmem:[%s15 + $0x28] sm:$0xff]
      %v1870 = vld [vmem:[%s15 + $0x30] sm:$0xff]
      %v1871 = vld [vmem:[%s15 + $0x38] sm:$0xff]
      %v1872 = vld [vmem:[%s15 + $0x40] sm:$0xff]
      %v1873 = vld [vmem:[%s15 + $0x48] sm:$0xff]
      %v1874 = vld [vmem:[%s15 + $0x50] sm:$0xff]
      %v1875 = vld [vmem:[%s15 + $0x58] sm:$0xff]
      %v1876 = vld [vmem:[%s15 + $0x60] sm:$0xff]
      %v1877 = vld [vmem:[%s15 + $0x68] sm:$0xff]
      %v1878 = vld [vmem:[%s15 + $0x70] sm:$0xff]
      %v1879 = vld [vmem:[%s15 + $0x78] sm:$0xff]
      %1880 = vmatpush.msra.mxu0 %v1847
      %1881 = vmatpush.msra.mxu0 %v1846
      %1882 = vmatpush.msra.mxu0 %v1845
      %1883 = vmatpush.msra.mxu0 %v1844
      %1884 = vmatpush.msra.mxu0 %v1843
      %1885 = vmatpush.msra.mxu0 %v1842
      %1886 = vmatpush.msra.mxu0 %v1841
      %1887 = vmatpush.msra.mxu0 %v1840
      %1888 = vmatpush.msra.mxu0 %v1839
      %1889 = vmatpush.msra.mxu0 %v1838
      %1890 = vmatpush.msra.mxu0 %v1837
      %1891 = vmatpush.msra.mxu0 %v1836
      %1892 = vmatpush.msra.mxu0 %v1835
      %1893 = vmatpush.msra.mxu0 %v1834
      %1894 = vmatpush.msra.mxu0 %v1833
      %1895 = vmatpush.msra.mxu0 %v1832
      %1896 = vmatmul.f32.gmra.mxu0 %v1848
      %v1897 = vpop.f32.mrf.mxu0
      %v1898 = vadd.f32 %v1864, %v1897
      %1899 = vmatmul.f32.gmra.mxu0 %v1849
      %v1900 = vpop.f32.mrf.mxu0
      %v1901 = vadd.f32 %v1865, %v1900
      %1902 = vmatmul.f32.gmra.mxu0 %v1850
      %v1903 = vpop.f32.mrf.mxu0
      %v1904 = vadd.f32 %v1866, %v1903
      %1905 = vmatmul.f32.gmra.mxu0 %v1851
      %v1906 = vpop.f32.mrf.mxu0
      %v1907 = vadd.f32 %v1867, %v1906
      %1908 = vmatmul.f32.gmra.mxu0 %v1852
      %v1909 = vpop.f32.mrf.mxu0
      %v1910 = vadd.f32 %v1868, %v1909
      %1911 = vmatmul.f32.gmra.mxu0 %v1853
      %v1912 = vpop.f32.mrf.mxu0
      %v1913 = vadd.f32 %v1869, %v1912
      %1914 = vmatmul.f32.gmra.mxu0 %v1854
      %v1915 = vpop.f32.mrf.mxu0
      %v1916 = vadd.f32 %v1870, %v1915
      %1917 = vmatmul.f32.gmra.mxu0 %v1855
      %v1918 = vpop.f32.mrf.mxu0
      %v1919 = vadd.f32 %v1871, %v1918
      %1920 = vmatmul.f32.gmra.mxu0 %v1856
      %v1921 = vpop.f32.mrf.mxu0
      %v1922 = vadd.f32 %v1872, %v1921
      %1923 = vmatmul.f32.gmra.mxu0 %v1857
      %v1924 = vpop.f32.mrf.mxu0
      %v1925 = vadd.f32 %v1873, %v1924
      %1926 = vmatmul.f32.gmra.mxu0 %v1858
      %v1927 = vpop.f32.mrf.mxu0
      %v1928 = vadd.f32 %v1874, %v1927
      %1929 = vmatmul.f32.gmra.mxu0 %v1859
      %v1930 = vpop.f32.mrf.mxu0
      %v1931 = vadd.f32 %v1875, %v1930
      %1932 = vmatmul.f32.gmra.mxu0 %v1860
      %v1933 = vpop.f32.mrf.mxu0
      %v1934 = vadd.f32 %v1876, %v1933
      %1935 = vmatmul.f32.gmra.mxu0 %v1861
      %v1936 = vpop.f32.mrf.mxu0
      %v1937 = vadd.f32 %v1877, %v1936
      %1938 = vmatmul.f32.gmra.mxu0 %v1862
      %v1939 = vpop.f32.mrf.mxu0
      %v1940 = vadd.f32 %v1878, %v1939
      %1941 = vmatmul.f32.gmra.mxu0 %v1863
      %v1942 = vpop.f32.mrf.mxu0
      %v1943 = vadd.f32 %v1879, %v1942
      %1944 = vdwg.mxu0
      %v1945 = vld [vmem:[%s18] sm:$0xff]
      %v1946 = vld [vmem:[%s18 + $0x8] sm:$0xff]
      %v1947 = vld [vmem:[%s18 + $0x10] sm:$0xff]
      %v1948 = vld [vmem:[%s18 + $0x18] sm:$0xff]
      %v1949 = vld [vmem:[%s18 + $0x20] sm:$0xff]
      %v1950 = vld [vmem:[%s18 + $0x28] sm:$0xff]
      %v1951 = vld [vmem:[%s18 + $0x30] sm:$0xff]
      %v1952 = vld [vmem:[%s18 + $0x38] sm:$0xff]
      %v1953 = vld [vmem:[%s18 + $0x40] sm:$0xff]
      %v1954 = vld [vmem:[%s18 + $0x48] sm:$0xff]
      %v1955 = vld [vmem:[%s18 + $0x50] sm:$0xff]
      %v1956 = vld [vmem:[%s18 + $0x58] sm:$0xff]
      %v1957 = vld [vmem:[%s18 + $0x60] sm:$0xff]
      %v1958 = vld [vmem:[%s18 + $0x68] sm:$0xff]
      %v1959 = vld [vmem:[%s18 + $0x70] sm:$0xff]
      %v1960 = vld [vmem:[%s18 + $0x78] sm:$0xff]
      %v1961 = vadd.f32 %v1945, %v1898
      %v1962 = vadd.f32 %v1946, %v1901
      %v1963 = vadd.f32 %v1947, %v1904
      %v1964 = vadd.f32 %v1948, %v1907
      %v1965 = vadd.f32 %v1949, %v1910
      %v1966 = vadd.f32 %v1950, %v1913
      %v1967 = vadd.f32 %v1951, %v1916
      %v1968 = vadd.f32 %v1952, %v1919
      %v1969 = vadd.f32 %v1953, %v1922
      %v1970 = vadd.f32 %v1954, %v1925
      %v1971 = vadd.f32 %v1955, %v1928
      %v1972 = vadd.f32 %v1956, %v1931
      %v1973 = vadd.f32 %v1957, %v1934
      %v1974 = vadd.f32 %v1958, %v1937
      %v1975 = vadd.f32 %v1959, %v1940
      %v1976 = vadd.f32 %v1960, %v1943
      %v1977 = vld [vmem:[%s16] sm:$0xff]
      %v1978 = vld [vmem:[%s16 + $0x8] sm:$0xff]
      %v1979 = vld [vmem:[%s16 + $0x10] sm:$0xff]
      %v1980 = vld [vmem:[%s16 + $0x18] sm:$0xff]
      %v1981 = vld [vmem:[%s16 + $0x20] sm:$0xff]
      %v1982 = vld [vmem:[%s16 + $0x28] sm:$0xff]
      %v1983 = vld [vmem:[%s16 + $0x30] sm:$0xff]
      %v1984 = vld [vmem:[%s16 + $0x38] sm:$0xff]
      %v1985 = vld [vmem:[%s16 + $0x40] sm:$0xff]
      %v1986 = vld [vmem:[%s16 + $0x48] sm:$0xff]
      %v1987 = vld [vmem:[%s16 + $0x50] sm:$0xff]
      %v1988 = vld [vmem:[%s16 + $0x58] sm:$0xff]
      %v1989 = vld [vmem:[%s16 + $0x60] sm:$0xff]
      %v1990 = vld [vmem:[%s16 + $0x68] sm:$0xff]
      %v1991 = vld [vmem:[%s16 + $0x70] sm:$0xff]
      %v1992 = vld [vmem:[%s16 + $0x78] sm:$0xff]
      %v1994 = vsel %vm1020, %v1977, 0
      %v1997 = vsel %vm1020, %v1978, 0
      %v2000 = vsel %vm1020, %v1979, 0
      %v2003 = vsel %vm1020, %v1980, 0
      %v2006 = vsel %vm1020, %v1981, 0
      %v2009 = vsel %vm1020, %v1982, 0
      %v2012 = vsel %vm1020, %v1983, 0
      %v2015 = vsel %vm1020, %v1984, 0
      %v2018 = vsel %vm1020, %v1985, 0
      %v2021 = vsel %vm1020, %v1986, 0
      %v2024 = vsel %vm1020, %v1987, 0
      %v2027 = vsel %vm1020, %v1988, 0
      %v2030 = vsel %vm1020, %v1989, 0
      %v2033 = vsel %vm1020, %v1990, 0
      %v2036 = vsel %vm1020, %v1991, 0
      %v2039 = vsel %vm1020, %v1992, 0
      %2041 = vmatpush.msra.mxu0 0.0
      %2042 = vmatpush.msra.mxu0 0.0
      %2043 = vmatpush.msra.mxu0 0.0
      %2044 = vmatpush.msra.mxu0 0.0
      %2045 = vmatpush.msra.mxu0 0.0
      %2046 = vmatpush.msra.mxu0 0.0
      %2047 = vmatpush.msra.mxu0 0.0
      %2048 = vmatpush.msra.mxu0 0.0
      %2049 = vmatpush.msra.mxu0 %v1378
      %2050 = vmatpush.msra.mxu0 %v1375
      %2051 = vmatpush.msra.mxu0 %v1372
      %2052 = vmatpush.msra.mxu0 %v1369
      %2053 = vmatpush.msra.mxu0 %v1059
      %2054 = vmatpush.msra.mxu0 %v1058
      %2055 = vmatpush.msra.mxu0 %v1057
      %2056 = vmatpush.msra.mxu0 %v1056
      %2057 = vmatmul.f32.gmra.mxu0 %v1994
      %v2058 = vpop.f32.mrf.mxu0
      %v2059 = vadd.f32 0.0, %v2058
      %2060 = vmatmul.f32.gmra.mxu0 %v1997
      %v2061 = vpop.f32.mrf.mxu0
      %v2062 = vadd.f32 0.0, %v2061
      %2063 = vmatmul.f32.gmra.mxu0 %v2000
      %v2064 = vpop.f32.mrf.mxu0
      %v2065 = vadd.f32 0.0, %v2064
      %2066 = vmatmul.f32.gmra.mxu0 %v2003
      %v2067 = vpop.f32.mrf.mxu0
      %v2068 = vadd.f32 0.0, %v2067
      %2069 = vmatmul.f32.gmra.mxu0 %v2006
      %v2070 = vpop.f32.mrf.mxu0
      %v2071 = vadd.f32 0.0, %v2070
      %2072 = vmatmul.f32.gmra.mxu0 %v2009
      %v2073 = vpop.f32.mrf.mxu0
      %v2074 = vadd.f32 0.0, %v2073
      %2075 = vmatmul.f32.gmra.mxu0 %v2012
      %v2076 = vpop.f32.mrf.mxu0
      %v2077 = vadd.f32 0.0, %v2076
      %2078 = vmatmul.f32.gmra.mxu0 %v2015
      %v2079 = vpop.f32.mrf.mxu0
      %v2080 = vadd.f32 0.0, %v2079
      %2081 = vmatmul.f32.gmra.mxu0 %v2018
      %v2082 = vpop.f32.mrf.mxu0
      %v2083 = vadd.f32 0.0, %v2082
      %2084 = vmatmul.f32.gmra.mxu0 %v2021
      %v2085 = vpop.f32.mrf.mxu0
      %v2086 = vadd.f32 0.0, %v2085
      %2087 = vmatmul.f32.gmra.mxu0 %v2024
      %v2088 = vpop.f32.mrf.mxu0
      %v2089 = vadd.f32 0.0, %v2088
      %2090 = vmatmul.f32.gmra.mxu0 %v2027
      %v2091 = vpop.f32.mrf.mxu0
      %v2092 = vadd.f32 0.0, %v2091
      %2093 = vmatmul.f32.gmra.mxu0 %v2030
      %v2094 = vpop.f32.mrf.mxu0
      %v2095 = vadd.f32 0.0, %v2094
      %2096 = vmatmul.f32.gmra.mxu0 %v2033
      %v2097 = vpop.f32.mrf.mxu0
      %v2098 = vadd.f32 0.0, %v2097
      %2099 = vmatmul.f32.gmra.mxu0 %v2036
      %v2100 = vpop.f32.mrf.mxu0
      %v2101 = vadd.f32 0.0, %v2100
      %2102 = vmatmul.f32.gmra.mxu0 %v2039
      %v2103 = vpop.f32.mrf.mxu0
      %v2104 = vadd.f32 0.0, %v2103
      %2105 = vdwg.mxu0
      %v2106 = vadd.f32 %v1961, %v2059
      %v2107 = vadd.f32 %v1962, %v2062
      %v2108 = vadd.f32 %v1963, %v2065
      %v2109 = vadd.f32 %v1964, %v2068
      %v2110 = vadd.f32 %v1965, %v2071
      %v2111 = vadd.f32 %v1966, %v2074
      %v2112 = vadd.f32 %v1967, %v2077
      %v2113 = vadd.f32 %v1968, %v2080
      %v2114 = vadd.f32 %v1969, %v2083
      %v2115 = vadd.f32 %v1970, %v2086
      %v2116 = vadd.f32 %v1971, %v2089
      %v2117 = vadd.f32 %v1972, %v2092
      %v2118 = vadd.f32 %v1973, %v2095
      %v2119 = vadd.f32 %v1974, %v2098
      %v2120 = vadd.f32 %v1975, %v2101
      %v2121 = vadd.f32 %v1976, %v2104
      %v2122 = vld [vmem:[%s692] sm:$0xff]
      %2124 = vst [vmem:[#allocation1] ss:$2 sm:$0xff] %v2122
      %v2125 = vld.sshfl [vmem:[#allocation1] sm:$0xff pattern:$0x75316420]
      %v2126 = vld.sshfl [vmem:[#allocation1 + $0x8] sm:$0xff pattern:$0x75316420]
      %v2129 = vpack.c.bf16 %v2125, %v2125
      %v2130 = vpack.c.bf16 %v2126, %v2126
      %v2131 = vld [vmem:[%s17] sm:$0xf]
      %v2132 = vld [vmem:[%s17 + $0x4] sm:$0xf]
      %v2133 = vld [vmem:[%s17 + $0x8] sm:$0xf]
      %v2134 = vld [vmem:[%s17 + $0xc] sm:$0xf]
      %v2135 = vld [vmem:[%s17 + $0x10] sm:$0xf]
      %v2136 = vld [vmem:[%s17 + $0x14] sm:$0xf]
      %v2137 = vld [vmem:[%s17 + $0x18] sm:$0xf]
      %v2138 = vld [vmem:[%s17 + $0x1c] sm:$0xf]
      %v2139 = vld [vmem:[%s17 + $0x20] sm:$0xf]
      %v2140 = vld [vmem:[%s17 + $0x24] sm:$0xf]
      %v2141 = vld [vmem:[%s17 + $0x28] sm:$0xf]
      %v2142 = vld [vmem:[%s17 + $0x2c] sm:$0xf]
      %v2143 = vld [vmem:[%s17 + $0x30] sm:$0xf]
      %v2144 = vld [vmem:[%s17 + $0x34] sm:$0xf]
      %v2145 = vld [vmem:[%s17 + $0x38] sm:$0xf]
      %v2146 = vld [vmem:[%s17 + $0x3c] sm:$0xf]
      %2148 = vset.pattern.permute.xlu0 0
      %2149 = vperm.xlu0 %2148, %v2106
      %v2150 = vpop.permute.xlu0 %2149
      %2153 = vset.pattern.permute.xlu0 0
      %2154 = vperm.xlu0 %2153, %v2107
      %v2155 = vpop.permute.xlu0 %2154
      %2158 = vset.pattern.permute.xlu0 0
      %2159 = vperm.xlu0 %2158, %v2108
      %v2160 = vpop.permute.xlu0 %2159
      %2163 = vset.pattern.permute.xlu0 0
      %2164 = vperm.xlu0 %2163, %v2109
      %v2165 = vpop.permute.xlu0 %2164
      %2168 = vset.pattern.permute.xlu0 0
      %2169 = vperm.xlu0 %2168, %v2110
      %v2170 = vpop.permute.xlu0 %2169
      %2173 = vset.pattern.permute.xlu0 0
      %2174 = vperm.xlu0 %2173, %v2111
      %v2175 = vpop.permute.xlu0 %2174
      %2178 = vset.pattern.permute.xlu0 0
      %2179 = vperm.xlu0 %2178, %v2112
      %v2180 = vpop.permute.xlu0 %2179
      %2183 = vset.pattern.permute.xlu0 0
      %2184 = vperm.xlu0 %2183, %v2113
      %v2185 = vpop.permute.xlu0 %2184
      %2188 = vset.pattern.permute.xlu0 0
      %2189 = vperm.xlu0 %2188, %v2114
      %v2190 = vpop.permute.xlu0 %2189
      %2193 = vset.pattern.permute.xlu0 0
      %2194 = vperm.xlu0 %2193, %v2115
      %v2195 = vpop.permute.xlu0 %2194
      %2198 = vset.pattern.permute.xlu0 0
      %2199 = vperm.xlu0 %2198, %v2116
      %v2200 = vpop.permute.xlu0 %2199
      %2203 = vset.pattern.permute.xlu0 0
      %2204 = vperm.xlu0 %2203, %v2117
      %v2205 = vpop.permute.xlu0 %2204
      %2208 = vset.pattern.permute.xlu0 0
      %2209 = vperm.xlu0 %2208, %v2118
      %v2210 = vpop.permute.xlu0 %2209
      %2213 = vset.pattern.permute.xlu0 0
      %2214 = vperm.xlu0 %2213, %v2119
      %v2215 = vpop.permute.xlu0 %2214
      %2218 = vset.pattern.permute.xlu0 0
      %2219 = vperm.xlu0 %2218, %v2120
      %v2220 = vpop.permute.xlu0 %2219
      %2223 = vset.pattern.permute.xlu0 0
      %2224 = vperm.xlu0 %2223, %v2121
      %v2225 = vpop.permute.xlu0 %2224
      %v2243 = vunpack.c.l.b16 %v2131
      %v2244 = vunpack.c.l.b16 %v2132
      %v2245 = vunpack.c.l.b16 %v2133
      %v2246 = vunpack.c.l.b16 %v2134
      %v2247 = vunpack.c.l.b16 %v2135
      %v2248 = vunpack.c.l.b16 %v2136
      %v2249 = vunpack.c.l.b16 %v2137
      %v2250 = vunpack.c.l.b16 %v2138
      %v2251 = vunpack.c.l.b16 %v2139
      %v2252 = vunpack.c.l.b16 %v2140
      %v2253 = vunpack.c.l.b16 %v2141
      %v2254 = vunpack.c.l.b16 %v2142
      %v2255 = vunpack.c.l.b16 %v2143
      %v2256 = vunpack.c.l.b16 %v2144
      %v2257 = vunpack.c.l.b16 %v2145
      %v2258 = vunpack.c.l.b16 %v2146
      %v2259 = vpack.c.b16 %v2244, %v2243
      %v2260 = vpack.c.b16 %v2246, %v2245
      %v2261 = vpack.c.b16 %v2248, %v2247
      %v2262 = vpack.c.b16 %v2250, %v2249
      %v2263 = vpack.c.b16 %v2252, %v2251
      %v2264 = vpack.c.b16 %v2254, %v2253
      %v2265 = vpack.c.b16 %v2256, %v2255
      %v2266 = vpack.c.b16 %v2258, %v2257
      %vm2267 = vcmask 31744
      %v2269 = vsel %vm2267, %v2259, 0
      %v2272 = vsel %vm2267, %v2260, 0
      %v2275 = vsel %vm2267, %v2261, 0
      %v2278 = vsel %vm2267, %v2262, 0
      %v2281 = vsel %vm2267, %v2263, 0
      %v2284 = vsel %vm2267, %v2264, 0
      %v2287 = vsel %vm2267, %v2265, 0
      %v2290 = vsel %vm2267, %v2266, 0
      %vm2292 = vcmask 1041408
      %v2294 = vsel %vm2292, %v2129, 0
      %v2297 = vsel %vm2292, %v2130, 0
      %2299 = vmatpush.bf16.msra.mxu0 0
      %2300 = vmatpush.bf16.msra.mxu0 0
      %2301 = vmatpush.bf16.msra.mxu0 0
      %2302 = vmatpush.bf16.msra.mxu0 0
      %2303 = vmatpush.bf16.msra.mxu0 0
      %2304 = vmatpush.bf16.msra.mxu0 0
      %2305 = vmatpush.bf16.msra.mxu0 0
      %2306 = vmatpush.bf16.msra.mxu0 %v2294
      %2307 = vmatmul.bf16.gmra.mxu0 %v2269
      %v2308 = vpop.f32.mrf.mxu0
      %v2309 = vadd.f32 %v2150, %v2308
      %v2310 = vpop.f32.mrf.mxu0
      %v2311 = vadd.f32 %v2155, %v2310
      %2312 = vmatmul.bf16.gmra.mxu0 %v2272
      %v2313 = vpop.f32.mrf.mxu0
      %v2314 = vadd.f32 %v2160, %v2313
      %v2315 = vpop.f32.mrf.mxu0
      %v2316 = vadd.f32 %v2165, %v2315
      %2317 = vmatmul.bf16.gmra.mxu0 %v2275
      %v2318 = vpop.f32.mrf.mxu0
      %v2319 = vadd.f32 %v2170, %v2318
      %v2320 = vpop.f32.mrf.mxu0
      %v2321 = vadd.f32 %v2175, %v2320
      %2322 = vmatmul.bf16.gmra.mxu0 %v2278
      %v2323 = vpop.f32.mrf.mxu0
      %v2324 = vadd.f32 %v2180, %v2323
      %v2325 = vpop.f32.mrf.mxu0
      %v2326 = vadd.f32 %v2185, %v2325
      %2327 = vmatmul.bf16.gmra.mxu0 %v2281
      %v2328 = vpop.f32.mrf.mxu0
      %v2329 = vadd.f32 %v2190, %v2328
      %v2330 = vpop.f32.mrf.mxu0
      %v2331 = vadd.f32 %v2195, %v2330
      %2332 = vmatmul.bf16.gmra.mxu0 %v2284
      %v2333 = vpop.f32.mrf.mxu0
      %v2334 = vadd.f32 %v2200, %v2333
      %v2335 = vpop.f32.mrf.mxu0
      %v2336 = vadd.f32 %v2205, %v2335
      %2337 = vmatmul.bf16.gmra.mxu0 %v2287
      %v2338 = vpop.f32.mrf.mxu0
      %v2339 = vadd.f32 %v2210, %v2338
      %v2340 = vpop.f32.mrf.mxu0
      %v2341 = vadd.f32 %v2215, %v2340
      %2342 = vmatmul.bf16.gmra.mxu0 %v2290
      %v2343 = vpop.f32.mrf.mxu0
      %v2344 = vadd.f32 %v2220, %v2343
      %v2345 = vpop.f32.mrf.mxu0
      %v2346 = vadd.f32 %v2225, %v2345
      %2347 = vdwg.mxu0
      %2348 = vmatpush.bf16.msra.mxu0 0
      %2349 = vmatpush.bf16.msra.mxu0 0
      %2350 = vmatpush.bf16.msra.mxu0 0
      %2351 = vmatpush.bf16.msra.mxu0 0
      %2352 = vmatpush.bf16.msra.mxu0 0
      %2353 = vmatpush.bf16.msra.mxu0 0
      %2354 = vmatpush.bf16.msra.mxu0 0
      %2355 = vmatpush.bf16.msra.mxu0 %v2297
      %2356 = vmatmul.bf16.gmra.mxu0 %v2269
      %v2357 = vpop.f32.mrf.mxu0
      %v2358 = vadd.f32 %v2150, %v2357
      %v2359 = vpop.f32.mrf.mxu0
      %v2360 = vadd.f32 %v2155, %v2359
      %2361 = vmatmul.bf16.gmra.mxu0 %v2272
      %v2362 = vpop.f32.mrf.mxu0
      %v2363 = vadd.f32 %v2160, %v2362
      %v2364 = vpop.f32.mrf.mxu0
      %v2365 = vadd.f32 %v2165, %v2364
      %2366 = vmatmul.bf16.gmra.mxu0 %v2275
      %v2367 = vpop.f32.mrf.mxu0
      %v2368 = vadd.f32 %v2170, %v2367
      %v2369 = vpop.f32.mrf.mxu0
      %v2370 = vadd.f32 %v2175, %v2369
      %2371 = vmatmul.bf16.gmra.mxu0 %v2278
      %v2372 = vpop.f32.mrf.mxu0
      %v2373 = vadd.f32 %v2180, %v2372
      %v2374 = vpop.f32.mrf.mxu0
      %v2375 = vadd.f32 %v2185, %v2374
      %2376 = vmatmul.bf16.gmra.mxu0 %v2281
      %v2377 = vpop.f32.mrf.mxu0
      %v2378 = vadd.f32 %v2190, %v2377
      %v2379 = vpop.f32.mrf.mxu0
      %v2380 = vadd.f32 %v2195, %v2379
      %2381 = vmatmul.bf16.gmra.mxu0 %v2284
      %v2382 = vpop.f32.mrf.mxu0
      %v2383 = vadd.f32 %v2200, %v2382
      %v2384 = vpop.f32.mrf.mxu0
      %v2385 = vadd.f32 %v2205, %v2384
      %2386 = vmatmul.bf16.gmra.mxu0 %v2287
      %v2387 = vpop.f32.mrf.mxu0
      %v2388 = vadd.f32 %v2210, %v2387
      %v2389 = vpop.f32.mrf.mxu0
      %v2390 = vadd.f32 %v2215, %v2389
      %2391 = vmatmul.bf16.gmra.mxu0 %v2290
      %v2392 = vpop.f32.mrf.mxu0
      %v2393 = vadd.f32 %v2220, %v2392
      %v2394 = vpop.f32.mrf.mxu0
      %v2395 = vadd.f32 %v2225, %v2394
      %2396 = vdwg.mxu0
      %v2397 = vxor.u32 %v2309, 2147483648
      %v2398 = vxor.u32 %v2358, 2147483648
      %v2399 = vxor.u32 %v2311, 2147483648
      %v2400 = vxor.u32 %v2360, 2147483648
      %v2401 = vxor.u32 %v2314, 2147483648
      %v2402 = vxor.u32 %v2363, 2147483648
      %v2403 = vxor.u32 %v2316, 2147483648
      %v2404 = vxor.u32 %v2365, 2147483648
      %v2405 = vxor.u32 %v2319, 2147483648
      %v2406 = vxor.u32 %v2368, 2147483648
      %v2407 = vxor.u32 %v2321, 2147483648
      %v2408 = vxor.u32 %v2370, 2147483648
      %v2409 = vxor.u32 %v2324, 2147483648
      %v2410 = vxor.u32 %v2373, 2147483648
      %v2411 = vxor.u32 %v2326, 2147483648
      %v2412 = vxor.u32 %v2375, 2147483648
      %v2413 = vxor.u32 %v2329, 2147483648
      %v2414 = vxor.u32 %v2378, 2147483648
      %v2415 = vxor.u32 %v2331, 2147483648
      %v2416 = vxor.u32 %v2380, 2147483648
      %v2417 = vxor.u32 %v2334, 2147483648
      %v2418 = vxor.u32 %v2383, 2147483648
      %v2419 = vxor.u32 %v2336, 2147483648
      %v2420 = vxor.u32 %v2385, 2147483648
      %v2421 = vxor.u32 %v2339, 2147483648
      %v2422 = vxor.u32 %v2388, 2147483648
      %v2423 = vxor.u32 %v2341, 2147483648
      %v2424 = vxor.u32 %v2390, 2147483648
      %v2425 = vxor.u32 %v2344, 2147483648
      %v2426 = vxor.u32 %v2393, 2147483648
      %v2427 = vxor.u32 %v2346, 2147483648
      %v2428 = vxor.u32 %v2395, 2147483648
      %v2429 = vmul.f32 %v2397, 1.442695
      %v2430 = vpow.pop %v2429
      %v2431 = vmul.f32 %v2398, 1.442695
      %v2432 = vpow.pop %v2431
      %v2433 = vmul.f32 %v2399, 1.442695
      %v2434 = vpow.pop %v2433
      %v2435 = vmul.f32 %v2400, 1.442695
      %v2436 = vpow.pop %v2435
      %v2437 = vmul.f32 %v2401, 1.442695
      %v2438 = vpow.pop %v2437
      %v2439 = vmul.f32 %v2402, 1.442695
      %v2440 = vpow.pop %v2439
      %v2441 = vmul.f32 %v2403, 1.442695
      %v2442 = vpow.pop %v2441
      %v2443 = vmul.f32 %v2404, 1.442695
      %v2444 = vpow.pop %v2443
      %v2445 = vmul.f32 %v2405, 1.442695
      %v2446 = vpow.pop %v2445
      %v2447 = vmul.f32 %v2406, 1.442695
      %v2448 = vpow.pop %v2447
      %v2449 = vmul.f32 %v2407, 1.442695
      %v2450 = vpow.pop %v2449
      %v2451 = vmul.f32 %v2408, 1.442695
      %v2452 = vpow.pop %v2451
      %v2453 = vmul.f32 %v2409, 1.442695
      %v2454 = vpow.pop %v2453
      %v2455 = vmul.f32 %v2410, 1.442695
      %v2456 = vpow.pop %v2455
      %v2457 = vmul.f32 %v2411, 1.442695
      %v2458 = vpow.pop %v2457
      %v2459 = vmul.f32 %v2412, 1.442695
      %v2460 = vpow.pop %v2459
      %v2461 = vmul.f32 %v2413, 1.442695
      %v2462 = vpow.pop %v2461
      %v2463 = vmul.f32 %v2414, 1.442695
      %v2464 = vpow.pop %v2463
      %v2465 = vmul.f32 %v2415, 1.442695
      %v2466 = vpow.pop %v2465
      %v2467 = vmul.f32 %v2416, 1.442695
      %v2468 = vpow.pop %v2467
      %v2469 = vmul.f32 %v2417, 1.442695
      %v2470 = vpow.pop %v2469
      %v2471 = vmul.f32 %v2418, 1.442695
      %v2472 = vpow.pop %v2471
      %v2473 = vmul.f32 %v2419, 1.442695
      %v2474 = vpow.pop %v2473
      %v2475 = vmul.f32 %v2420, 1.442695
      %v2476 = vpow.pop %v2475
      %v2477 = vmul.f32 %v2421, 1.442695
      %v2478 = vpow.pop %v2477
      %v2479 = vmul.f32 %v2422, 1.442695
      %v2480 = vpow.pop %v2479
      %v2481 = vmul.f32 %v2423, 1.442695
      %v2482 = vpow.pop %v2481
      %v2483 = vmul.f32 %v2424, 1.442695
      %v2484 = vpow.pop %v2483
      %v2485 = vmul.f32 %v2425, 1.442695
      %v2486 = vpow.pop %v2485
      %v2487 = vmul.f32 %v2426, 1.442695
      %v2488 = vpow.pop %v2487
      %v2489 = vmul.f32 %v2427, 1.442695
      %v2490 = vpow.pop %v2489
      %v2491 = vmul.f32 %v2428, 1.442695
      %v2492 = vpow.pop %v2491
      %v2493 = vadd.f32 %v2430, 1.0
      %v2494 = vadd.f32 %v2432, 1.0
      %v2495 = vadd.f32 %v2434, 1.0
      %v2496 = vadd.f32 %v2436, 1.0
      %v2497 = vadd.f32 %v2438, 1.0
      %v2498 = vadd.f32 %v2440, 1.0
      %v2499 = vadd.f32 %v2442, 1.0
      %v2500 = vadd.f32 %v2444, 1.0
      %v2501 = vadd.f32 %v2446, 1.0
      %v2502 = vadd.f32 %v2448, 1.0
      %v2503 = vadd.f32 %v2450, 1.0
      %v2504 = vadd.f32 %v2452, 1.0
      %v2505 = vadd.f32 %v2454, 1.0
      %v2506 = vadd.f32 %v2456, 1.0
      %v2507 = vadd.f32 %v2458, 1.0
      %v2508 = vadd.f32 %v2460, 1.0
      %v2509 = vadd.f32 %v2462, 1.0
      %v2510 = vadd.f32 %v2464, 1.0
      %v2511 = vadd.f32 %v2466, 1.0
      %v2512 = vadd.f32 %v2468, 1.0
      %v2513 = vadd.f32 %v2470, 1.0
      %v2514 = vadd.f32 %v2472, 1.0
      %v2515 = vadd.f32 %v2474, 1.0
      %v2516 = vadd.f32 %v2476, 1.0
      %v2517 = vadd.f32 %v2478, 1.0
      %v2518 = vadd.f32 %v2480, 1.0
      %v2519 = vadd.f32 %v2482, 1.0
      %v2520 = vadd.f32 %v2484, 1.0
      %v2521 = vadd.f32 %v2486, 1.0
      %v2522 = vadd.f32 %v2488, 1.0
      %v2523 = vadd.f32 %v2490, 1.0
      %v2524 = vadd.f32 %v2492, 1.0
      %v2525 = vrcp.pop %v2493
      %v2526 = vmul.f32 %v2493, %v2525
      %v2527 = vsub.f32 1.0, %v2526
      %v2528 = vmul.f32 %v2525, %v2527
      %v2529 = vadd.f32 %v2525, %v2528
      %vm2530 = vweird.f32 %v2493
      %vm2531 = vweird.f32 %v2525
      %vm2532 = vmor %vm2530, %vm2531
      %v2533 = vsel %vm2532, %v2525, %v2529
      %v2534 = vand.u32 2147483647, %v2493
      %vm2535 = vcmp.eq.f32.partialorder %v2534, 8.507059e+37
      %v2536 = vand.u32 %v2493, 2147483648
      %v2537 = vor.u32 1.1754944e-38, %v2536
      %v2538 = vsel %vm2535, %v2537, %v2533
      %v2539 = vmul.f32 1.0, %v2538
      %v2540 = vrcp.pop %v2494
      %v2541 = vmul.f32 %v2494, %v2540
      %v2542 = vsub.f32 1.0, %v2541
      %v2543 = vmul.f32 %v2540, %v2542
      %v2544 = vadd.f32 %v2540, %v2543
      %vm2545 = vweird.f32 %v2494
      %vm2546 = vweird.f32 %v2540
      %vm2547 = vmor %vm2545, %vm2546
      %v2548 = vsel %vm2547, %v2540, %v2544
      %v2549 = vand.u32 2147483647, %v2494
      %vm2550 = vcmp.eq.f32.partialorder %v2549, 8.507059e+37
      %v2551 = vand.u32 %v2494, 2147483648
      %v2552 = vor.u32 1.1754944e-38, %v2551
      %v2553 = vsel %vm2550, %v2552, %v2548
      %v2554 = vmul.f32 1.0, %v2553
      %v2555 = vrcp.pop %v2495
      %v2556 = vmul.f32 %v2495, %v2555
      %v2557 = vsub.f32 1.0, %v2556
      %v2558 = vmul.f32 %v2555, %v2557
      %v2559 = vadd.f32 %v2555, %v2558
      %vm2560 = vweird.f32 %v2495
      %vm2561 = vweird.f32 %v2555
      %vm2562 = vmor %vm2560, %vm2561
      %v2563 = vsel %vm2562, %v2555, %v2559
      %v2564 = vand.u32 2147483647, %v2495
      %vm2565 = vcmp.eq.f32.partialorder %v2564, 8.507059e+37
      %v2566 = vand.u32 %v2495, 2147483648
      %v2567 = vor.u32 1.1754944e-38, %v2566
      %v2568 = vsel %vm2565, %v2567, %v2563
      %v2569 = vmul.f32 1.0, %v2568
      %v2570 = vrcp.pop %v2496
      %v2571 = vmul.f32 %v2496, %v2570
      %v2572 = vsub.f32 1.0, %v2571
      %v2573 = vmul.f32 %v2570, %v2572
      %v2574 = vadd.f32 %v2570, %v2573
      %vm2575 = vweird.f32 %v2496
      %vm2576 = vweird.f32 %v2570
      %vm2577 = vmor %vm2575, %vm2576
      %v2578 = vsel %vm2577, %v2570, %v2574
      %v2579 = vand.u32 2147483647, %v2496
      %vm2580 = vcmp.eq.f32.partialorder %v2579, 8.507059e+37
      %v2581 = vand.u32 %v2496, 2147483648
      %v2582 = vor.u32 1.1754944e-38, %v2581
      %v2583 = vsel %vm2580, %v2582, %v2578
      %v2584 = vmul.f32 1.0, %v2583
      %v2585 = vrcp.pop %v2497
      %v2586 = vmul.f32 %v2497, %v2585
      %v2587 = vsub.f32 1.0, %v2586
      %v2588 = vmul.f32 %v2585, %v2587
      %v2589 = vadd.f32 %v2585, %v2588
      %vm2590 = vweird.f32 %v2497
      %vm2591 = vweird.f32 %v2585
      %vm2592 = vmor %vm2590, %vm2591
      %v2593 = vsel %vm2592, %v2585, %v2589
      %v2594 = vand.u32 2147483647, %v2497
      %vm2595 = vcmp.eq.f32.partialorder %v2594, 8.507059e+37
      %v2596 = vand.u32 %v2497, 2147483648
      %v2597 = vor.u32 1.1754944e-38, %v2596
      %v2598 = vsel %vm2595, %v2597, %v2593
      %v2599 = vmul.f32 1.0, %v2598
      %v2600 = vrcp.pop %v2498
      %v2601 = vmul.f32 %v2498, %v2600
      %v2602 = vsub.f32 1.0, %v2601
      %v2603 = vmul.f32 %v2600, %v2602
      %v2604 = vadd.f32 %v2600, %v2603
      %vm2605 = vweird.f32 %v2498
      %vm2606 = vweird.f32 %v2600
      %vm2607 = vmor %vm2605, %vm2606
      %v2608 = vsel %vm2607, %v2600, %v2604
      %v2609 = vand.u32 2147483647, %v2498
      %vm2610 = vcmp.eq.f32.partialorder %v2609, 8.507059e+37
      %v2611 = vand.u32 %v2498, 2147483648
      %v2612 = vor.u32 1.1754944e-38, %v2611
      %v2613 = vsel %vm2610, %v2612, %v2608
      %v2614 = vmul.f32 1.0, %v2613
      %v2615 = vrcp.pop %v2499
      %v2616 = vmul.f32 %v2499, %v2615
      %v2617 = vsub.f32 1.0, %v2616
      %v2618 = vmul.f32 %v2615, %v2617
      %v2619 = vadd.f32 %v2615, %v2618
      %vm2620 = vweird.f32 %v2499
      %vm2621 = vweird.f32 %v2615
      %vm2622 = vmor %vm2620, %vm2621
      %v2623 = vsel %vm2622, %v2615, %v2619
      %v2624 = vand.u32 2147483647, %v2499
      %vm2625 = vcmp.eq.f32.partialorder %v2624, 8.507059e+37
      %v2626 = vand.u32 %v2499, 2147483648
      %v2627 = vor.u32 1.1754944e-38, %v2626
      %v2628 = vsel %vm2625, %v2627, %v2623
      %v2629 = vmul.f32 1.0, %v2628
      %v2630 = vrcp.pop %v2500
      %v2631 = vmul.f32 %v2500, %v2630
      %v2632 = vsub.f32 1.0, %v2631
      %v2633 = vmul.f32 %v2630, %v2632
      %v2634 = vadd.f32 %v2630, %v2633
      %vm2635 = vweird.f32 %v2500
      %vm2636 = vweird.f32 %v2630
      %vm2637 = vmor %vm2635, %vm2636
      %v2638 = vsel %vm2637, %v2630, %v2634
      %v2639 = vand.u32 2147483647, %v2500
      %vm2640 = vcmp.eq.f32.partialorder %v2639, 8.507059e+37
      %v2641 = vand.u32 %v2500, 2147483648
      %v2642 = vor.u32 1.1754944e-38, %v2641
      %v2643 = vsel %vm2640, %v2642, %v2638
      %v2644 = vmul.f32 1.0, %v2643
      %v2645 = vrcp.pop %v2501
      %v2646 = vmul.f32 %v2501, %v2645
      %v2647 = vsub.f32 1.0, %v2646
      %v2648 = vmul.f32 %v2645, %v2647
      %v2649 = vadd.f32 %v2645, %v2648
      %vm2650 = vweird.f32 %v2501
      %vm2651 = vweird.f32 %v2645
      %vm2652 = vmor %vm2650, %vm2651
      %v2653 = vsel %vm2652, %v2645, %v2649
      %v2654 = vand.u32 2147483647, %v2501
      %vm2655 = vcmp.eq.f32.partialorder %v2654, 8.507059e+37
      %v2656 = vand.u32 %v2501, 2147483648
      %v2657 = vor.u32 1.1754944e-38, %v2656
      %v2658 = vsel %vm2655, %v2657, %v2653
      %v2659 = vmul.f32 1.0, %v2658
      %v2660 = vrcp.pop %v2502
      %v2661 = vmul.f32 %v2502, %v2660
      %v2662 = vsub.f32 1.0, %v2661
      %v2663 = vmul.f32 %v2660, %v2662
      %v2664 = vadd.f32 %v2660, %v2663
      %vm2665 = vweird.f32 %v2502
      %vm2666 = vweird.f32 %v2660
      %vm2667 = vmor %vm2665, %vm2666
      %v2668 = vsel %vm2667, %v2660, %v2664
      %v2669 = vand.u32 2147483647, %v2502
      %vm2670 = vcmp.eq.f32.partialorder %v2669, 8.507059e+37
      %v2671 = vand.u32 %v2502, 2147483648
      %v2672 = vor.u32 1.1754944e-38, %v2671
      %v2673 = vsel %vm2670, %v2672, %v2668
      %v2674 = vmul.f32 1.0, %v2673
      %v2675 = vrcp.pop %v2503
      %v2676 = vmul.f32 %v2503, %v2675
      %v2677 = vsub.f32 1.0, %v2676
      %v2678 = vmul.f32 %v2675, %v2677
      %v2679 = vadd.f32 %v2675, %v2678
      %vm2680 = vweird.f32 %v2503
      %vm2681 = vweird.f32 %v2675
      %vm2682 = vmor %vm2680, %vm2681
      %v2683 = vsel %vm2682, %v2675, %v2679
      %v2684 = vand.u32 2147483647, %v2503
      %vm2685 = vcmp.eq.f32.partialorder %v2684, 8.507059e+37
      %v2686 = vand.u32 %v2503, 2147483648
      %v2687 = vor.u32 1.1754944e-38, %v2686
      %v2688 = vsel %vm2685, %v2687, %v2683
      %v2689 = vmul.f32 1.0, %v2688
      %v2690 = vrcp.pop %v2504
      %v2691 = vmul.f32 %v2504, %v2690
      %v2692 = vsub.f32 1.0, %v2691
      %v2693 = vmul.f32 %v2690, %v2692
      %v2694 = vadd.f32 %v2690, %v2693
      %vm2695 = vweird.f32 %v2504
      %vm2696 = vweird.f32 %v2690
      %vm2697 = vmor %vm2695, %vm2696
      %v2698 = vsel %vm2697, %v2690, %v2694
      %v2699 = vand.u32 2147483647, %v2504
      %vm2700 = vcmp.eq.f32.partialorder %v2699, 8.507059e+37
      %v2701 = vand.u32 %v2504, 2147483648
      %v2702 = vor.u32 1.1754944e-38, %v2701
      %v2703 = vsel %vm2700, %v2702, %v2698
      %v2704 = vmul.f32 1.0, %v2703
      %v2705 = vrcp.pop %v2505
      %v2706 = vmul.f32 %v2505, %v2705
      %v2707 = vsub.f32 1.0, %v2706
      %v2708 = vmul.f32 %v2705, %v2707
      %v2709 = vadd.f32 %v2705, %v2708
      %vm2710 = vweird.f32 %v2505
      %vm2711 = vweird.f32 %v2705
      %vm2712 = vmor %vm2710, %vm2711
      %v2713 = vsel %vm2712, %v2705, %v2709
      %v2714 = vand.u32 2147483647, %v2505
      %vm2715 = vcmp.eq.f32.partialorder %v2714, 8.507059e+37
      %v2716 = vand.u32 %v2505, 2147483648
      %v2717 = vor.u32 1.1754944e-38, %v2716
      %v2718 = vsel %vm2715, %v2717, %v2713
      %v2719 = vmul.f32 1.0, %v2718
      %v2720 = vrcp.pop %v2506
      %v2721 = vmul.f32 %v2506, %v2720
      %v2722 = vsub.f32 1.0, %v2721
      %v2723 = vmul.f32 %v2720, %v2722
      %v2724 = vadd.f32 %v2720, %v2723
      %vm2725 = vweird.f32 %v2506
      %vm2726 = vweird.f32 %v2720
      %vm2727 = vmor %vm2725, %vm2726
      %v2728 = vsel %vm2727, %v2720, %v2724
      %v2729 = vand.u32 2147483647, %v2506
      %vm2730 = vcmp.eq.f32.partialorder %v2729, 8.507059e+37
      %v2731 = vand.u32 %v2506, 2147483648
      %v2732 = vor.u32 1.1754944e-38, %v2731
      %v2733 = vsel %vm2730, %v2732, %v2728
      %v2734 = vmul.f32 1.0, %v2733
      %v2735 = vrcp.pop %v2507
      %v2736 = vmul.f32 %v2507, %v2735
      %v2737 = vsub.f32 1.0, %v2736
      %v2738 = vmul.f32 %v2735, %v2737
      %v2739 = vadd.f32 %v2735, %v2738
      %vm2740 = vweird.f32 %v2507
      %vm2741 = vweird.f32 %v2735
      %vm2742 = vmor %vm2740, %vm2741
      %v2743 = vsel %vm2742, %v2735, %v2739
      %v2744 = vand.u32 2147483647, %v2507
      %vm2745 = vcmp.eq.f32.partialorder %v2744, 8.507059e+37
      %v2746 = vand.u32 %v2507, 2147483648
      %v2747 = vor.u32 1.1754944e-38, %v2746
      %v2748 = vsel %vm2745, %v2747, %v2743
      %v2749 = vmul.f32 1.0, %v2748
      %v2750 = vrcp.pop %v2508
      %v2751 = vmul.f32 %v2508, %v2750
      %v2752 = vsub.f32 1.0, %v2751
      %v2753 = vmul.f32 %v2750, %v2752
      %v2754 = vadd.f32 %v2750, %v2753
      %vm2755 = vweird.f32 %v2508
      %vm2756 = vweird.f32 %v2750
      %vm2757 = vmor %vm2755, %vm2756
      %v2758 = vsel %vm2757, %v2750, %v2754
      %v2759 = vand.u32 2147483647, %v2508
      %vm2760 = vcmp.eq.f32.partialorder %v2759, 8.507059e+37
      %v2761 = vand.u32 %v2508, 2147483648
      %v2762 = vor.u32 1.1754944e-38, %v2761
      %v2763 = vsel %vm2760, %v2762, %v2758
      %v2764 = vmul.f32 1.0, %v2763
      %v2765 = vrcp.pop %v2509
      %v2766 = vmul.f32 %v2509, %v2765
      %v2767 = vsub.f32 1.0, %v2766
      %v2768 = vmul.f32 %v2765, %v2767
      %v2769 = vadd.f32 %v2765, %v2768
      %vm2770 = vweird.f32 %v2509
      %vm2771 = vweird.f32 %v2765
      %vm2772 = vmor %vm2770, %vm2771
      %v2773 = vsel %vm2772, %v2765, %v2769
      %v2774 = vand.u32 2147483647, %v2509
      %vm2775 = vcmp.eq.f32.partialorder %v2774, 8.507059e+37
      %v2776 = vand.u32 %v2509, 2147483648
      %v2777 = vor.u32 1.1754944e-38, %v2776
      %v2778 = vsel %vm2775, %v2777, %v2773
      %v2779 = vmul.f32 1.0, %v2778
      %v2780 = vrcp.pop %v2510
      %v2781 = vmul.f32 %v2510, %v2780
      %v2782 = vsub.f32 1.0, %v2781
      %v2783 = vmul.f32 %v2780, %v2782
      %v2784 = vadd.f32 %v2780, %v2783
      %vm2785 = vweird.f32 %v2510
      %vm2786 = vweird.f32 %v2780
      %vm2787 = vmor %vm2785, %vm2786
      %v2788 = vsel %vm2787, %v2780, %v2784
      %v2789 = vand.u32 2147483647, %v2510
      %vm2790 = vcmp.eq.f32.partialorder %v2789, 8.507059e+37
      %v2791 = vand.u32 %v2510, 2147483648
      %v2792 = vor.u32 1.1754944e-38, %v2791
      %v2793 = vsel %vm2790, %v2792, %v2788
      %v2794 = vmul.f32 1.0, %v2793
      %v2795 = vrcp.pop %v2511
      %v2796 = vmul.f32 %v2511, %v2795
      %v2797 = vsub.f32 1.0, %v2796
      %v2798 = vmul.f32 %v2795, %v2797
      %v2799 = vadd.f32 %v2795, %v2798
      %vm2800 = vweird.f32 %v2511
      %vm2801 = vweird.f32 %v2795
      %vm2802 = vmor %vm2800, %vm2801
      %v2803 = vsel %vm2802, %v2795, %v2799
      %v2804 = vand.u32 2147483647, %v2511
      %vm2805 = vcmp.eq.f32.partialorder %v2804, 8.507059e+37
      %v2806 = vand.u32 %v2511, 2147483648
      %v2807 = vor.u32 1.1754944e-38, %v2806
      %v2808 = vsel %vm2805, %v2807, %v2803
      %v2809 = vmul.f32 1.0, %v2808
      %v2810 = vrcp.pop %v2512
      %v2811 = vmul.f32 %v2512, %v2810
      %v2812 = vsub.f32 1.0, %v2811
      %v2813 = vmul.f32 %v2810, %v2812
      %v2814 = vadd.f32 %v2810, %v2813
      %vm2815 = vweird.f32 %v2512
      %vm2816 = vweird.f32 %v2810
      %vm2817 = vmor %vm2815, %vm2816
      %v2818 = vsel %vm2817, %v2810, %v2814
      %v2819 = vand.u32 2147483647, %v2512
      %vm2820 = vcmp.eq.f32.partialorder %v2819, 8.507059e+37
      %v2821 = vand.u32 %v2512, 2147483648
      %v2822 = vor.u32 1.1754944e-38, %v2821
      %v2823 = vsel %vm2820, %v2822, %v2818
      %v2824 = vmul.f32 1.0, %v2823
      %v2825 = vrcp.pop %v2513
      %v2826 = vmul.f32 %v2513, %v2825
      %v2827 = vsub.f32 1.0, %v2826
      %v2828 = vmul.f32 %v2825, %v2827
      %v2829 = vadd.f32 %v2825, %v2828
      %vm2830 = vweird.f32 %v2513
      %vm2831 = vweird.f32 %v2825
      %vm2832 = vmor %vm2830, %vm2831
      %v2833 = vsel %vm2832, %v2825, %v2829
      %v2834 = vand.u32 2147483647, %v2513
      %vm2835 = vcmp.eq.f32.partialorder %v2834, 8.507059e+37
      %v2836 = vand.u32 %v2513, 2147483648
      %v2837 = vor.u32 1.1754944e-38, %v2836
      %v2838 = vsel %vm2835, %v2837, %v2833
      %v2839 = vmul.f32 1.0, %v2838
      %v2840 = vrcp.pop %v2514
      %v2841 = vmul.f32 %v2514, %v2840
      %v2842 = vsub.f32 1.0, %v2841
      %v2843 = vmul.f32 %v2840, %v2842
      %v2844 = vadd.f32 %v2840, %v2843
      %vm2845 = vweird.f32 %v2514
      %vm2846 = vweird.f32 %v2840
      %vm2847 = vmor %vm2845, %vm2846
      %v2848 = vsel %vm2847, %v2840, %v2844
      %v2849 = vand.u32 2147483647, %v2514
      %vm2850 = vcmp.eq.f32.partialorder %v2849, 8.507059e+37
      %v2851 = vand.u32 %v2514, 2147483648
      %v2852 = vor.u32 1.1754944e-38, %v2851
      %v2853 = vsel %vm2850, %v2852, %v2848
      %v2854 = vmul.f32 1.0, %v2853
      %v2855 = vrcp.pop %v2515
      %v2856 = vmul.f32 %v2515, %v2855
      %v2857 = vsub.f32 1.0, %v2856
      %v2858 = vmul.f32 %v2855, %v2857
      %v2859 = vadd.f32 %v2855, %v2858
      %vm2860 = vweird.f32 %v2515
      %vm2861 = vweird.f32 %v2855
      %vm2862 = vmor %vm2860, %vm2861
      %v2863 = vsel %vm2862, %v2855, %v2859
      %v2864 = vand.u32 2147483647, %v2515
      %vm2865 = vcmp.eq.f32.partialorder %v2864, 8.507059e+37
      %v2866 = vand.u32 %v2515, 2147483648
      %v2867 = vor.u32 1.1754944e-38, %v2866
      %v2868 = vsel %vm2865, %v2867, %v2863
      %v2869 = vmul.f32 1.0, %v2868
      %v2870 = vrcp.pop %v2516
      %v2871 = vmul.f32 %v2516, %v2870
      %v2872 = vsub.f32 1.0, %v2871
      %v2873 = vmul.f32 %v2870, %v2872
      %v2874 = vadd.f32 %v2870, %v2873
      %vm2875 = vweird.f32 %v2516
      %vm2876 = vweird.f32 %v2870
      %vm2877 = vmor %vm2875, %vm2876
      %v2878 = vsel %vm2877, %v2870, %v2874
      %v2879 = vand.u32 2147483647, %v2516
      %vm2880 = vcmp.eq.f32.partialorder %v2879, 8.507059e+37
      %v2881 = vand.u32 %v2516, 2147483648
      %v2882 = vor.u32 1.1754944e-38, %v2881
      %v2883 = vsel %vm2880, %v2882, %v2878
      %v2884 = vmul.f32 1.0, %v2883
      %v2885 = vrcp.pop %v2517
      %v2886 = vmul.f32 %v2517, %v2885
      %v2887 = vsub.f32 1.0, %v2886
      %v2888 = vmul.f32 %v2885, %v2887
      %v2889 = vadd.f32 %v2885, %v2888
      %vm2890 = vweird.f32 %v2517
      %vm2891 = vweird.f32 %v2885
      %vm2892 = vmor %vm2890, %vm2891
      %v2893 = vsel %vm2892, %v2885, %v2889
      %v2894 = vand.u32 2147483647, %v2517
      %vm2895 = vcmp.eq.f32.partialorder %v2894, 8.507059e+37
      %v2896 = vand.u32 %v2517, 2147483648
      %v2897 = vor.u32 1.1754944e-38, %v2896
      %v2898 = vsel %vm2895, %v2897, %v2893
      %v2899 = vmul.f32 1.0, %v2898
      %v2900 = vrcp.pop %v2518
      %v2901 = vmul.f32 %v2518, %v2900
      %v2902 = vsub.f32 1.0, %v2901
      %v2903 = vmul.f32 %v2900, %v2902
      %v2904 = vadd.f32 %v2900, %v2903
      %vm2905 = vweird.f32 %v2518
      %vm2906 = vweird.f32 %v2900
      %vm2907 = vmor %vm2905, %vm2906
      %v2908 = vsel %vm2907, %v2900, %v2904
      %v2909 = vand.u32 2147483647, %v2518
      %vm2910 = vcmp.eq.f32.partialorder %v2909, 8.507059e+37
      %v2911 = vand.u32 %v2518, 2147483648
      %v2912 = vor.u32 1.1754944e-38, %v2911
      %v2913 = vsel %vm2910, %v2912, %v2908
      %v2914 = vmul.f32 1.0, %v2913
      %v2915 = vrcp.pop %v2519
      %v2916 = vmul.f32 %v2519, %v2915
      %v2917 = vsub.f32 1.0, %v2916
      %v2918 = vmul.f32 %v2915, %v2917
      %v2919 = vadd.f32 %v2915, %v2918
      %vm2920 = vweird.f32 %v2519
      %vm2921 = vweird.f32 %v2915
      %vm2922 = vmor %vm2920, %vm2921
      %v2923 = vsel %vm2922, %v2915, %v2919
      %v2924 = vand.u32 2147483647, %v2519
      %vm2925 = vcmp.eq.f32.partialorder %v2924, 8.507059e+37
      %v2926 = vand.u32 %v2519, 2147483648
      %v2927 = vor.u32 1.1754944e-38, %v2926
      %v2928 = vsel %vm2925, %v2927, %v2923
      %v2929 = vmul.f32 1.0, %v2928
      %v2930 = vrcp.pop %v2520
      %v2931 = vmul.f32 %v2520, %v2930
      %v2932 = vsub.f32 1.0, %v2931
      %v2933 = vmul.f32 %v2930, %v2932
      %v2934 = vadd.f32 %v2930, %v2933
      %vm2935 = vweird.f32 %v2520
      %vm2936 = vweird.f32 %v2930
      %vm2937 = vmor %vm2935, %vm2936
      %v2938 = vsel %vm2937, %v2930, %v2934
      %v2939 = vand.u32 2147483647, %v2520
      %vm2940 = vcmp.eq.f32.partialorder %v2939, 8.507059e+37
      %v2941 = vand.u32 %v2520, 2147483648
      %v2942 = vor.u32 1.1754944e-38, %v2941
      %v2943 = vsel %vm2940, %v2942, %v2938
      %v2944 = vmul.f32 1.0, %v2943
      %v2945 = vrcp.pop %v2521
      %v2946 = vmul.f32 %v2521, %v2945
      %v2947 = vsub.f32 1.0, %v2946
      %v2948 = vmul.f32 %v2945, %v2947
      %v2949 = vadd.f32 %v2945, %v2948
      %vm2950 = vweird.f32 %v2521
      %vm2951 = vweird.f32 %v2945
      %vm2952 = vmor %vm2950, %vm2951
      %v2953 = vsel %vm2952, %v2945, %v2949
      %v2954 = vand.u32 2147483647, %v2521
      %vm2955 = vcmp.eq.f32.partialorder %v2954, 8.507059e+37
      %v2956 = vand.u32 %v2521, 2147483648
      %v2957 = vor.u32 1.1754944e-38, %v2956
      %v2958 = vsel %vm2955, %v2957, %v2953
      %v2959 = vmul.f32 1.0, %v2958
      %v2960 = vrcp.pop %v2522
      %v2961 = vmul.f32 %v2522, %v2960
      %v2962 = vsub.f32 1.0, %v2961
      %v2963 = vmul.f32 %v2960, %v2962
      %v2964 = vadd.f32 %v2960, %v2963
      %vm2965 = vweird.f32 %v2522
      %vm2966 = vweird.f32 %v2960
      %vm2967 = vmor %vm2965, %vm2966
      %v2968 = vsel %vm2967, %v2960, %v2964
      %v2969 = vand.u32 2147483647, %v2522
      %vm2970 = vcmp.eq.f32.partialorder %v2969, 8.507059e+37
      %v2971 = vand.u32 %v2522, 2147483648
      %v2972 = vor.u32 1.1754944e-38, %v2971
      %v2973 = vsel %vm2970, %v2972, %v2968
      %v2974 = vmul.f32 1.0, %v2973
      %v2975 = vrcp.pop %v2523
      %v2976 = vmul.f32 %v2523, %v2975
      %v2977 = vsub.f32 1.0, %v2976
      %v2978 = vmul.f32 %v2975, %v2977
      %v2979 = vadd.f32 %v2975, %v2978
      %vm2980 = vweird.f32 %v2523
      %vm2981 = vweird.f32 %v2975
      %vm2982 = vmor %vm2980, %vm2981
      %v2983 = vsel %vm2982, %v2975, %v2979
      %v2984 = vand.u32 2147483647, %v2523
      %vm2985 = vcmp.eq.f32.partialorder %v2984, 8.507059e+37
      %v2986 = vand.u32 %v2523, 2147483648
      %v2987 = vor.u32 1.1754944e-38, %v2986
      %v2988 = vsel %vm2985, %v2987, %v2983
      %v2989 = vmul.f32 1.0, %v2988
      %v2990 = vrcp.pop %v2524
      %v2991 = vmul.f32 %v2524, %v2990
      %v2992 = vsub.f32 1.0, %v2991
      %v2993 = vmul.f32 %v2990, %v2992
      %v2994 = vadd.f32 %v2990, %v2993
      %vm2995 = vweird.f32 %v2524
      %vm2996 = vweird.f32 %v2990
      %vm2997 = vmor %vm2995, %vm2996
      %v2998 = vsel %vm2997, %v2990, %v2994
      %v2999 = vand.u32 2147483647, %v2524
      %vm3000 = vcmp.eq.f32.partialorder %v2999, 8.507059e+37
      %v3001 = vand.u32 %v2524, 2147483648
      %v3002 = vor.u32 1.1754944e-38, %v3001
      %v3003 = vsel %vm3000, %v3002, %v2998
      %v3004 = vmul.f32 1.0, %v3003
      %v3005 = vmul.f32 %v2309, %v2539
      %v3006 = vmul.f32 %v2358, %v2554
      %v3007 = vmul.f32 %v2311, %v2569
      %v3008 = vmul.f32 %v2360, %v2584
      %v3009 = vmul.f32 %v2314, %v2599
      %v3010 = vmul.f32 %v2363, %v2614
      %v3011 = vmul.f32 %v2316, %v2629
      %v3012 = vmul.f32 %v2365, %v2644
      %v3013 = vmul.f32 %v2319, %v2659
      %v3014 = vmul.f32 %v2368, %v2674
      %v3015 = vmul.f32 %v2321, %v2689
      %v3016 = vmul.f32 %v2370, %v2704
      %v3017 = vmul.f32 %v2324, %v2719
      %v3018 = vmul.f32 %v2373, %v2734
      %v3019 = vmul.f32 %v2326, %v2749
      %v3020 = vmul.f32 %v2375, %v2764
      %v3021 = vmul.f32 %v2329, %v2779
      %v3022 = vmul.f32 %v2378, %v2794
      %v3023 = vmul.f32 %v2331, %v2809
      %v3024 = vmul.f32 %v2380, %v2824
      %v3025 = vmul.f32 %v2334, %v2839
      %v3026 = vmul.f32 %v2383, %v2854
      %v3027 = vmul.f32 %v2336, %v2869
      %v3028 = vmul.f32 %v2385, %v2884
      %v3029 = vmul.f32 %v2339, %v2899
      %v3030 = vmul.f32 %v2388, %v2914
      %v3031 = vmul.f32 %v2341, %v2929
      %v3032 = vmul.f32 %v2390, %v2944
      %v3033 = vmul.f32 %v2344, %v2959
      %v3034 = vmul.f32 %v2393, %v2974
      %v3035 = vmul.f32 %v2346, %v2989
      %v3036 = vmul.f32 %v2395, %v3004
      %v3037 = vld [vmem:[%s19] sm:$0x3]
      %v3038 = vpack.c.bf16 %v3007, %v3005
      %v3039 = vpack.c.bf16 %v3008, %v3006
      %v3040 = vpack.c.bf16 %v3011, %v3009
      %v3041 = vpack.c.bf16 %v3012, %v3010
      %v3042 = vpack.c.bf16 %v3015, %v3013
      %v3043 = vpack.c.bf16 %v3016, %v3014
      %v3044 = vpack.c.bf16 %v3019, %v3017
      %v3045 = vpack.c.bf16 %v3020, %v3018
      %v3046 = vpack.c.bf16 %v3023, %v3021
      %v3047 = vpack.c.bf16 %v3024, %v3022
      %v3048 = vpack.c.bf16 %v3027, %v3025
      %v3049 = vpack.c.bf16 %v3028, %v3026
      %v3050 = vpack.c.bf16 %v3031, %v3029
      %v3051 = vpack.c.bf16 %v3032, %v3030
      %v3052 = vpack.c.bf16 %v3035, %v3033
      %v3053 = vpack.c.bf16 %v3036, %v3034
      %v3054 = vld [vmem:[%s20] sm:$0xf]
      %3056 = vset.pattern.permute.xlu0 0
      %3057 = vperm.xlu0 %3056, %v3054
      %v3058 = vpop.permute.xlu0 %3057
      %3060 = vmatpush.bf16.msra.mxu0 %v3052
      %3061 = vmatpush.bf16.msra.mxu0 %v3050
      %3062 = vmatpush.bf16.msra.mxu0 %v3048
      %3063 = vmatpush.bf16.msra.mxu0 %v3046
      %3064 = vmatpush.bf16.msra.mxu0 %v3044
      %3065 = vmatpush.bf16.msra.mxu0 %v3042
      %3066 = vmatpush.bf16.msra.mxu0 %v3040
      %3067 = vmatpush.bf16.msra.mxu0 %v3038
      %3068 = vmatmul.bf16.gmra.mxu0 %v3037
      %v3069 = vpop.f32.mrf.mxu0
      %v3070 = vadd.f32 %v3058, %v3069
      %v3071 = vpop.f32.mrf.mxu0
      %3072 = vdwg.mxu0
      %3073 = vmatpush.bf16.msra.mxu0 %v3053
      %3074 = vmatpush.bf16.msra.mxu0 %v3051
      %3075 = vmatpush.bf16.msra.mxu0 %v3049
      %3076 = vmatpush.bf16.msra.mxu0 %v3047
      %3077 = vmatpush.bf16.msra.mxu0 %v3045
      %3078 = vmatpush.bf16.msra.mxu0 %v3043
      %3079 = vmatpush.bf16.msra.mxu0 %v3041
      %3080 = vmatpush.bf16.msra.mxu0 %v3039
      %3081 = vmatmul.bf16.gmra.mxu0 %v3037
      %v3082 = vpop.f32.mrf.mxu0
      %v3083 = vadd.f32 %v3058, %v3082
      %v3084 = vpop.f32.mrf.mxu0
      %3085 = vdwg.mxu0
      %v3088 = vrot.slane %v3083, 4
      %vm3089 = vcmask 1043456
      %v3090 = vsel %vm3089, %v3070, %v3088
      %3092 = vst [vmem:[%s710] sm:$0xff] %v3090
      %p3093 = scmp.lt.s32.totalorder %s32, 1
      %s3094 = scalar_select %p3093, %s32, 1
      %s3095 = smul.addr %s3094, 2
      %s3096 = smul.addr %s3095, 4
      %s3097 = scalar_lea.vmem %s21, %s3096
      // Predicated region
      $region105: #{animate_flow3d_forward.1} parent=103 // pred_check
        %p3098 = pneg %p511
      $region106: #{animate_flow3d_forward.1} parent=103 // pred_check_branch
        %3100 = sbr.rel (%p3098) target = $region108
      $region107: #{animate_flow3d_forward.1} parent=103 // pred_region
        _
      $region108: #{animate_flow3d_forward.1} parent=103 // pred_fallthru
        _
    $region104: #{animate_flow3d_forward.1} parent=5 // pred_fallthru
      _
    %p3101 = scmp.le.s32.totalorder 2, %s27
    // Predicated region
    $region109: #{animate_flow3d_forward.1} parent=5 // pred_check
      %p3102 = pneg %p3101
    $region110: #{animate_flow3d_forward.1} parent=5 // pred_check_branch
      %3104 = sbr.rel (%p3102) target = $region112
    $region111: #{animate_flow3d_forward.1} parent=5 // pred_region
      %s3105 = ssub.s32 %s27, 2
      // Predicated region
      $region113: #{animate_flow3d_forward.1} parent=111 // pred_check
        %p3106 = pneg %p517
      $region114: #{animate_flow3d_forward.1} parent=111 // pred_check_branch
        %3108 = sbr.rel (%p3106) target = $region116
      $region115: #{animate_flow3d_forward.1} parent=111 // pred_region
        %p3109 = scmp.lt.s32.totalorder %s33, 1
        %s3110 = scalar_select %p3109, %s33, 1
        %s3111 = smul.addr %s3110, 2
        %s3112 = smul.addr %s3111, 4
        %s3113 = scalar_lea.vmem %s21, %s3112
      $region116: #{animate_flow3d_forward.1} parent=111 // pred_fallthru
        _
    $region112: #{animate_flow3d_forward.1} parent=5 // pred_fallthru
      _
  $region6: #{animate_flow3d_forward.1} parent=0 // loop_footer
    %s31 = sadd.s32 1, %s27
  $region7: #{animate_flow3d_forward.1} parent=0 // loop_footer_branch
    %26 = sbr.rel target = $region3
  $region8: #{animate_flow3d_forward.1} parent=0 // loop_exit
    _

</llo_original>
